<compile_context>
chip_gen: v7x
topology: tpu7x:2x2x1
jax: 0.10.0
libtpu: 0.0.40
codegen_flags: <defaults>
</compile_context>

<pallas_src>
import functools

import jax
import jax.numpy as jnp
from jax import lax
from jax.experimental import pallas as pl
from jax.experimental.pallas import tpu as pltpu


_MXU_DTYPE = jnp.bfloat16   # bf16 MXU operands, f32 accumulation


# ----------------------------------------------------------------------------
# Fused kernel: the whole HistoryQIM forward for one batch element.
# ----------------------------------------------------------------------------
def _history_qim_kernel(tgt_ref, pos_ref, mask_ref,
                        w_in_ref, b_in_ref, w_out_ref, b_out_ref,
                        w_ld_ref, b_ld_ref, gamma_ref, beta_ref,
                        o_ref, ctx_ref, *, n_heads, head_dim, eps):
    tgt = tgt_ref[0]                       # (seq, d) f32
    pos = pos_ref[0]                       # (seq, d) f32
    mask = mask_ref[...]                   # (seq, seq) f32 additive mask

    tgt16 = tgt.astype(_MXU_DTYPE)
    qk16 = (tgt + pos).astype(_MXU_DTYPE)

    def mxu(a16, b16):
        # bf16 operands, f32 accumulation.
        return jnp.dot(a16, b16, preferred_element_type=jnp.float32)

    def mha(idx, xq16, xk16, xv16):
        """nn.MultiheadAttention (eval). Per-head contexts are concatenated in
        a (seq, d) bf16 VMEM scratch; one full-K out-projection matmul."""
        # lane-dense (seq, d) @ (d, d) projections; cast to bf16 ONCE.
        # (1/sqrt(head_dim) is pre-folded into the Q weight & bias.)
        q = (mxu(xq16, w_in_ref[idx, 0]) + b_in_ref[idx, 0]).astype(_MXU_DTYPE)
        k = (mxu(xk16, w_in_ref[idx, 1]) + b_in_ref[idx, 1]).astype(_MXU_DTYPE)
        v = (mxu(xv16, w_in_ref[idx, 2]) + b_in_ref[idx, 2]).astype(_MXU_DTYPE)
        for h in range(n_heads):            # static unroll
            lo = h * head_dim
            hi = lo + head_dim
            s = lax.dot_general(q[:, lo:hi], k[:, lo:hi],
                                (((1,), (1,)), ((), ())),
                                preferred_element_type=jnp.float32)  # (seq, seq)
            s = s + mask
            # numerically-stable softmax, f32; exact reciprocal (EUP)
            s = s - jnp.max(s, axis=-1, keepdims=True)
            p = jnp.exp(s)
            p = p * pl.reciprocal(jnp.sum(p, axis=-1, keepdims=True))
            ctx_ref[:, lo:hi] = mxu(p.astype(_MXU_DTYPE),
                                    v[:, lo:hi]).astype(_MXU_DTYPE)
        # single (seq, d) @ (d, d) out-projection (K = d, full MXU depth)
        return mxu(ctx_ref[...], w_out_ref[idx]) + b_out_ref[idx]

    # "add" branch: cross-attn then self-attn
    tgt_cross_add = mha(0, qk16, qk16, tgt16)
    tgt_add = mha(1, tgt_cross_add.astype(_MXU_DTYPE), tgt16, tgt16)
    # "drop" branch: cross-attn then self-attn
    tgt_cross_drop = mha(2, qk16, qk16, tgt16)
    r_drop = mha(3, tgt_cross_drop.astype(_MXU_DTYPE), tgt16, tgt16)

    # linear_drop(relu(r_drop)).sigmoid() with the per-head expansion folded
    # into a lane-dense (d, d) weight (exact: sigmoid commutes with replication).
    gate = jax.nn.sigmoid(
        mxu(jnp.maximum(r_drop, 0.0).astype(_MXU_DTYPE), w_ld_ref[...])
        + b_ld_ref[...])

    # tgt = LayerNorm( tgt * (1 - gate) * 2 + tgt_add )   (f32 statistics)
    x = tgt * (1.0 - gate) * 2.0 + tgt_add
    mu = jnp.mean(x, axis=-1, keepdims=True)
    var = jnp.mean(jnp.square(x - mu), axis=-1, keepdims=True)
    xn = (x - mu) * lax.rsqrt(var + eps)
    o_ref[0] = xn * gamma_ref[...] + beta_ref[...]


# ----------------------------------------------------------------------------
# VMEM limit: generous but safe on every chip generation.
# ----------------------------------------------------------------------------
def _vmem_limit_bytes():
    cap = 128 * 1024 * 1024                     # v5e / v6e physical per-TC VMEM
    try:
        cap = int(pltpu.get_tpu_info().vmem_capacity_bytes)   # 64 MiB on v7x
    except Exception:
        pass
    # ~96 MiB on 128 MiB parts, ~48 MiB on v7x; leave pipeline headroom.
    return int(min(96 * 1024 * 1024, (cap * 3) // 4))


# ----------------------------------------------------------------------------
# Public forward (PyTorch layout: (seq, bs, d_model)).
# ----------------------------------------------------------------------------
def history_qim_forward(tgt, tgt_query_pos, self_attn_mask, packed, n_heads):
    seq, bs, d = tgt.shape
    hd = d // n_heads
    t = jnp.transpose(tgt, (1, 0, 2)).astype(jnp.float32)            # (bs, seq, d)
    p = jnp.transpose(tgt_query_pos, (1, 0, 2)).astype(jnp.float32)
    mask = self_attn_mask.astype(jnp.float32)

    kernel = functools.partial(_history_qim_kernel,
                               n_heads=n_heads, head_dim=hd, eps=1e-5)

    # Grid-invariant operands: whole array resident in VMEM, single-buffered,
    # DMA'd once (no per-step double-buffered pipeline copies).
    vmem_spec = pl.BlockSpec(memory_space=pltpu.MemorySpace.VMEM)

    out = pl.pallas_call(
        kernel,
        out_shape=jax.ShapeDtypeStruct((bs, seq, d), jnp.float32),
        grid=(bs,),
        in_specs=[
            pl.BlockSpec((1, seq, d), lambda b: (b, 0, 0)),          # tgt
            pl.BlockSpec((1, seq, d), lambda b: (b, 0, 0)),          # pos
            vmem_spec,                                               # attn mask (f32)
            vmem_spec,                                               # in-proj W  (bf16)
            vmem_spec,                                               # in-proj b  (f32)
            vmem_spec,                                               # out-proj W (bf16)
            vmem_spec,                                               # out-proj b (f32)
            vmem_spec,                                               # gate W     (bf16)
            vmem_spec,                                               # gate b     (f32)
            vmem_spec,                                               # LN gamma   (f32)
            vmem_spec,                                               # LN beta    (f32)
        ],
        out_specs=pl.BlockSpec((1, seq, d), lambda b: (b, 0, 0)),
        scratch_shapes=[pltpu.VMEM((seq, d), _MXU_DTYPE)],           # head-concat ctx
        compiler_params=pltpu.CompilerParams(
            dimension_semantics=("parallel",),
            vmem_limit_bytes=_vmem_limit_bytes()),
    )(t, p, mask,
      packed["w_in"], packed["b_in"], packed["w_out"], packed["b_out"],
      packed["w_ld"], packed["b_ld"], packed["gamma"], packed["beta"])

    return jnp.transpose(out, (1, 0, 2))                             # (seq, bs, d)


# ----------------------------------------------------------------------------
# One-time weight preparation (hoisted out of the hot path / jit).
# ----------------------------------------------------------------------------
def prepare_params(params, d_model, n_heads):
    hd = d_model // n_heads
    scale = 1.0 / float(hd) ** 0.5
    mhas = [params["add"]["cross"], params["add"]["self"],
            params["drop"]["cross"], params["drop"]["self"]]

    def split_in_w(m):
        # (3d, d) -> (3, d, d), pre-transposed so y = x @ W; Q pre-scaled.
        W = m["in_proj_weight"]
        wq = jnp.transpose(W[:d_model]) * scale
        wk = jnp.transpose(W[d_model:2 * d_model])
        wv = jnp.transpose(W[2 * d_model:])
        return jnp.stack([wq, wk, wv])

    def split_in_b(m):
        # (3d,) -> (3, 1, d); Q bias pre-scaled.
        B = m["in_proj_bias"]
        bq = B[:d_model] * scale
        bk = B[d_model:2 * d_model]
        bv = B[2 * d_model:]
        return jnp.stack([bq, bk, bv]).reshape(3, 1, d_model)

    w_in = jnp.stack([split_in_w(m) for m in mhas]).astype(jnp.bfloat16)   # (4,3,d,d)
    b_in = jnp.stack([split_in_b(m) for m in mhas]).astype(jnp.float32)    # (4,3,1,d)
    w_out = jnp.stack([jnp.transpose(m["out_w"])
                       for m in mhas]).astype(jnp.bfloat16)                # (4,d,d)
    b_out = jnp.stack([m["out_b"].reshape(1, d_model)
                       for m in mhas]).astype(jnp.float32)                 # (4,1,d)

    # Column-replication matrix: gate for head h drives channels [h*hd,(h+1)*hd).
    # Folded into linear_drop -> lane-dense (d, d) matmul; exact match of
    # unsqueeze+expand+reshape in the reference.
    expand = jnp.repeat(jnp.eye(n_heads, dtype=jnp.float32), hd, axis=1)   # (h, d)
    w_ld = (jnp.transpose(params["linear_drop_w"]) @ expand).astype(jnp.bfloat16)
    b_ld = (params["linear_drop_b"].reshape(1, n_heads) @ expand).astype(jnp.float32)

    return {
        "w_in": w_in, "b_in": b_in, "w_out": w_out, "b_out": b_out,
        "w_ld": w_ld, "b_ld": b_ld,
        "gamma": params["norm_w"].reshape(1, d_model).astype(jnp.float32),
        "beta": params["norm_b"].reshape(1, d_model).astype(jnp.float32),
    }


# ----------------------------------------------------------------------------
# Deterministic parameter init (synthetic; shapes follow the PyTorch module).
# ----------------------------------------------------------------------------
def init_params(key, d_model, n_heads):
    def mha_params(k):
        k1, k2, k3, k4 = jax.random.split(k, 4)
        return {
            "in_proj_weight": 0.05 * jax.random.normal(k1, (3 * d_model, d_model), jnp.float32),
            "in_proj_bias": 0.02 * jax.random.normal(k2, (3 * d_model,), jnp.float32),
            "out_w": 0.05 * jax.random.normal(k3, (d_model, d_model), jnp.float32),
            "out_b": 0.02 * jax.random.normal(k4, (d_model,), jnp.float32),
        }

    keys = jax.random.split(key, 6)
    return {
        "add": {"cross": mha_params(keys[0]), "self": mha_params(keys[1])},
        "drop": {"cross": mha_params(keys[2]), "self": mha_params(keys[3])},
        "linear_drop_w": 0.05 * jax.random.normal(keys[4], (n_heads, d_model), jnp.float32),
        "linear_drop_b": 0.02 * jax.random.normal(keys[5], (n_heads,), jnp.float32),
        "norm_w": jnp.ones((d_model,), jnp.float32),
        "norm_b": jnp.zeros((d_model,), jnp.float32),
    }


if __name__ == "__main__":
    seq, bs, d_model, n_heads = 8, 2, 32, 4

    key = jax.random.PRNGKey(0)
    k_tgt, k_pos, k_param = jax.random.split(key, 3)
    tgt = jax.random.normal(k_tgt, (seq, bs, d_model), jnp.float32)
    pos = jax.random.normal(k_pos, (seq, bs, d_model), jnp.float32)

    # additive float attention mask (no fully-masked rows)
    mask = jnp.zeros((seq, seq), jnp.float32)
    mask = mask.at[0, seq - 1].set(-1e9).at[seq - 1, 0].set(-1e9)

    raw_params = init_params(k_param, d_model, n_heads)
    packed = prepare_params(raw_params, d_model, n_heads)   # one-time, outside jit

    fwd = jax.jit(functools.partial(history_qim_forward, n_heads=n_heads))
    out = fwd(tgt, pos, mask, packed)
    jax.block_until_ready(out)

    assert out.shape == (seq, bs, d_model)
    assert bool(jnp.all(jnp.isfinite(out)))
    print("KERNEL_OK")
</pallas_src>

<mosaic_0001>
module attributes {stable_mosaic.version = 11 : i64} {
  func.func @_history_qim_kernel(%arg0: i32, %arg1: memref<1x8x32xf32, #tpu.memory_space<vmem>>, %arg2: memref<1x8x32xf32, #tpu.memory_space<vmem>>, %arg3: memref<8x8xf32, #tpu.memory_space<vmem>>, %arg4: memref<4x3x32x32xbf16, #tpu.memory_space<vmem>>, %arg5: memref<4x3x1x32xf32, #tpu.memory_space<vmem>>, %arg6: memref<4x32x32xbf16, #tpu.memory_space<vmem>>, %arg7: memref<4x1x32xf32, #tpu.memory_space<vmem>>, %arg8: memref<32x32xbf16, #tpu.memory_space<vmem>>, %arg9: memref<1x32xf32, #tpu.memory_space<vmem>>, %arg10: memref<1x32xf32, #tpu.memory_space<vmem>>, %arg11: memref<1x32xf32, #tpu.memory_space<vmem>>, %arg12: memref<1x8x32xf32, #tpu.memory_space<vmem>>, %arg13: memref<8x32xbf16, #tpu.memory_space<vmem>>) attributes {dimension_semantics = [#tpu.dimension_semantics<parallel>], iteration_bounds = array<i64: 2>, scalar_prefetch = 0 : i64, scratch_operands = 1 : i64, tpu.core_type = #tpu.core_type<tc>, window_params = [{transform_indices = @transform_0, window_bounds = array<i64: 1, 8, 32>}, {transform_indices = @transform_1, window_bounds = array<i64: 1, 8, 32>}, {pipeline_mode = #tpu.pipeline_mode<synchronous>, transform_indices = @transform_2, window_bounds = array<i64: 8, 8>}, {pipeline_mode = #tpu.pipeline_mode<synchronous>, transform_indices = @transform_3, window_bounds = array<i64: 4, 3, 32, 32>}, {pipeline_mode = #tpu.pipeline_mode<synchronous>, transform_indices = @transform_4, window_bounds = array<i64: 4, 3, 1, 32>}, {pipeline_mode = #tpu.pipeline_mode<synchronous>, transform_indices = @transform_5, window_bounds = array<i64: 4, 32, 32>}, {pipeline_mode = #tpu.pipeline_mode<synchronous>, transform_indices = @transform_6, window_bounds = array<i64: 4, 1, 32>}, {pipeline_mode = #tpu.pipeline_mode<synchronous>, transform_indices = @transform_7, window_bounds = array<i64: 32, 32>}, {pipeline_mode = #tpu.pipeline_mode<synchronous>, transform_indices = @transform_8, window_bounds = array<i64: 1, 32>}, {pipeline_mode = #tpu.pipeline_mode<synchronous>, transform_indices = @transform_9, window_bounds = array<i64: 1, 32>}, {pipeline_mode = #tpu.pipeline_mode<synchronous>, transform_indices = @transform_10, window_bounds = array<i64: 1, 32>}, {transform_indices = @transform_11, window_bounds = array<i64: 1, 8, 32>}]} {
    %c0 = arith.constant 0 : index
    %c0_0 = arith.constant 0 : index
    %c0_1 = arith.constant 0 : index
    %0 = vector.load %arg1[%c0, %c0_0, %c0_1] : memref<1x8x32xf32, #tpu.memory_space<vmem>>, vector<1x8x32xf32>
    %1 = vector.shape_cast %0 : vector<1x8x32xf32> to vector<8x32xf32>
    %c0_2 = arith.constant 0 : index
    %c0_3 = arith.constant 0 : index
    %c0_4 = arith.constant 0 : index
    %2 = vector.load %arg2[%c0_2, %c0_3, %c0_4] : memref<1x8x32xf32, #tpu.memory_space<vmem>>, vector<1x8x32xf32>
    %3 = vector.shape_cast %2 : vector<1x8x32xf32> to vector<8x32xf32>
    %c0_5 = arith.constant 0 : index
    %c0_6 = arith.constant 0 : index
    %4 = vector.load %arg3[%c0_5, %c0_6] : memref<8x8xf32, #tpu.memory_space<vmem>>, vector<8x8xf32>
    %5 = arith.truncf %1 : vector<8x32xf32> to vector<8x32xbf16>
    %6 = arith.addf %1, %3 : vector<8x32xf32>
    %7 = arith.truncf %6 : vector<8x32xf32> to vector<8x32xbf16>
    %c0_7 = arith.constant 0 : index
    %c0_8 = arith.constant 0 : index
    %c0_9 = arith.constant 0 : index
    %c0_10 = arith.constant 0 : index
    %8 = vector.load %arg4[%c0_7, %c0_8, %c0_9, %c0_10] : memref<4x3x32x32xbf16, #tpu.memory_space<vmem>>, vector<1x1x32x32xbf16>
    %9 = vector.shape_cast %8 : vector<1x1x32x32xbf16> to vector<32x32xbf16>
    %cst = arith.constant dense<0.000000e+00> : vector<8x32xf32>
    %10 = tpu.matmul %7, %9, %cst {dimension_numbers = #tpu.dot_dimension_numbers<[1], [0], [0], [1], [0, 0, 1, 1], [], []>} : vector<8x32xbf16>, vector<32x32xbf16>, vector<8x32xf32> -> vector<8x32xf32>
    %c0_11 = arith.constant 0 : index
    %c0_12 = arith.constant 0 : index
    %c0_13 = arith.constant 0 : index
    %c0_14 = arith.constant 0 : index
    %11 = vector.load %arg5[%c0_11, %c0_12, %c0_13, %c0_14] : memref<4x3x1x32xf32, #tpu.memory_space<vmem>>, vector<1x1x1x32xf32>
    %12 = vector.shape_cast %11 : vector<1x1x1x32xf32> to vector<1x32xf32>
    %13 = vector.broadcast %12 : vector<1x32xf32> to vector<8x32xf32>
    %14 = arith.addf %10, %13 : vector<8x32xf32>
    %15 = arith.truncf %14 : vector<8x32xf32> to vector<8x32xbf16>
    %c0_15 = arith.constant 0 : index
    %c1 = arith.constant 1 : index
    %c0_16 = arith.constant 0 : index
    %c0_17 = arith.constant 0 : index
    %16 = vector.load %arg4[%c0_15, %c1, %c0_16, %c0_17] : memref<4x3x32x32xbf16, #tpu.memory_space<vmem>>, vector<1x1x32x32xbf16>
    %17 = vector.shape_cast %16 : vector<1x1x32x32xbf16> to vector<32x32xbf16>
    %cst_18 = arith.constant dense<0.000000e+00> : vector<8x32xf32>
    %18 = tpu.matmul %7, %17, %cst_18 {dimension_numbers = #tpu.dot_dimension_numbers<[1], [0], [0], [1], [0, 0, 1, 1], [], []>} : vector<8x32xbf16>, vector<32x32xbf16>, vector<8x32xf32> -> vector<8x32xf32>
    %c0_19 = arith.constant 0 : index
    %c1_20 = arith.constant 1 : index
    %c0_21 = arith.constant 0 : index
    %c0_22 = arith.constant 0 : index
    %19 = vector.load %arg5[%c0_19, %c1_20, %c0_21, %c0_22] : memref<4x3x1x32xf32, #tpu.memory_space<vmem>>, vector<1x1x1x32xf32>
    %20 = vector.shape_cast %19 : vector<1x1x1x32xf32> to vector<1x32xf32>
    %21 = vector.broadcast %20 : vector<1x32xf32> to vector<8x32xf32>
    %22 = arith.addf %18, %21 : vector<8x32xf32>
    %23 = arith.truncf %22 : vector<8x32xf32> to vector<8x32xbf16>
    %c0_23 = arith.constant 0 : index
    %c2 = arith.constant 2 : index
    %c0_24 = arith.constant 0 : index
    %c0_25 = arith.constant 0 : index
    %24 = vector.load %arg4[%c0_23, %c2, %c0_24, %c0_25] : memref<4x3x32x32xbf16, #tpu.memory_space<vmem>>, vector<1x1x32x32xbf16>
    %25 = vector.shape_cast %24 : vector<1x1x32x32xbf16> to vector<32x32xbf16>
    %cst_26 = arith.constant dense<0.000000e+00> : vector<8x32xf32>
    %26 = tpu.matmul %5, %25, %cst_26 {dimension_numbers = #tpu.dot_dimension_numbers<[1], [0], [0], [1], [0, 0, 1, 1], [], []>} : vector<8x32xbf16>, vector<32x32xbf16>, vector<8x32xf32> -> vector<8x32xf32>
    %c0_27 = arith.constant 0 : index
    %c2_28 = arith.constant 2 : index
    %c0_29 = arith.constant 0 : index
    %c0_30 = arith.constant 0 : index
    %27 = vector.load %arg5[%c0_27, %c2_28, %c0_29, %c0_30] : memref<4x3x1x32xf32, #tpu.memory_space<vmem>>, vector<1x1x1x32xf32>
    %28 = vector.shape_cast %27 : vector<1x1x1x32xf32> to vector<1x32xf32>
    %29 = vector.broadcast %28 : vector<1x32xf32> to vector<8x32xf32>
    %30 = arith.addf %26, %29 : vector<8x32xf32>
    %31 = arith.truncf %30 : vector<8x32xf32> to vector<8x32xbf16>
    %32 = vector.extract_strided_slice %15 {offsets = [0, 0], sizes = [8, 8], strides = [1, 1]} : vector<8x32xbf16> to vector<8x8xbf16>
    %33 = vector.extract_strided_slice %23 {offsets = [0, 0], sizes = [8, 8], strides = [1, 1]} : vector<8x32xbf16> to vector<8x8xbf16>
    %cst_31 = arith.constant dense<0.000000e+00> : vector<8x8xf32>
    %34 = tpu.matmul %32, %33, %cst_31 {dimension_numbers = #tpu.dot_dimension_numbers<[1], [1], [0], [0], [0, 0, 1, 0], [], []>} : vector<8x8xbf16>, vector<8x8xbf16>, vector<8x8xf32> -> vector<8x8xf32>
    %35 = arith.addf %34, %4 : vector<8x8xf32>
    %cst_32 = arith.constant dense<0xFF800000> : vector<8xf32>
    %36 = vector.multi_reduction <maximumf>, %35, %cst_32 [1] : vector<8x8xf32> to vector<8xf32>
    %37 = vector.shape_cast %36 : vector<8xf32> to vector<8x1xf32>
    %38 = vector.broadcast %37 : vector<8x1xf32> to vector<8x8xf32>
    %39 = arith.subf %35, %38 : vector<8x8xf32>
    %40 = math.exp %39 : vector<8x8xf32>
    %cst_33 = arith.constant dense<0.000000e+00> : vector<8xf32>
    %41 = vector.multi_reduction <add>, %40, %cst_33 [1] : vector<8x8xf32> to vector<8xf32>
    %42 = vector.shape_cast %41 : vector<8xf32> to vector<8x1xf32>
    %43 = tpu.reciprocal %42 : vector<8x1xf32> -> vector<8x1xf32>
    %44 = vector.broadcast %43 : vector<8x1xf32> to vector<8x8xf32>
    %45 = arith.mulf %40, %44 : vector<8x8xf32>
    %46 = arith.truncf %45 : vector<8x8xf32> to vector<8x8xbf16>
    %47 = vector.extract_strided_slice %31 {offsets = [0, 0], sizes = [8, 8], strides = [1, 1]} : vector<8x32xbf16> to vector<8x8xbf16>
    %cst_34 = arith.constant dense<0.000000e+00> : vector<8x8xf32>
    %48 = tpu.matmul %46, %47, %cst_34 {dimension_numbers = #tpu.dot_dimension_numbers<[1], [0], [0], [1], [0, 0, 1, 1], [], []>} : vector<8x8xbf16>, vector<8x8xbf16>, vector<8x8xf32> -> vector<8x8xf32>
    %49 = arith.truncf %48 : vector<8x8xf32> to vector<8x8xbf16>
    %c0_35 = arith.constant 0 : index
    %c0_36 = arith.constant 0 : index
    %50 = vector.load %arg13[%c0_35, %c0_36] : memref<8x32xbf16, #tpu.memory_space<vmem>>, vector<8x8xbf16>
    tpu.vector_store %arg13[%c0_35, %c0_36], %49 {strides = array<i32>} : memref<8x32xbf16, #tpu.memory_space<vmem>>, vector<8x8xbf16>,
    %51 = vector.extract_strided_slice %15 {offsets = [0, 8], sizes = [8, 8], strides = [1, 1]} : vector<8x32xbf16> to vector<8x8xbf16>
    %52 = vector.extract_strided_slice %23 {offsets = [0, 8], sizes = [8, 8], strides = [1, 1]} : vector<8x32xbf16> to vector<8x8xbf16>
    %cst_37 = arith.constant dense<0.000000e+00> : vector<8x8xf32>
    %53 = tpu.matmul %51, %52, %cst_37 {dimension_numbers = #tpu.dot_dimension_numbers<[1], [1], [0], [0], [0, 0, 1, 0], [], []>} : vector<8x8xbf16>, vector<8x8xbf16>, vector<8x8xf32> -> vector<8x8xf32>
    %54 = arith.addf %53, %4 : vector<8x8xf32>
    %cst_38 = arith.constant dense<0xFF800000> : vector<8xf32>
    %55 = vector.multi_reduction <maximumf>, %54, %cst_38 [1] : vector<8x8xf32> to vector<8xf32>
    %56 = vector.shape_cast %55 : vector<8xf32> to vector<8x1xf32>
    %57 = vector.broadcast %56 : vector<8x1xf32> to vector<8x8xf32>
    %58 = arith.subf %54, %57 : vector<8x8xf32>
    %59 = math.exp %58 : vector<8x8xf32>
    %cst_39 = arith.constant dense<0.000000e+00> : vector<8xf32>
    %60 = vector.multi_reduction <add>, %59, %cst_39 [1] : vector<8x8xf32> to vector<8xf32>
    %61 = vector.shape_cast %60 : vector<8xf32> to vector<8x1xf32>
    %62 = tpu.reciprocal %61 : vector<8x1xf32> -> vector<8x1xf32>
    %63 = vector.broadcast %62 : vector<8x1xf32> to vector<8x8xf32>
    %64 = arith.mulf %59, %63 : vector<8x8xf32>
    %65 = arith.truncf %64 : vector<8x8xf32> to vector<8x8xbf16>
    %66 = vector.extract_strided_slice %31 {offsets = [0, 8], sizes = [8, 8], strides = [1, 1]} : vector<8x32xbf16> to vector<8x8xbf16>
    %cst_40 = arith.constant dense<0.000000e+00> : vector<8x8xf32>
    %67 = tpu.matmul %65, %66, %cst_40 {dimension_numbers = #tpu.dot_dimension_numbers<[1], [0], [0], [1], [0, 0, 1, 1], [], []>} : vector<8x8xbf16>, vector<8x8xbf16>, vector<8x8xf32> -> vector<8x8xf32>
    %68 = arith.truncf %67 : vector<8x8xf32> to vector<8x8xbf16>
    %c0_41 = arith.constant 0 : index
    %c8 = arith.constant 8 : index
    %69 = vector.load %arg13[%c0_41, %c8] : memref<8x32xbf16, #tpu.memory_space<vmem>>, vector<8x8xbf16>
    tpu.vector_store %arg13[%c0_41, %c8], %68 {strides = array<i32>} : memref<8x32xbf16, #tpu.memory_space<vmem>>, vector<8x8xbf16>,
    %70 = vector.extract_strided_slice %15 {offsets = [0, 16], sizes = [8, 8], strides = [1, 1]} : vector<8x32xbf16> to vector<8x8xbf16>
    %71 = vector.extract_strided_slice %23 {offsets = [0, 16], sizes = [8, 8], strides = [1, 1]} : vector<8x32xbf16> to vector<8x8xbf16>
    %cst_42 = arith.constant dense<0.000000e+00> : vector<8x8xf32>
    %72 = tpu.matmul %70, %71, %cst_42 {dimension_numbers = #tpu.dot_dimension_numbers<[1], [1], [0], [0], [0, 0, 1, 0], [], []>} : vector<8x8xbf16>, vector<8x8xbf16>, vector<8x8xf32> -> vector<8x8xf32>
    %73 = arith.addf %72, %4 : vector<8x8xf32>
    %cst_43 = arith.constant dense<0xFF800000> : vector<8xf32>
    %74 = vector.multi_reduction <maximumf>, %73, %cst_43 [1] : vector<8x8xf32> to vector<8xf32>
    %75 = vector.shape_cast %74 : vector<8xf32> to vector<8x1xf32>
    %76 = vector.broadcast %75 : vector<8x1xf32> to vector<8x8xf32>
    %77 = arith.subf %73, %76 : vector<8x8xf32>
    %78 = math.exp %77 : vector<8x8xf32>
    %cst_44 = arith.constant dense<0.000000e+00> : vector<8xf32>
    %79 = vector.multi_reduction <add>, %78, %cst_44 [1] : vector<8x8xf32> to vector<8xf32>
    %80 = vector.shape_cast %79 : vector<8xf32> to vector<8x1xf32>
    %81 = tpu.reciprocal %80 : vector<8x1xf32> -> vector<8x1xf32>
    %82 = vector.broadcast %81 : vector<8x1xf32> to vector<8x8xf32>
    %83 = arith.mulf %78, %82 : vector<8x8xf32>
    %84 = arith.truncf %83 : vector<8x8xf32> to vector<8x8xbf16>
    %85 = vector.extract_strided_slice %31 {offsets = [0, 16], sizes = [8, 8], strides = [1, 1]} : vector<8x32xbf16> to vector<8x8xbf16>
    %cst_45 = arith.constant dense<0.000000e+00> : vector<8x8xf32>
    %86 = tpu.matmul %84, %85, %cst_45 {dimension_numbers = #tpu.dot_dimension_numbers<[1], [0], [0], [1], [0, 0, 1, 1], [], []>} : vector<8x8xbf16>, vector<8x8xbf16>, vector<8x8xf32> -> vector<8x8xf32>
    %87 = arith.truncf %86 : vector<8x8xf32> to vector<8x8xbf16>
    %c0_46 = arith.constant 0 : index
    %c16 = arith.constant 16 : index
    %88 = vector.load %arg13[%c0_46, %c16] : memref<8x32xbf16, #tpu.memory_space<vmem>>, vector<8x8xbf16>
    tpu.vector_store %arg13[%c0_46, %c16], %87 {strides = array<i32>} : memref<8x32xbf16, #tpu.memory_space<vmem>>, vector<8x8xbf16>,
    %89 = vector.extract_strided_slice %15 {offsets = [0, 24], sizes = [8, 8], strides = [1, 1]} : vector<8x32xbf16> to vector<8x8xbf16>
    %90 = vector.extract_strided_slice %23 {offsets = [0, 24], sizes = [8, 8], strides = [1, 1]} : vector<8x32xbf16> to vector<8x8xbf16>
    %cst_47 = arith.constant dense<0.000000e+00> : vector<8x8xf32>
    %91 = tpu.matmul %89, %90, %cst_47 {dimension_numbers = #tpu.dot_dimension_numbers<[1], [1], [0], [0], [0, 0, 1, 0], [], []>} : vector<8x8xbf16>, vector<8x8xbf16>, vector<8x8xf32> -> vector<8x8xf32>
    %92 = arith.addf %91, %4 : vector<8x8xf32>
    %cst_48 = arith.constant dense<0xFF800000> : vector<8xf32>
    %93 = vector.multi_reduction <maximumf>, %92, %cst_48 [1] : vector<8x8xf32> to vector<8xf32>
    %94 = vector.shape_cast %93 : vector<8xf32> to vector<8x1xf32>
    %95 = vector.broadcast %94 : vector<8x1xf32> to vector<8x8xf32>
    %96 = arith.subf %92, %95 : vector<8x8xf32>
    %97 = math.exp %96 : vector<8x8xf32>
    %cst_49 = arith.constant dense<0.000000e+00> : vector<8xf32>
    %98 = vector.multi_reduction <add>, %97, %cst_49 [1] : vector<8x8xf32> to vector<8xf32>
    %99 = vector.shape_cast %98 : vector<8xf32> to vector<8x1xf32>
    %100 = tpu.reciprocal %99 : vector<8x1xf32> -> vector<8x1xf32>
    %101 = vector.broadcast %100 : vector<8x1xf32> to vector<8x8xf32>
    %102 = arith.mulf %97, %101 : vector<8x8xf32>
    %103 = arith.truncf %102 : vector<8x8xf32> to vector<8x8xbf16>
    %104 = vector.extract_strided_slice %31 {offsets = [0, 24], sizes = [8, 8], strides = [1, 1]} : vector<8x32xbf16> to vector<8x8xbf16>
    %cst_50 = arith.constant dense<0.000000e+00> : vector<8x8xf32>
    %105 = tpu.matmul %103, %104, %cst_50 {dimension_numbers = #tpu.dot_dimension_numbers<[1], [0], [0], [1], [0, 0, 1, 1], [], []>} : vector<8x8xbf16>, vector<8x8xbf16>, vector<8x8xf32> -> vector<8x8xf32>
    %106 = arith.truncf %105 : vector<8x8xf32> to vector<8x8xbf16>
    %c0_51 = arith.constant 0 : index
    %c24 = arith.constant 24 : index
    %107 = vector.load %arg13[%c0_51, %c24] : memref<8x32xbf16, #tpu.memory_space<vmem>>, vector<8x8xbf16>
    tpu.vector_store %arg13[%c0_51, %c24], %106 {strides = array<i32>} : memref<8x32xbf16, #tpu.memory_space<vmem>>, vector<8x8xbf16>,
    %c0_52 = arith.constant 0 : index
    %c0_53 = arith.constant 0 : index
    %108 = vector.load %arg13[%c0_52, %c0_53] : memref<8x32xbf16, #tpu.memory_space<vmem>>, vector<8x32xbf16>
    %c0_54 = arith.constant 0 : index
    %c0_55 = arith.constant 0 : index
    %c0_56 = arith.constant 0 : index
    %109 = vector.load %arg6[%c0_54, %c0_55, %c0_56] : memref<4x32x32xbf16, #tpu.memory_space<vmem>>, vector<1x32x32xbf16>
    %110 = vector.shape_cast %109 : vector<1x32x32xbf16> to vector<32x32xbf16>
    %cst_57 = arith.constant dense<0.000000e+00> : vector<8x32xf32>
    %111 = tpu.matmul %108, %110, %cst_57 {dimension_numbers = #tpu.dot_dimension_numbers<[1], [0], [0], [1], [0, 0, 1, 1], [], []>} : vector<8x32xbf16>, vector<32x32xbf16>, vector<8x32xf32> -> vector<8x32xf32>
    %c0_58 = arith.constant 0 : index
    %c0_59 = arith.constant 0 : index
    %c0_60 = arith.constant 0 : index
    %112 = vector.load %arg7[%c0_58, %c0_59, %c0_60] : memref<4x1x32xf32, #tpu.memory_space<vmem>>, vector<1x1x32xf32>
    %113 = vector.shape_cast %112 : vector<1x1x32xf32> to vector<1x32xf32>
    %114 = vector.broadcast %113 : vector<1x32xf32> to vector<8x32xf32>
    %115 = arith.addf %111, %114 : vector<8x32xf32>
    %116 = arith.truncf %115 : vector<8x32xf32> to vector<8x32xbf16>
    %c1_61 = arith.constant 1 : index
    %c0_62 = arith.constant 0 : index
    %c0_63 = arith.constant 0 : index
    %c0_64 = arith.constant 0 : index
    %117 = vector.load %arg4[%c1_61, %c0_62, %c0_63, %c0_64] : memref<4x3x32x32xbf16, #tpu.memory_space<vmem>>, vector<1x1x32x32xbf16>
    %118 = vector.shape_cast %117 : vector<1x1x32x32xbf16> to vector<32x32xbf16>
    %cst_65 = arith.constant dense<0.000000e+00> : vector<8x32xf32>
    %119 = tpu.matmul %116, %118, %cst_65 {dimension_numbers = #tpu.dot_dimension_numbers<[1], [0], [0], [1], [0, 0, 1, 1], [], []>} : vector<8x32xbf16>, vector<32x32xbf16>, vector<8x32xf32> -> vector<8x32xf32>
    %c1_66 = arith.constant 1 : index
    %c0_67 = arith.constant 0 : index
    %c0_68 = arith.constant 0 : index
    %c0_69 = arith.constant 0 : index
    %120 = vector.load %arg5[%c1_66, %c0_67, %c0_68, %c0_69] : memref<4x3x1x32xf32, #tpu.memory_space<vmem>>, vector<1x1x1x32xf32>
    %121 = vector.shape_cast %120 : vector<1x1x1x32xf32> to vector<1x32xf32>
    %122 = vector.broadcast %121 : vector<1x32xf32> to vector<8x32xf32>
    %123 = arith.addf %119, %122 : vector<8x32xf32>
    %124 = arith.truncf %123 : vector<8x32xf32> to vector<8x32xbf16>
    %c1_70 = arith.constant 1 : index
    %c1_71 = arith.constant 1 : index
    %c0_72 = arith.constant 0 : index
    %c0_73 = arith.constant 0 : index
    %125 = vector.load %arg4[%c1_70, %c1_71, %c0_72, %c0_73] : memref<4x3x32x32xbf16, #tpu.memory_space<vmem>>, vector<1x1x32x32xbf16>
    %126 = vector.shape_cast %125 : vector<1x1x32x32xbf16> to vector<32x32xbf16>
    %cst_74 = arith.constant dense<0.000000e+00> : vector<8x32xf32>
    %127 = tpu.matmul %5, %126, %cst_74 {dimension_numbers = #tpu.dot_dimension_numbers<[1], [0], [0], [1], [0, 0, 1, 1], [], []>} : vector<8x32xbf16>, vector<32x32xbf16>, vector<8x32xf32> -> vector<8x32xf32>
    %c1_75 = arith.constant 1 : index
    %c1_76 = arith.constant 1 : index
    %c0_77 = arith.constant 0 : index
    %c0_78 = arith.constant 0 : index
    %128 = vector.load %arg5[%c1_75, %c1_76, %c0_77, %c0_78] : memref<4x3x1x32xf32, #tpu.memory_space<vmem>>, vector<1x1x1x32xf32>
    %129 = vector.shape_cast %128 : vector<1x1x1x32xf32> to vector<1x32xf32>
    %130 = vector.broadcast %129 : vector<1x32xf32> to vector<8x32xf32>
    %131 = arith.addf %127, %130 : vector<8x32xf32>
    %132 = arith.truncf %131 : vector<8x32xf32> to vector<8x32xbf16>
    %c1_79 = arith.constant 1 : index
    %c2_80 = arith.constant 2 : index
    %c0_81 = arith.constant 0 : index
    %c0_82 = arith.constant 0 : index
    %133 = vector.load %arg4[%c1_79, %c2_80, %c0_81, %c0_82] : memref<4x3x32x32xbf16, #tpu.memory_space<vmem>>, vector<1x1x32x32xbf16>
    %134 = vector.shape_cast %133 : vector<1x1x32x32xbf16> to vector<32x32xbf16>
    %cst_83 = arith.constant dense<0.000000e+00> : vector<8x32xf32>
    %135 = tpu.matmul %5, %134, %cst_83 {dimension_numbers = #tpu.dot_dimension_numbers<[1], [0], [0], [1], [0, 0, 1, 1], [], []>} : vector<8x32xbf16>, vector<32x32xbf16>, vector<8x32xf32> -> vector<8x32xf32>
    %c1_84 = arith.constant 1 : index
    %c2_85 = arith.constant 2 : index
    %c0_86 = arith.constant 0 : index
    %c0_87 = arith.constant 0 : index
    %136 = vector.load %arg5[%c1_84, %c2_85, %c0_86, %c0_87] : memref<4x3x1x32xf32, #tpu.memory_space<vmem>>, vector<1x1x1x32xf32>
    %137 = vector.shape_cast %136 : vector<1x1x1x32xf32> to vector<1x32xf32>
    %138 = vector.broadcast %137 : vector<1x32xf32> to vector<8x32xf32>
    %139 = arith.addf %135, %138 : vector<8x32xf32>
    %140 = arith.truncf %139 : vector<8x32xf32> to vector<8x32xbf16>
    %141 = vector.extract_strided_slice %124 {offsets = [0, 0], sizes = [8, 8], strides = [1, 1]} : vector<8x32xbf16> to vector<8x8xbf16>
    %142 = vector.extract_strided_slice %132 {offsets = [0, 0], sizes = [8, 8], strides = [1, 1]} : vector<8x32xbf16> to vector<8x8xbf16>
    %cst_88 = arith.constant dense<0.000000e+00> : vector<8x8xf32>
    %143 = tpu.matmul %141, %142, %cst_88 {dimension_numbers = #tpu.dot_dimension_numbers<[1], [1], [0], [0], [0, 0, 1, 0], [], []>} : vector<8x8xbf16>, vector<8x8xbf16>, vector<8x8xf32> -> vector<8x8xf32>
    %144 = arith.addf %143, %4 : vector<8x8xf32>
    %cst_89 = arith.constant dense<0xFF800000> : vector<8xf32>
    %145 = vector.multi_reduction <maximumf>, %144, %cst_89 [1] : vector<8x8xf32> to vector<8xf32>
    %146 = vector.shape_cast %145 : vector<8xf32> to vector<8x1xf32>
    %147 = vector.broadcast %146 : vector<8x1xf32> to vector<8x8xf32>
    %148 = arith.subf %144, %147 : vector<8x8xf32>
    %149 = math.exp %148 : vector<8x8xf32>
    %cst_90 = arith.constant dense<0.000000e+00> : vector<8xf32>
    %150 = vector.multi_reduction <add>, %149, %cst_90 [1] : vector<8x8xf32> to vector<8xf32>
    %151 = vector.shape_cast %150 : vector<8xf32> to vector<8x1xf32>
    %152 = tpu.reciprocal %151 : vector<8x1xf32> -> vector<8x1xf32>
    %153 = vector.broadcast %152 : vector<8x1xf32> to vector<8x8xf32>
    %154 = arith.mulf %149, %153 : vector<8x8xf32>
    %155 = arith.truncf %154 : vector<8x8xf32> to vector<8x8xbf16>
    %156 = vector.extract_strided_slice %140 {offsets = [0, 0], sizes = [8, 8], strides = [1, 1]} : vector<8x32xbf16> to vector<8x8xbf16>
    %cst_91 = arith.constant dense<0.000000e+00> : vector<8x8xf32>
    %157 = tpu.matmul %155, %156, %cst_91 {dimension_numbers = #tpu.dot_dimension_numbers<[1], [0], [0], [1], [0, 0, 1, 1], [], []>} : vector<8x8xbf16>, vector<8x8xbf16>, vector<8x8xf32> -> vector<8x8xf32>
    %158 = arith.truncf %157 : vector<8x8xf32> to vector<8x8xbf16>
    %c0_92 = arith.constant 0 : index
    %c0_93 = arith.constant 0 : index
    %159 = vector.load %arg13[%c0_92, %c0_93] : memref<8x32xbf16, #tpu.memory_space<vmem>>, vector<8x8xbf16>
    tpu.vector_store %arg13[%c0_92, %c0_93], %158 {strides = array<i32>} : memref<8x32xbf16, #tpu.memory_space<vmem>>, vector<8x8xbf16>,
    %160 = vector.extract_strided_slice %124 {offsets = [0, 8], sizes = [8, 8], strides = [1, 1]} : vector<8x32xbf16> to vector<8x8xbf16>
    %161 = vector.extract_strided_slice %132 {offsets = [0, 8], sizes = [8, 8], strides = [1, 1]} : vector<8x32xbf16> to vector<8x8xbf16>
    %cst_94 = arith.constant dense<0.000000e+00> : vector<8x8xf32>
    %162 = tpu.matmul %160, %161, %cst_94 {dimension_numbers = #tpu.dot_dimension_numbers<[1], [1], [0], [0], [0, 0, 1, 0], [], []>} : vector<8x8xbf16>, vector<8x8xbf16>, vector<8x8xf32> -> vector<8x8xf32>
    %163 = arith.addf %162, %4 : vector<8x8xf32>
    %cst_95 = arith.constant dense<0xFF800000> : vector<8xf32>
    %164 = vector.multi_reduction <maximumf>, %163, %cst_95 [1] : vector<8x8xf32> to vector<8xf32>
    %165 = vector.shape_cast %164 : vector<8xf32> to vector<8x1xf32>
    %166 = vector.broadcast %165 : vector<8x1xf32> to vector<8x8xf32>
    %167 = arith.subf %163, %166 : vector<8x8xf32>
    %168 = math.exp %167 : vector<8x8xf32>
    %cst_96 = arith.constant dense<0.000000e+00> : vector<8xf32>
    %169 = vector.multi_reduction <add>, %168, %cst_96 [1] : vector<8x8xf32> to vector<8xf32>
    %170 = vector.shape_cast %169 : vector<8xf32> to vector<8x1xf32>
    %171 = tpu.reciprocal %170 : vector<8x1xf32> -> vector<8x1xf32>
    %172 = vector.broadcast %171 : vector<8x1xf32> to vector<8x8xf32>
    %173 = arith.mulf %168, %172 : vector<8x8xf32>
    %174 = arith.truncf %173 : vector<8x8xf32> to vector<8x8xbf16>
    %175 = vector.extract_strided_slice %140 {offsets = [0, 8], sizes = [8, 8], strides = [1, 1]} : vector<8x32xbf16> to vector<8x8xbf16>
    %cst_97 = arith.constant dense<0.000000e+00> : vector<8x8xf32>
    %176 = tpu.matmul %174, %175, %cst_97 {dimension_numbers = #tpu.dot_dimension_numbers<[1], [0], [0], [1], [0, 0, 1, 1], [], []>} : vector<8x8xbf16>, vector<8x8xbf16>, vector<8x8xf32> -> vector<8x8xf32>
    %177 = arith.truncf %176 : vector<8x8xf32> to vector<8x8xbf16>
    %c0_98 = arith.constant 0 : index
    %c8_99 = arith.constant 8 : index
    %178 = vector.load %arg13[%c0_98, %c8_99] : memref<8x32xbf16, #tpu.memory_space<vmem>>, vector<8x8xbf16>
    tpu.vector_store %arg13[%c0_98, %c8_99], %177 {strides = array<i32>} : memref<8x32xbf16, #tpu.memory_space<vmem>>, vector<8x8xbf16>,
    %179 = vector.extract_strided_slice %124 {offsets = [0, 16], sizes = [8, 8], strides = [1, 1]} : vector<8x32xbf16> to vector<8x8xbf16>
    %180 = vector.extract_strided_slice %132 {offsets = [0, 16], sizes = [8, 8], strides = [1, 1]} : vector<8x32xbf16> to vector<8x8xbf16>
    %cst_100 = arith.constant dense<0.000000e+00> : vector<8x8xf32>
    %181 = tpu.matmul %179, %180, %cst_100 {dimension_numbers = #tpu.dot_dimension_numbers<[1], [1], [0], [0], [0, 0, 1, 0], [], []>} : vector<8x8xbf16>, vector<8x8xbf16>, vector<8x8xf32> -> vector<8x8xf32>
    %182 = arith.addf %181, %4 : vector<8x8xf32>
    %cst_101 = arith.constant dense<0xFF800000> : vector<8xf32>
    %183 = vector.multi_reduction <maximumf>, %182, %cst_101 [1] : vector<8x8xf32> to vector<8xf32>
    %184 = vector.shape_cast %183 : vector<8xf32> to vector<8x1xf32>
    %185 = vector.broadcast %184 : vector<8x1xf32> to vector<8x8xf32>
    %186 = arith.subf %182, %185 : vector<8x8xf32>
    %187 = math.exp %186 : vector<8x8xf32>
    %cst_102 = arith.constant dense<0.000000e+00> : vector<8xf32>
    %188 = vector.multi_reduction <add>, %187, %cst_102 [1] : vector<8x8xf32> to vector<8xf32>
    %189 = vector.shape_cast %188 : vector<8xf32> to vector<8x1xf32>
    %190 = tpu.reciprocal %189 : vector<8x1xf32> -> vector<8x1xf32>
    %191 = vector.broadcast %190 : vector<8x1xf32> to vector<8x8xf32>
    %192 = arith.mulf %187, %191 : vector<8x8xf32>
    %193 = arith.truncf %192 : vector<8x8xf32> to vector<8x8xbf16>
    %194 = vector.extract_strided_slice %140 {offsets = [0, 16], sizes = [8, 8], strides = [1, 1]} : vector<8x32xbf16> to vector<8x8xbf16>
    %cst_103 = arith.constant dense<0.000000e+00> : vector<8x8xf32>
    %195 = tpu.matmul %193, %194, %cst_103 {dimension_numbers = #tpu.dot_dimension_numbers<[1], [0], [0], [1], [0, 0, 1, 1], [], []>} : vector<8x8xbf16>, vector<8x8xbf16>, vector<8x8xf32> -> vector<8x8xf32>
    %196 = arith.truncf %195 : vector<8x8xf32> to vector<8x8xbf16>
    %c0_104 = arith.constant 0 : index
    %c16_105 = arith.constant 16 : index
    %197 = vector.load %arg13[%c0_104, %c16_105] : memref<8x32xbf16, #tpu.memory_space<vmem>>, vector<8x8xbf16>
    tpu.vector_store %arg13[%c0_104, %c16_105], %196 {strides = array<i32>} : memref<8x32xbf16, #tpu.memory_space<vmem>>, vector<8x8xbf16>,
    %198 = vector.extract_strided_slice %124 {offsets = [0, 24], sizes = [8, 8], strides = [1, 1]} : vector<8x32xbf16> to vector<8x8xbf16>
    %199 = vector.extract_strided_slice %132 {offsets = [0, 24], sizes = [8, 8], strides = [1, 1]} : vector<8x32xbf16> to vector<8x8xbf16>
    %cst_106 = arith.constant dense<0.000000e+00> : vector<8x8xf32>
    %200 = tpu.matmul %198, %199, %cst_106 {dimension_numbers = #tpu.dot_dimension_numbers<[1], [1], [0], [0], [0, 0, 1, 0], [], []>} : vector<8x8xbf16>, vector<8x8xbf16>, vector<8x8xf32> -> vector<8x8xf32>
    %201 = arith.addf %200, %4 : vector<8x8xf32>
    %cst_107 = arith.constant dense<0xFF800000> : vector<8xf32>
    %202 = vector.multi_reduction <maximumf>, %201, %cst_107 [1] : vector<8x8xf32> to vector<8xf32>
    %203 = vector.shape_cast %202 : vector<8xf32> to vector<8x1xf32>
    %204 = vector.broadcast %203 : vector<8x1xf32> to vector<8x8xf32>
    %205 = arith.subf %201, %204 : vector<8x8xf32>
    %206 = math.exp %205 : vector<8x8xf32>
    %cst_108 = arith.constant dense<0.000000e+00> : vector<8xf32>
    %207 = vector.multi_reduction <add>, %206, %cst_108 [1] : vector<8x8xf32> to vector<8xf32>
    %208 = vector.shape_cast %207 : vector<8xf32> to vector<8x1xf32>
    %209 = tpu.reciprocal %208 : vector<8x1xf32> -> vector<8x1xf32>
    %210 = vector.broadcast %209 : vector<8x1xf32> to vector<8x8xf32>
    %211 = arith.mulf %206, %210 : vector<8x8xf32>
    %212 = arith.truncf %211 : vector<8x8xf32> to vector<8x8xbf16>
    %213 = vector.extract_strided_slice %140 {offsets = [0, 24], sizes = [8, 8], strides = [1, 1]} : vector<8x32xbf16> to vector<8x8xbf16>
    %cst_109 = arith.constant dense<0.000000e+00> : vector<8x8xf32>
    %214 = tpu.matmul %212, %213, %cst_109 {dimension_numbers = #tpu.dot_dimension_numbers<[1], [0], [0], [1], [0, 0, 1, 1], [], []>} : vector<8x8xbf16>, vector<8x8xbf16>, vector<8x8xf32> -> vector<8x8xf32>
    %215 = arith.truncf %214 : vector<8x8xf32> to vector<8x8xbf16>
    %c0_110 = arith.constant 0 : index
    %c24_111 = arith.constant 24 : index
    %216 = vector.load %arg13[%c0_110, %c24_111] : memref<8x32xbf16, #tpu.memory_space<vmem>>, vector<8x8xbf16>
    tpu.vector_store %arg13[%c0_110, %c24_111], %215 {strides = array<i32>} : memref<8x32xbf16, #tpu.memory_space<vmem>>, vector<8x8xbf16>,
    %c0_112 = arith.constant 0 : index
    %c0_113 = arith.constant 0 : index
    %217 = vector.load %arg13[%c0_112, %c0_113] : memref<8x32xbf16, #tpu.memory_space<vmem>>, vector<8x32xbf16>
    %c1_114 = arith.constant 1 : index
    %c0_115 = arith.constant 0 : index
    %c0_116 = arith.constant 0 : index
    %218 = vector.load %arg6[%c1_114, %c0_115, %c0_116] : memref<4x32x32xbf16, #tpu.memory_space<vmem>>, vector<1x32x32xbf16>
    %219 = vector.shape_cast %218 : vector<1x32x32xbf16> to vector<32x32xbf16>
    %cst_117 = arith.constant dense<0.000000e+00> : vector<8x32xf32>
    %220 = tpu.matmul %217, %219, %cst_117 {dimension_numbers = #tpu.dot_dimension_numbers<[1], [0], [0], [1], [0, 0, 1, 1], [], []>} : vector<8x32xbf16>, vector<32x32xbf16>, vector<8x32xf32> -> vector<8x32xf32>
    %c1_118 = arith.constant 1 : index
    %c0_119 = arith.constant 0 : index
    %c0_120 = arith.constant 0 : index
    %221 = vector.load %arg7[%c1_118, %c0_119, %c0_120] : memref<4x1x32xf32, #tpu.memory_space<vmem>>, vector<1x1x32xf32>
    %222 = vector.shape_cast %221 : vector<1x1x32xf32> to vector<1x32xf32>
    %223 = vector.broadcast %222 : vector<1x32xf32> to vector<8x32xf32>
    %224 = arith.addf %220, %223 : vector<8x32xf32>
    %c2_121 = arith.constant 2 : index
    %c0_122 = arith.constant 0 : index
    %c0_123 = arith.constant 0 : index
    %c0_124 = arith.constant 0 : index
    %225 = vector.load %arg4[%c2_121, %c0_122, %c0_123, %c0_124] : memref<4x3x32x32xbf16, #tpu.memory_space<vmem>>, vector<1x1x32x32xbf16>
    %226 = vector.shape_cast %225 : vector<1x1x32x32xbf16> to vector<32x32xbf16>
    %cst_125 = arith.constant dense<0.000000e+00> : vector<8x32xf32>
    %227 = tpu.matmul %7, %226, %cst_125 {dimension_numbers = #tpu.dot_dimension_numbers<[1], [0], [0], [1], [0, 0, 1, 1], [], []>} : vector<8x32xbf16>, vector<32x32xbf16>, vector<8x32xf32> -> vector<8x32xf32>
    %c2_126 = arith.constant 2 : index
    %c0_127 = arith.constant 0 : index
    %c0_128 = arith.constant 0 : index
    %c0_129 = arith.constant 0 : index
    %228 = vector.load %arg5[%c2_126, %c0_127, %c0_128, %c0_129] : memref<4x3x1x32xf32, #tpu.memory_space<vmem>>, vector<1x1x1x32xf32>
    %229 = vector.shape_cast %228 : vector<1x1x1x32xf32> to vector<1x32xf32>
    %230 = vector.broadcast %229 : vector<1x32xf32> to vector<8x32xf32>
    %231 = arith.addf %227, %230 : vector<8x32xf32>
    %232 = arith.truncf %231 : vector<8x32xf32> to vector<8x32xbf16>
    %c2_130 = arith.constant 2 : index
    %c1_131 = arith.constant 1 : index
    %c0_132 = arith.constant 0 : index
    %c0_133 = arith.constant 0 : index
    %233 = vector.load %arg4[%c2_130, %c1_131, %c0_132, %c0_133] : memref<4x3x32x32xbf16, #tpu.memory_space<vmem>>, vector<1x1x32x32xbf16>
    %234 = vector.shape_cast %233 : vector<1x1x32x32xbf16> to vector<32x32xbf16>
    %cst_134 = arith.constant dense<0.000000e+00> : vector<8x32xf32>
    %235 = tpu.matmul %7, %234, %cst_134 {dimension_numbers = #tpu.dot_dimension_numbers<[1], [0], [0], [1], [0, 0, 1, 1], [], []>} : vector<8x32xbf16>, vector<32x32xbf16>, vector<8x32xf32> -> vector<8x32xf32>
    %c2_135 = arith.constant 2 : index
    %c1_136 = arith.constant 1 : index
    %c0_137 = arith.constant 0 : index
    %c0_138 = arith.constant 0 : index
    %236 = vector.load %arg5[%c2_135, %c1_136, %c0_137, %c0_138] : memref<4x3x1x32xf32, #tpu.memory_space<vmem>>, vector<1x1x1x32xf32>
    %237 = vector.shape_cast %236 : vector<1x1x1x32xf32> to vector<1x32xf32>
    %238 = vector.broadcast %237 : vector<1x32xf32> to vector<8x32xf32>
    %239 = arith.addf %235, %238 : vector<8x32xf32>
    %240 = arith.truncf %239 : vector<8x32xf32> to vector<8x32xbf16>
    %c2_139 = arith.constant 2 : index
    %c2_140 = arith.constant 2 : index
    %c0_141 = arith.constant 0 : index
    %c0_142 = arith.constant 0 : index
    %241 = vector.load %arg4[%c2_139, %c2_140, %c0_141, %c0_142] : memref<4x3x32x32xbf16, #tpu.memory_space<vmem>>, vector<1x1x32x32xbf16>
    %242 = vector.shape_cast %241 : vector<1x1x32x32xbf16> to vector<32x32xbf16>
    %cst_143 = arith.constant dense<0.000000e+00> : vector<8x32xf32>
    %243 = tpu.matmul %5, %242, %cst_143 {dimension_numbers = #tpu.dot_dimension_numbers<[1], [0], [0], [1], [0, 0, 1, 1], [], []>} : vector<8x32xbf16>, vector<32x32xbf16>, vector<8x32xf32> -> vector<8x32xf32>
    %c2_144 = arith.constant 2 : index
    %c2_145 = arith.constant 2 : index
    %c0_146 = arith.constant 0 : index
    %c0_147 = arith.constant 0 : index
    %244 = vector.load %arg5[%c2_144, %c2_145, %c0_146, %c0_147] : memref<4x3x1x32xf32, #tpu.memory_space<vmem>>, vector<1x1x1x32xf32>
    %245 = vector.shape_cast %244 : vector<1x1x1x32xf32> to vector<1x32xf32>
    %246 = vector.broadcast %245 : vector<1x32xf32> to vector<8x32xf32>
    %247 = arith.addf %243, %246 : vector<8x32xf32>
    %248 = arith.truncf %247 : vector<8x32xf32> to vector<8x32xbf16>
    %249 = vector.extract_strided_slice %232 {offsets = [0, 0], sizes = [8, 8], strides = [1, 1]} : vector<8x32xbf16> to vector<8x8xbf16>
    %250 = vector.extract_strided_slice %240 {offsets = [0, 0], sizes = [8, 8], strides = [1, 1]} : vector<8x32xbf16> to vector<8x8xbf16>
    %cst_148 = arith.constant dense<0.000000e+00> : vector<8x8xf32>
    %251 = tpu.matmul %249, %250, %cst_148 {dimension_numbers = #tpu.dot_dimension_numbers<[1], [1], [0], [0], [0, 0, 1, 0], [], []>} : vector<8x8xbf16>, vector<8x8xbf16>, vector<8x8xf32> -> vector<8x8xf32>
    %252 = arith.addf %251, %4 : vector<8x8xf32>
    %cst_149 = arith.constant dense<0xFF800000> : vector<8xf32>
    %253 = vector.multi_reduction <maximumf>, %252, %cst_149 [1] : vector<8x8xf32> to vector<8xf32>
    %254 = vector.shape_cast %253 : vector<8xf32> to vector<8x1xf32>
    %255 = vector.broadcast %254 : vector<8x1xf32> to vector<8x8xf32>
    %256 = arith.subf %252, %255 : vector<8x8xf32>
    %257 = math.exp %256 : vector<8x8xf32>
    %cst_150 = arith.constant dense<0.000000e+00> : vector<8xf32>
    %258 = vector.multi_reduction <add>, %257, %cst_150 [1] : vector<8x8xf32> to vector<8xf32>
    %259 = vector.shape_cast %258 : vector<8xf32> to vector<8x1xf32>
    %260 = tpu.reciprocal %259 : vector<8x1xf32> -> vector<8x1xf32>
    %261 = vector.broadcast %260 : vector<8x1xf32> to vector<8x8xf32>
    %262 = arith.mulf %257, %261 : vector<8x8xf32>
    %263 = arith.truncf %262 : vector<8x8xf32> to vector<8x8xbf16>
    %264 = vector.extract_strided_slice %248 {offsets = [0, 0], sizes = [8, 8], strides = [1, 1]} : vector<8x32xbf16> to vector<8x8xbf16>
    %cst_151 = arith.constant dense<0.000000e+00> : vector<8x8xf32>
    %265 = tpu.matmul %263, %264, %cst_151 {dimension_numbers = #tpu.dot_dimension_numbers<[1], [0], [0], [1], [0, 0, 1, 1], [], []>} : vector<8x8xbf16>, vector<8x8xbf16>, vector<8x8xf32> -> vector<8x8xf32>
    %266 = arith.truncf %265 : vector<8x8xf32> to vector<8x8xbf16>
    %c0_152 = arith.constant 0 : index
    %c0_153 = arith.constant 0 : index
    %267 = vector.load %arg13[%c0_152, %c0_153] : memref<8x32xbf16, #tpu.memory_space<vmem>>, vector<8x8xbf16>
    tpu.vector_store %arg13[%c0_152, %c0_153], %266 {strides = array<i32>} : memref<8x32xbf16, #tpu.memory_space<vmem>>, vector<8x8xbf16>,
    %268 = vector.extract_strided_slice %232 {offsets = [0, 8], sizes = [8, 8], strides = [1, 1]} : vector<8x32xbf16> to vector<8x8xbf16>
    %269 = vector.extract_strided_slice %240 {offsets = [0, 8], sizes = [8, 8], strides = [1, 1]} : vector<8x32xbf16> to vector<8x8xbf16>
    %cst_154 = arith.constant dense<0.000000e+00> : vector<8x8xf32>
    %270 = tpu.matmul %268, %269, %cst_154 {dimension_numbers = #tpu.dot_dimension_numbers<[1], [1], [0], [0], [0, 0, 1, 0], [], []>} : vector<8x8xbf16>, vector<8x8xbf16>, vector<8x8xf32> -> vector<8x8xf32>
    %271 = arith.addf %270, %4 : vector<8x8xf32>
    %cst_155 = arith.constant dense<0xFF800000> : vector<8xf32>
    %272 = vector.multi_reduction <maximumf>, %271, %cst_155 [1] : vector<8x8xf32> to vector<8xf32>
    %273 = vector.shape_cast %272 : vector<8xf32> to vector<8x1xf32>
    %274 = vector.broadcast %273 : vector<8x1xf32> to vector<8x8xf32>
    %275 = arith.subf %271, %274 : vector<8x8xf32>
    %276 = math.exp %275 : vector<8x8xf32>
    %cst_156 = arith.constant dense<0.000000e+00> : vector<8xf32>
    %277 = vector.multi_reduction <add>, %276, %cst_156 [1] : vector<8x8xf32> to vector<8xf32>
    %278 = vector.shape_cast %277 : vector<8xf32> to vector<8x1xf32>
    %279 = tpu.reciprocal %278 : vector<8x1xf32> -> vector<8x1xf32>
    %280 = vector.broadcast %279 : vector<8x1xf32> to vector<8x8xf32>
    %281 = arith.mulf %276, %280 : vector<8x8xf32>
    %282 = arith.truncf %281 : vector<8x8xf32> to vector<8x8xbf16>
    %283 = vector.extract_strided_slice %248 {offsets = [0, 8], sizes = [8, 8], strides = [1, 1]} : vector<8x32xbf16> to vector<8x8xbf16>
    %cst_157 = arith.constant dense<0.000000e+00> : vector<8x8xf32>
    %284 = tpu.matmul %282, %283, %cst_157 {dimension_numbers = #tpu.dot_dimension_numbers<[1], [0], [0], [1], [0, 0, 1, 1], [], []>} : vector<8x8xbf16>, vector<8x8xbf16>, vector<8x8xf32> -> vector<8x8xf32>
    %285 = arith.truncf %284 : vector<8x8xf32> to vector<8x8xbf16>
    %c0_158 = arith.constant 0 : index
    %c8_159 = arith.constant 8 : index
    %286 = vector.load %arg13[%c0_158, %c8_159] : memref<8x32xbf16, #tpu.memory_space<vmem>>, vector<8x8xbf16>
    tpu.vector_store %arg13[%c0_158, %c8_159], %285 {strides = array<i32>} : memref<8x32xbf16, #tpu.memory_space<vmem>>, vector<8x8xbf16>,
    %287 = vector.extract_strided_slice %232 {offsets = [0, 16], sizes = [8, 8], strides = [1, 1]} : vector<8x32xbf16> to vector<8x8xbf16>
    %288 = vector.extract_strided_slice %240 {offsets = [0, 16], sizes = [8, 8], strides = [1, 1]} : vector<8x32xbf16> to vector<8x8xbf16>
    %cst_160 = arith.constant dense<0.000000e+00> : vector<8x8xf32>
    %289 = tpu.matmul %287, %288, %cst_160 {dimension_numbers = #tpu.dot_dimension_numbers<[1], [1], [0], [0], [0, 0, 1, 0], [], []>} : vector<8x8xbf16>, vector<8x8xbf16>, vector<8x8xf32> -> vector<8x8xf32>
    %290 = arith.addf %289, %4 : vector<8x8xf32>
    %cst_161 = arith.constant dense<0xFF800000> : vector<8xf32>
    %291 = vector.multi_reduction <maximumf>, %290, %cst_161 [1] : vector<8x8xf32> to vector<8xf32>
    %292 = vector.shape_cast %291 : vector<8xf32> to vector<8x1xf32>
    %293 = vector.broadcast %292 : vector<8x1xf32> to vector<8x8xf32>
    %294 = arith.subf %290, %293 : vector<8x8xf32>
    %295 = math.exp %294 : vector<8x8xf32>
    %cst_162 = arith.constant dense<0.000000e+00> : vector<8xf32>
    %296 = vector.multi_reduction <add>, %295, %cst_162 [1] : vector<8x8xf32> to vector<8xf32>
    %297 = vector.shape_cast %296 : vector<8xf32> to vector<8x1xf32>
    %298 = tpu.reciprocal %297 : vector<8x1xf32> -> vector<8x1xf32>
    %299 = vector.broadcast %298 : vector<8x1xf32> to vector<8x8xf32>
    %300 = arith.mulf %295, %299 : vector<8x8xf32>
    %301 = arith.truncf %300 : vector<8x8xf32> to vector<8x8xbf16>
    %302 = vector.extract_strided_slice %248 {offsets = [0, 16], sizes = [8, 8], strides = [1, 1]} : vector<8x32xbf16> to vector<8x8xbf16>
    %cst_163 = arith.constant dense<0.000000e+00> : vector<8x8xf32>
    %303 = tpu.matmul %301, %302, %cst_163 {dimension_numbers = #tpu.dot_dimension_numbers<[1], [0], [0], [1], [0, 0, 1, 1], [], []>} : vector<8x8xbf16>, vector<8x8xbf16>, vector<8x8xf32> -> vector<8x8xf32>
    %304 = arith.truncf %303 : vector<8x8xf32> to vector<8x8xbf16>
    %c0_164 = arith.constant 0 : index
    %c16_165 = arith.constant 16 : index
    %305 = vector.load %arg13[%c0_164, %c16_165] : memref<8x32xbf16, #tpu.memory_space<vmem>>, vector<8x8xbf16>
    tpu.vector_store %arg13[%c0_164, %c16_165], %304 {strides = array<i32>} : memref<8x32xbf16, #tpu.memory_space<vmem>>, vector<8x8xbf16>,
    %306 = vector.extract_strided_slice %232 {offsets = [0, 24], sizes = [8, 8], strides = [1, 1]} : vector<8x32xbf16> to vector<8x8xbf16>
    %307 = vector.extract_strided_slice %240 {offsets = [0, 24], sizes = [8, 8], strides = [1, 1]} : vector<8x32xbf16> to vector<8x8xbf16>
    %cst_166 = arith.constant dense<0.000000e+00> : vector<8x8xf32>
    %308 = tpu.matmul %306, %307, %cst_166 {dimension_numbers = #tpu.dot_dimension_numbers<[1], [1], [0], [0], [0, 0, 1, 0], [], []>} : vector<8x8xbf16>, vector<8x8xbf16>, vector<8x8xf32> -> vector<8x8xf32>
    %309 = arith.addf %308, %4 : vector<8x8xf32>
    %cst_167 = arith.constant dense<0xFF800000> : vector<8xf32>
    %310 = vector.multi_reduction <maximumf>, %309, %cst_167 [1] : vector<8x8xf32> to vector<8xf32>
    %311 = vector.shape_cast %310 : vector<8xf32> to vector<8x1xf32>
    %312 = vector.broadcast %311 : vector<8x1xf32> to vector<8x8xf32>
    %313 = arith.subf %309, %312 : vector<8x8xf32>
    %314 = math.exp %313 : vector<8x8xf32>
    %cst_168 = arith.constant dense<0.000000e+00> : vector<8xf32>
    %315 = vector.multi_reduction <add>, %314, %cst_168 [1] : vector<8x8xf32> to vector<8xf32>
    %316 = vector.shape_cast %315 : vector<8xf32> to vector<8x1xf32>
    %317 = tpu.reciprocal %316 : vector<8x1xf32> -> vector<8x1xf32>
    %318 = vector.broadcast %317 : vector<8x1xf32> to vector<8x8xf32>
    %319 = arith.mulf %314, %318 : vector<8x8xf32>
    %320 = arith.truncf %319 : vector<8x8xf32> to vector<8x8xbf16>
    %321 = vector.extract_strided_slice %248 {offsets = [0, 24], sizes = [8, 8], strides = [1, 1]} : vector<8x32xbf16> to vector<8x8xbf16>
    %cst_169 = arith.constant dense<0.000000e+00> : vector<8x8xf32>
    %322 = tpu.matmul %320, %321, %cst_169 {dimension_numbers = #tpu.dot_dimension_numbers<[1], [0], [0], [1], [0, 0, 1, 1], [], []>} : vector<8x8xbf16>, vector<8x8xbf16>, vector<8x8xf32> -> vector<8x8xf32>
    %323 = arith.truncf %322 : vector<8x8xf32> to vector<8x8xbf16>
    %c0_170 = arith.constant 0 : index
    %c24_171 = arith.constant 24 : index
    %324 = vector.load %arg13[%c0_170, %c24_171] : memref<8x32xbf16, #tpu.memory_space<vmem>>, vector<8x8xbf16>
    tpu.vector_store %arg13[%c0_170, %c24_171], %323 {strides = array<i32>} : memref<8x32xbf16, #tpu.memory_space<vmem>>, vector<8x8xbf16>,
    %c0_172 = arith.constant 0 : index
    %c0_173 = arith.constant 0 : index
    %325 = vector.load %arg13[%c0_172, %c0_173] : memref<8x32xbf16, #tpu.memory_space<vmem>>, vector<8x32xbf16>
    %c2_174 = arith.constant 2 : index
    %c0_175 = arith.constant 0 : index
    %c0_176 = arith.constant 0 : index
    %326 = vector.load %arg6[%c2_174, %c0_175, %c0_176] : memref<4x32x32xbf16, #tpu.memory_space<vmem>>, vector<1x32x32xbf16>
    %327 = vector.shape_cast %326 : vector<1x32x32xbf16> to vector<32x32xbf16>
    %cst_177 = arith.constant dense<0.000000e+00> : vector<8x32xf32>
    %328 = tpu.matmul %325, %327, %cst_177 {dimension_numbers = #tpu.dot_dimension_numbers<[1], [0], [0], [1], [0, 0, 1, 1], [], []>} : vector<8x32xbf16>, vector<32x32xbf16>, vector<8x32xf32> -> vector<8x32xf32>
    %c2_178 = arith.constant 2 : index
    %c0_179 = arith.constant 0 : index
    %c0_180 = arith.constant 0 : index
    %329 = vector.load %arg7[%c2_178, %c0_179, %c0_180] : memref<4x1x32xf32, #tpu.memory_space<vmem>>, vector<1x1x32xf32>
    %330 = vector.shape_cast %329 : vector<1x1x32xf32> to vector<1x32xf32>
    %331 = vector.broadcast %330 : vector<1x32xf32> to vector<8x32xf32>
    %332 = arith.addf %328, %331 : vector<8x32xf32>
    %333 = arith.truncf %332 : vector<8x32xf32> to vector<8x32xbf16>
    %c3 = arith.constant 3 : index
    %c0_181 = arith.constant 0 : index
    %c0_182 = arith.constant 0 : index
    %c0_183 = arith.constant 0 : index
    %334 = vector.load %arg4[%c3, %c0_181, %c0_182, %c0_183] : memref<4x3x32x32xbf16, #tpu.memory_space<vmem>>, vector<1x1x32x32xbf16>
    %335 = vector.shape_cast %334 : vector<1x1x32x32xbf16> to vector<32x32xbf16>
    %cst_184 = arith.constant dense<0.000000e+00> : vector<8x32xf32>
    %336 = tpu.matmul %333, %335, %cst_184 {dimension_numbers = #tpu.dot_dimension_numbers<[1], [0], [0], [1], [0, 0, 1, 1], [], []>} : vector<8x32xbf16>, vector<32x32xbf16>, vector<8x32xf32> -> vector<8x32xf32>
    %c3_185 = arith.constant 3 : index
    %c0_186 = arith.constant 0 : index
    %c0_187 = arith.constant 0 : index
    %c0_188 = arith.constant 0 : index
    %337 = vector.load %arg5[%c3_185, %c0_186, %c0_187, %c0_188] : memref<4x3x1x32xf32, #tpu.memory_space<vmem>>, vector<1x1x1x32xf32>
    %338 = vector.shape_cast %337 : vector<1x1x1x32xf32> to vector<1x32xf32>
    %339 = vector.broadcast %338 : vector<1x32xf32> to vector<8x32xf32>
    %340 = arith.addf %336, %339 : vector<8x32xf32>
    %341 = arith.truncf %340 : vector<8x32xf32> to vector<8x32xbf16>
    %c3_189 = arith.constant 3 : index
    %c1_190 = arith.constant 1 : index
    %c0_191 = arith.constant 0 : index
    %c0_192 = arith.constant 0 : index
    %342 = vector.load %arg4[%c3_189, %c1_190, %c0_191, %c0_192] : memref<4x3x32x32xbf16, #tpu.memory_space<vmem>>, vector<1x1x32x32xbf16>
    %343 = vector.shape_cast %342 : vector<1x1x32x32xbf16> to vector<32x32xbf16>
    %cst_193 = arith.constant dense<0.000000e+00> : vector<8x32xf32>
    %344 = tpu.matmul %5, %343, %cst_193 {dimension_numbers = #tpu.dot_dimension_numbers<[1], [0], [0], [1], [0, 0, 1, 1], [], []>} : vector<8x32xbf16>, vector<32x32xbf16>, vector<8x32xf32> -> vector<8x32xf32>
    %c3_194 = arith.constant 3 : index
    %c1_195 = arith.constant 1 : index
    %c0_196 = arith.constant 0 : index
    %c0_197 = arith.constant 0 : index
    %345 = vector.load %arg5[%c3_194, %c1_195, %c0_196, %c0_197] : memref<4x3x1x32xf32, #tpu.memory_space<vmem>>, vector<1x1x1x32xf32>
    %346 = vector.shape_cast %345 : vector<1x1x1x32xf32> to vector<1x32xf32>
    %347 = vector.broadcast %346 : vector<1x32xf32> to vector<8x32xf32>
    %348 = arith.addf %344, %347 : vector<8x32xf32>
    %349 = arith.truncf %348 : vector<8x32xf32> to vector<8x32xbf16>
    %c3_198 = arith.constant 3 : index
    %c2_199 = arith.constant 2 : index
    %c0_200 = arith.constant 0 : index
    %c0_201 = arith.constant 0 : index
    %350 = vector.load %arg4[%c3_198, %c2_199, %c0_200, %c0_201] : memref<4x3x32x32xbf16, #tpu.memory_space<vmem>>, vector<1x1x32x32xbf16>
    %351 = vector.shape_cast %350 : vector<1x1x32x32xbf16> to vector<32x32xbf16>
    %cst_202 = arith.constant dense<0.000000e+00> : vector<8x32xf32>
    %352 = tpu.matmul %5, %351, %cst_202 {dimension_numbers = #tpu.dot_dimension_numbers<[1], [0], [0], [1], [0, 0, 1, 1], [], []>} : vector<8x32xbf16>, vector<32x32xbf16>, vector<8x32xf32> -> vector<8x32xf32>
    %c3_203 = arith.constant 3 : index
    %c2_204 = arith.constant 2 : index
    %c0_205 = arith.constant 0 : index
    %c0_206 = arith.constant 0 : index
    %353 = vector.load %arg5[%c3_203, %c2_204, %c0_205, %c0_206] : memref<4x3x1x32xf32, #tpu.memory_space<vmem>>, vector<1x1x1x32xf32>
    %354 = vector.shape_cast %353 : vector<1x1x1x32xf32> to vector<1x32xf32>
    %355 = vector.broadcast %354 : vector<1x32xf32> to vector<8x32xf32>
    %356 = arith.addf %352, %355 : vector<8x32xf32>
    %357 = arith.truncf %356 : vector<8x32xf32> to vector<8x32xbf16>
    %358 = vector.extract_strided_slice %341 {offsets = [0, 0], sizes = [8, 8], strides = [1, 1]} : vector<8x32xbf16> to vector<8x8xbf16>
    %359 = vector.extract_strided_slice %349 {offsets = [0, 0], sizes = [8, 8], strides = [1, 1]} : vector<8x32xbf16> to vector<8x8xbf16>
    %cst_207 = arith.constant dense<0.000000e+00> : vector<8x8xf32>
    %360 = tpu.matmul %358, %359, %cst_207 {dimension_numbers = #tpu.dot_dimension_numbers<[1], [1], [0], [0], [0, 0, 1, 0], [], []>} : vector<8x8xbf16>, vector<8x8xbf16>, vector<8x8xf32> -> vector<8x8xf32>
    %361 = arith.addf %360, %4 : vector<8x8xf32>
    %cst_208 = arith.constant dense<0xFF800000> : vector<8xf32>
    %362 = vector.multi_reduction <maximumf>, %361, %cst_208 [1] : vector<8x8xf32> to vector<8xf32>
    %363 = vector.shape_cast %362 : vector<8xf32> to vector<8x1xf32>
    %364 = vector.broadcast %363 : vector<8x1xf32> to vector<8x8xf32>
    %365 = arith.subf %361, %364 : vector<8x8xf32>
    %366 = math.exp %365 : vector<8x8xf32>
    %cst_209 = arith.constant dense<0.000000e+00> : vector<8xf32>
    %367 = vector.multi_reduction <add>, %366, %cst_209 [1] : vector<8x8xf32> to vector<8xf32>
    %368 = vector.shape_cast %367 : vector<8xf32> to vector<8x1xf32>
    %369 = tpu.reciprocal %368 : vector<8x1xf32> -> vector<8x1xf32>
    %370 = vector.broadcast %369 : vector<8x1xf32> to vector<8x8xf32>
    %371 = arith.mulf %366, %370 : vector<8x8xf32>
    %372 = arith.truncf %371 : vector<8x8xf32> to vector<8x8xbf16>
    %373 = vector.extract_strided_slice %357 {offsets = [0, 0], sizes = [8, 8], strides = [1, 1]} : vector<8x32xbf16> to vector<8x8xbf16>
    %cst_210 = arith.constant dense<0.000000e+00> : vector<8x8xf32>
    %374 = tpu.matmul %372, %373, %cst_210 {dimension_numbers = #tpu.dot_dimension_numbers<[1], [0], [0], [1], [0, 0, 1, 1], [], []>} : vector<8x8xbf16>, vector<8x8xbf16>, vector<8x8xf32> -> vector<8x8xf32>
    %375 = arith.truncf %374 : vector<8x8xf32> to vector<8x8xbf16>
    %c0_211 = arith.constant 0 : index
    %c0_212 = arith.constant 0 : index
    %376 = vector.load %arg13[%c0_211, %c0_212] : memref<8x32xbf16, #tpu.memory_space<vmem>>, vector<8x8xbf16>
    tpu.vector_store %arg13[%c0_211, %c0_212], %375 {strides = array<i32>} : memref<8x32xbf16, #tpu.memory_space<vmem>>, vector<8x8xbf16>,
    %377 = vector.extract_strided_slice %341 {offsets = [0, 8], sizes = [8, 8], strides = [1, 1]} : vector<8x32xbf16> to vector<8x8xbf16>
    %378 = vector.extract_strided_slice %349 {offsets = [0, 8], sizes = [8, 8], strides = [1, 1]} : vector<8x32xbf16> to vector<8x8xbf16>
    %cst_213 = arith.constant dense<0.000000e+00> : vector<8x8xf32>
    %379 = tpu.matmul %377, %378, %cst_213 {dimension_numbers = #tpu.dot_dimension_numbers<[1], [1], [0], [0], [0, 0, 1, 0], [], []>} : vector<8x8xbf16>, vector<8x8xbf16>, vector<8x8xf32> -> vector<8x8xf32>
    %380 = arith.addf %379, %4 : vector<8x8xf32>
    %cst_214 = arith.constant dense<0xFF800000> : vector<8xf32>
    %381 = vector.multi_reduction <maximumf>, %380, %cst_214 [1] : vector<8x8xf32> to vector<8xf32>
    %382 = vector.shape_cast %381 : vector<8xf32> to vector<8x1xf32>
    %383 = vector.broadcast %382 : vector<8x1xf32> to vector<8x8xf32>
    %384 = arith.subf %380, %383 : vector<8x8xf32>
    %385 = math.exp %384 : vector<8x8xf32>
    %cst_215 = arith.constant dense<0.000000e+00> : vector<8xf32>
    %386 = vector.multi_reduction <add>, %385, %cst_215 [1] : vector<8x8xf32> to vector<8xf32>
    %387 = vector.shape_cast %386 : vector<8xf32> to vector<8x1xf32>
    %388 = tpu.reciprocal %387 : vector<8x1xf32> -> vector<8x1xf32>
    %389 = vector.broadcast %388 : vector<8x1xf32> to vector<8x8xf32>
    %390 = arith.mulf %385, %389 : vector<8x8xf32>
    %391 = arith.truncf %390 : vector<8x8xf32> to vector<8x8xbf16>
    %392 = vector.extract_strided_slice %357 {offsets = [0, 8], sizes = [8, 8], strides = [1, 1]} : vector<8x32xbf16> to vector<8x8xbf16>
    %cst_216 = arith.constant dense<0.000000e+00> : vector<8x8xf32>
    %393 = tpu.matmul %391, %392, %cst_216 {dimension_numbers = #tpu.dot_dimension_numbers<[1], [0], [0], [1], [0, 0, 1, 1], [], []>} : vector<8x8xbf16>, vector<8x8xbf16>, vector<8x8xf32> -> vector<8x8xf32>
    %394 = arith.truncf %393 : vector<8x8xf32> to vector<8x8xbf16>
    %c0_217 = arith.constant 0 : index
    %c8_218 = arith.constant 8 : index
    %395 = vector.load %arg13[%c0_217, %c8_218] : memref<8x32xbf16, #tpu.memory_space<vmem>>, vector<8x8xbf16>
    tpu.vector_store %arg13[%c0_217, %c8_218], %394 {strides = array<i32>} : memref<8x32xbf16, #tpu.memory_space<vmem>>, vector<8x8xbf16>,
    %396 = vector.extract_strided_slice %341 {offsets = [0, 16], sizes = [8, 8], strides = [1, 1]} : vector<8x32xbf16> to vector<8x8xbf16>
    %397 = vector.extract_strided_slice %349 {offsets = [0, 16], sizes = [8, 8], strides = [1, 1]} : vector<8x32xbf16> to vector<8x8xbf16>
    %cst_219 = arith.constant dense<0.000000e+00> : vector<8x8xf32>
    %398 = tpu.matmul %396, %397, %cst_219 {dimension_numbers = #tpu.dot_dimension_numbers<[1], [1], [0], [0], [0, 0, 1, 0], [], []>} : vector<8x8xbf16>, vector<8x8xbf16>, vector<8x8xf32> -> vector<8x8xf32>
    %399 = arith.addf %398, %4 : vector<8x8xf32>
    %cst_220 = arith.constant dense<0xFF800000> : vector<8xf32>
    %400 = vector.multi_reduction <maximumf>, %399, %cst_220 [1] : vector<8x8xf32> to vector<8xf32>
    %401 = vector.shape_cast %400 : vector<8xf32> to vector<8x1xf32>
    %402 = vector.broadcast %401 : vector<8x1xf32> to vector<8x8xf32>
    %403 = arith.subf %399, %402 : vector<8x8xf32>
    %404 = math.exp %403 : vector<8x8xf32>
    %cst_221 = arith.constant dense<0.000000e+00> : vector<8xf32>
    %405 = vector.multi_reduction <add>, %404, %cst_221 [1] : vector<8x8xf32> to vector<8xf32>
    %406 = vector.shape_cast %405 : vector<8xf32> to vector<8x1xf32>
    %407 = tpu.reciprocal %406 : vector<8x1xf32> -> vector<8x1xf32>
    %408 = vector.broadcast %407 : vector<8x1xf32> to vector<8x8xf32>
    %409 = arith.mulf %404, %408 : vector<8x8xf32>
    %410 = arith.truncf %409 : vector<8x8xf32> to vector<8x8xbf16>
    %411 = vector.extract_strided_slice %357 {offsets = [0, 16], sizes = [8, 8], strides = [1, 1]} : vector<8x32xbf16> to vector<8x8xbf16>
    %cst_222 = arith.constant dense<0.000000e+00> : vector<8x8xf32>
    %412 = tpu.matmul %410, %411, %cst_222 {dimension_numbers = #tpu.dot_dimension_numbers<[1], [0], [0], [1], [0, 0, 1, 1], [], []>} : vector<8x8xbf16>, vector<8x8xbf16>, vector<8x8xf32> -> vector<8x8xf32>
    %413 = arith.truncf %412 : vector<8x8xf32> to vector<8x8xbf16>
    %c0_223 = arith.constant 0 : index
    %c16_224 = arith.constant 16 : index
    %414 = vector.load %arg13[%c0_223, %c16_224] : memref<8x32xbf16, #tpu.memory_space<vmem>>, vector<8x8xbf16>
    tpu.vector_store %arg13[%c0_223, %c16_224], %413 {strides = array<i32>} : memref<8x32xbf16, #tpu.memory_space<vmem>>, vector<8x8xbf16>,
    %415 = vector.extract_strided_slice %341 {offsets = [0, 24], sizes = [8, 8], strides = [1, 1]} : vector<8x32xbf16> to vector<8x8xbf16>
    %416 = vector.extract_strided_slice %349 {offsets = [0, 24], sizes = [8, 8], strides = [1, 1]} : vector<8x32xbf16> to vector<8x8xbf16>
    %cst_225 = arith.constant dense<0.000000e+00> : vector<8x8xf32>
    %417 = tpu.matmul %415, %416, %cst_225 {dimension_numbers = #tpu.dot_dimension_numbers<[1], [1], [0], [0], [0, 0, 1, 0], [], []>} : vector<8x8xbf16>, vector<8x8xbf16>, vector<8x8xf32> -> vector<8x8xf32>
    %418 = arith.addf %417, %4 : vector<8x8xf32>
    %cst_226 = arith.constant dense<0xFF800000> : vector<8xf32>
    %419 = vector.multi_reduction <maximumf>, %418, %cst_226 [1] : vector<8x8xf32> to vector<8xf32>
    %420 = vector.shape_cast %419 : vector<8xf32> to vector<8x1xf32>
    %421 = vector.broadcast %420 : vector<8x1xf32> to vector<8x8xf32>
    %422 = arith.subf %418, %421 : vector<8x8xf32>
    %423 = math.exp %422 : vector<8x8xf32>
    %cst_227 = arith.constant dense<0.000000e+00> : vector<8xf32>
    %424 = vector.multi_reduction <add>, %423, %cst_227 [1] : vector<8x8xf32> to vector<8xf32>
    %425 = vector.shape_cast %424 : vector<8xf32> to vector<8x1xf32>
    %426 = tpu.reciprocal %425 : vector<8x1xf32> -> vector<8x1xf32>
    %427 = vector.broadcast %426 : vector<8x1xf32> to vector<8x8xf32>
    %428 = arith.mulf %423, %427 : vector<8x8xf32>
    %429 = arith.truncf %428 : vector<8x8xf32> to vector<8x8xbf16>
    %430 = vector.extract_strided_slice %357 {offsets = [0, 24], sizes = [8, 8], strides = [1, 1]} : vector<8x32xbf16> to vector<8x8xbf16>
    %cst_228 = arith.constant dense<0.000000e+00> : vector<8x8xf32>
    %431 = tpu.matmul %429, %430, %cst_228 {dimension_numbers = #tpu.dot_dimension_numbers<[1], [0], [0], [1], [0, 0, 1, 1], [], []>} : vector<8x8xbf16>, vector<8x8xbf16>, vector<8x8xf32> -> vector<8x8xf32>
    %432 = arith.truncf %431 : vector<8x8xf32> to vector<8x8xbf16>
    %c0_229 = arith.constant 0 : index
    %c24_230 = arith.constant 24 : index
    %433 = vector.load %arg13[%c0_229, %c24_230] : memref<8x32xbf16, #tpu.memory_space<vmem>>, vector<8x8xbf16>
    tpu.vector_store %arg13[%c0_229, %c24_230], %432 {strides = array<i32>} : memref<8x32xbf16, #tpu.memory_space<vmem>>, vector<8x8xbf16>,
    %c0_231 = arith.constant 0 : index
    %c0_232 = arith.constant 0 : index
    %434 = vector.load %arg13[%c0_231, %c0_232] : memref<8x32xbf16, #tpu.memory_space<vmem>>, vector<8x32xbf16>
    %c3_233 = arith.constant 3 : index
    %c0_234 = arith.constant 0 : index
    %c0_235 = arith.constant 0 : index
    %435 = vector.load %arg6[%c3_233, %c0_234, %c0_235] : memref<4x32x32xbf16, #tpu.memory_space<vmem>>, vector<1x32x32xbf16>
    %436 = vector.shape_cast %435 : vector<1x32x32xbf16> to vector<32x32xbf16>
    %cst_236 = arith.constant dense<0.000000e+00> : vector<8x32xf32>
    %437 = tpu.matmul %434, %436, %cst_236 {dimension_numbers = #tpu.dot_dimension_numbers<[1], [0], [0], [1], [0, 0, 1, 1], [], []>} : vector<8x32xbf16>, vector<32x32xbf16>, vector<8x32xf32> -> vector<8x32xf32>
    %c3_237 = arith.constant 3 : index
    %c0_238 = arith.constant 0 : index
    %c0_239 = arith.constant 0 : index
    %438 = vector.load %arg7[%c3_237, %c0_238, %c0_239] : memref<4x1x32xf32, #tpu.memory_space<vmem>>, vector<1x1x32xf32>
    %439 = vector.shape_cast %438 : vector<1x1x32xf32> to vector<1x32xf32>
    %440 = vector.broadcast %439 : vector<1x32xf32> to vector<8x32xf32>
    %441 = arith.addf %437, %440 : vector<8x32xf32>
    %cst_240 = arith.constant 0.000000e+00 : f32
    %442 = vector.broadcast %cst_240 : f32 to vector<8x32xf32>
    %443 = arith.maximumf %441, %442 : vector<8x32xf32>
    %444 = arith.truncf %443 : vector<8x32xf32> to vector<8x32xbf16>
    %c0_241 = arith.constant 0 : index
    %c0_242 = arith.constant 0 : index
    %445 = vector.load %arg8[%c0_241, %c0_242] : memref<32x32xbf16, #tpu.memory_space<vmem>>, vector<32x32xbf16>
    %cst_243 = arith.constant dense<0.000000e+00> : vector<8x32xf32>
    %446 = tpu.matmul %444, %445, %cst_243 {dimension_numbers = #tpu.dot_dimension_numbers<[1], [0], [0], [1], [0, 0, 1, 1], [], []>} : vector<8x32xbf16>, vector<32x32xbf16>, vector<8x32xf32> -> vector<8x32xf32>
    %c0_244 = arith.constant 0 : index
    %c0_245 = arith.constant 0 : index
    %447 = vector.load %arg9[%c0_244, %c0_245] : memref<1x32xf32, #tpu.memory_space<vmem>>, vector<1x32xf32>
    %448 = vector.broadcast %447 : vector<1x32xf32> to vector<8x32xf32>
    %449 = arith.addf %446, %448 : vector<8x32xf32>
    %450 = arith.negf %449 : vector<8x32xf32>
    %451 = math.exp %450 : vector<8x32xf32>
    %cst_246 = arith.constant 1.000000e+00 : f32
    %452 = vector.broadcast %cst_246 : f32 to vector<8x32xf32>
    %453 = arith.addf %452, %451 : vector<8x32xf32>
    %454 = arith.divf %452, %453 : vector<8x32xf32>
    %cst_247 = arith.constant 1.000000e+00 : f32
    %455 = vector.broadcast %cst_247 : f32 to vector<8x32xf32>
    %456 = arith.subf %455, %454 : vector<8x32xf32>
    %457 = arith.mulf %1, %456 : vector<8x32xf32>
    %cst_248 = arith.constant 2.000000e+00 : f32
    %458 = vector.broadcast %cst_248 : f32 to vector<8x32xf32>
    %459 = arith.mulf %457, %458 : vector<8x32xf32>
    %460 = arith.addf %459, %224 : vector<8x32xf32>
    %cst_249 = arith.constant dense<0.000000e+00> : vector<8xf32>
    %461 = vector.multi_reduction <add>, %460, %cst_249 [1] : vector<8x32xf32> to vector<8xf32>
    %462 = vector.shape_cast %461 : vector<8xf32> to vector<8x1xf32>
    %cst_250 = arith.constant 3.200000e+01 : f32
    %463 = vector.broadcast %cst_250 : f32 to vector<8x1xf32>
    %464 = arith.divf %462, %463 : vector<8x1xf32>
    %465 = vector.broadcast %464 : vector<8x1xf32> to vector<8x32xf32>
    %466 = arith.subf %460, %465 : vector<8x32xf32>
    %467 = arith.mulf %466, %466 : vector<8x32xf32>
    %cst_251 = arith.constant dense<0.000000e+00> : vector<8xf32>
    %468 = vector.multi_reduction <add>, %467, %cst_251 [1] : vector<8x32xf32> to vector<8xf32>
    %469 = vector.shape_cast %468 : vector<8xf32> to vector<8x1xf32>
    %cst_252 = arith.constant 3.200000e+01 : f32
    %470 = vector.broadcast %cst_252 : f32 to vector<8x1xf32>
    %471 = arith.divf %469, %470 : vector<8x1xf32>
    %472 = vector.broadcast %464 : vector<8x1xf32> to vector<8x32xf32>
    %473 = arith.subf %460, %472 : vector<8x32xf32>
    %cst_253 = arith.constant 9.99999974E-6 : f32
    %474 = vector.broadcast %cst_253 : f32 to vector<8x1xf32>
    %475 = arith.addf %471, %474 : vector<8x1xf32>
    %476 = math.rsqrt %475 : vector<8x1xf32>
    %477 = vector.broadcast %476 : vector<8x1xf32> to vector<8x32xf32>
    %478 = arith.mulf %473, %477 : vector<8x32xf32>
    %c0_254 = arith.constant 0 : index
    %c0_255 = arith.constant 0 : index
    %479 = vector.load %arg10[%c0_254, %c0_255] : memref<1x32xf32, #tpu.memory_space<vmem>>, vector<1x32xf32>
    %480 = vector.broadcast %479 : vector<1x32xf32> to vector<8x32xf32>
    %481 = arith.mulf %478, %480 : vector<8x32xf32>
    %c0_256 = arith.constant 0 : index
    %c0_257 = arith.constant 0 : index
    %482 = vector.load %arg11[%c0_256, %c0_257] : memref<1x32xf32, #tpu.memory_space<vmem>>, vector<1x32xf32>
    %483 = vector.broadcast %482 : vector<1x32xf32> to vector<8x32xf32>
    %484 = arith.addf %481, %483 : vector<8x32xf32>
    %c0_258 = arith.constant 0 : index
    %c0_259 = arith.constant 0 : index
    %c0_260 = arith.constant 0 : index
    %485 = vector.load %arg12[%c0_258, %c0_259, %c0_260] : memref<1x8x32xf32, #tpu.memory_space<vmem>>, vector<1x8x32xf32>
    %486 = vector.shape_cast %485 : vector<1x8x32xf32> to vector<8x32xf32>
    %487 = vector.shape_cast %484 : vector<8x32xf32> to vector<1x8x32xf32>
    tpu.vector_store %arg12[%c0_258, %c0_259, %c0_260], %487 {strides = array<i32>} : memref<1x8x32xf32, #tpu.memory_space<vmem>>, vector<1x8x32xf32>,
    return
  }
  func.func @transform_0(%arg0: i32) -> (i32, i32, i32) {
    %c0_i32 = arith.constant 0 : i32
    %c0_i32_0 = arith.constant 0 : i32
    %c0_i32_1 = arith.constant 0 : i32
    return %arg0, %c0_i32, %c0_i32_0 : i32, i32, i32
  }
  func.func @transform_1(%arg0: i32) -> (i32, i32, i32) {
    %c0_i32 = arith.constant 0 : i32
    %c0_i32_0 = arith.constant 0 : i32
    %c0_i32_1 = arith.constant 0 : i32
    return %arg0, %c0_i32, %c0_i32_0 : i32, i32, i32
  }
  func.func @transform_2(%arg0: i32) -> (i32, i32) {
    %c0_i32 = arith.constant 0 : i32
    %c0_i32_0 = arith.constant 0 : i32
    %c0_i32_1 = arith.constant 0 : i32
    return %c0_i32, %c0_i32_0 : i32, i32
  }
  func.func @transform_3(%arg0: i32) -> (i32, i32, i32, i32) {
    %c0_i32 = arith.constant 0 : i32
    %c0_i32_0 = arith.constant 0 : i32
    %c0_i32_1 = arith.constant 0 : i32
    %c0_i32_2 = arith.constant 0 : i32
    %c0_i32_3 = arith.constant 0 : i32
    return %c0_i32, %c0_i32_0, %c0_i32_1, %c0_i32_2 : i32, i32, i32, i32
  }
  func.func @transform_4(%arg0: i32) -> (i32, i32, i32, i32) {
    %c0_i32 = arith.constant 0 : i32
    %c0_i32_0 = arith.constant 0 : i32
    %c0_i32_1 = arith.constant 0 : i32
    %c0_i32_2 = arith.constant 0 : i32
    %c0_i32_3 = arith.constant 0 : i32
    return %c0_i32, %c0_i32_0, %c0_i32_1, %c0_i32_2 : i32, i32, i32, i32
  }
  func.func @transform_5(%arg0: i32) -> (i32, i32, i32) {
    %c0_i32 = arith.constant 0 : i32
    %c0_i32_0 = arith.constant 0 : i32
    %c0_i32_1 = arith.constant 0 : i32
    %c0_i32_2 = arith.constant 0 : i32
    return %c0_i32, %c0_i32_0, %c0_i32_1 : i32, i32, i32
  }
  func.func @transform_6(%arg0: i32) -> (i32, i32, i32) {
    %c0_i32 = arith.constant 0 : i32
    %c0_i32_0 = arith.constant 0 : i32
    %c0_i32_1 = arith.constant 0 : i32
    %c0_i32_2 = arith.constant 0 : i32
    return %c0_i32, %c0_i32_0, %c0_i32_1 : i32, i32, i32
  }
  func.func @transform_7(%arg0: i32) -> (i32, i32) {
    %c0_i32 = arith.constant 0 : i32
    %c0_i32_0 = arith.constant 0 : i32
    %c0_i32_1 = arith.constant 0 : i32
    return %c0_i32, %c0_i32_0 : i32, i32
  }
  func.func @transform_8(%arg0: i32) -> (i32, i32) {
    %c0_i32 = arith.constant 0 : i32
    %c0_i32_0 = arith.constant 0 : i32
    %c0_i32_1 = arith.constant 0 : i32
    return %c0_i32, %c0_i32_0 : i32, i32
  }
  func.func @transform_9(%arg0: i32) -> (i32, i32) {
    %c0_i32 = arith.constant 0 : i32
    %c0_i32_0 = arith.constant 0 : i32
    %c0_i32_1 = arith.constant 0 : i32
    return %c0_i32, %c0_i32_0 : i32, i32
  }
  func.func @transform_10(%arg0: i32) -> (i32, i32) {
    %c0_i32 = arith.constant 0 : i32
    %c0_i32_0 = arith.constant 0 : i32
    %c0_i32_1 = arith.constant 0 : i32
    return %c0_i32, %c0_i32_0 : i32, i32
  }
  func.func @transform_11(%arg0: i32) -> (i32, i32, i32) {
    %c0_i32 = arith.constant 0 : i32
    %c0_i32_0 = arith.constant 0 : i32
    %c0_i32_1 = arith.constant 0 : i32
    return %arg0, %c0_i32, %c0_i32_0 : i32, i32, i32
  }
}

</mosaic_0001>

<llo_original>
// kernel: history_qim_forward.1
$region0: #{history_qim_forward.1}
  #allocation0 [shape = 'u32[]', space=smem, size = 0x4, offset = 0x4, fixed_abs, tag = 'smem constant byte address 0x4 - core index']
  #allocation1 [shape = 'u32[144,128]{1,0:T(1,128)}', space=vmem, size = 0x12000, scoped, tag = 'internal scratch']
  #allocation2 [shape = 'bf16[8,32]{1,0:T(8,128)(2,1)}', space=vmem, size = 0x800, scoped, tag = 'scratch operand']
  %s0 = inlined_call_operand.hbm [shape: f32[2,8,32], index: 0, kind: input, shape index: {}]
  %s1 = inlined_call_operand.hbm [shape: f32[2,8,32], index: 1, kind: input, shape index: {}]
  %s2 = inlined_call_operand.hbm [shape: f32[8,8], index: 2, kind: input, shape index: {}]
  %s3 = inlined_call_operand.hbm [shape: bf16[4,3,32,32], index: 3, kind: input, shape index: {}]
  %s4 = inlined_call_operand.hbm [shape: f32[4,3,1,32], index: 4, kind: input, shape index: {}]
  %s5 = inlined_call_operand.hbm [shape: bf16[4,32,32], index: 5, kind: input, shape index: {}]
  %s6 = inlined_call_operand.hbm [shape: f32[4,1,32], index: 6, kind: input, shape index: {}]
  %s7 = inlined_call_operand.hbm [shape: bf16[32,32], index: 7, kind: input, shape index: {}]
  %s8 = inlined_call_operand.hbm [shape: f32[1,32], index: 8, kind: input, shape index: {}]
  %s9 = inlined_call_operand.hbm [shape: f32[1,32], index: 9, kind: input, shape index: {}]
  %s10 = inlined_call_operand.hbm [shape: f32[1,32], index: 10, kind: input, shape index: {}]
  %s11 = inlined_call_operand.hbm [shape: f32[2,8,32], index: 11, kind: output, shape index: {}]
  %s12 = sld [smem:[#allocation0]]
  $region121: #{history_qim_forward.1} parent=0
    _
  %s14 = ssub.s32 1, %s12
  %s15 = scalar_select 0, %s14, %s12
  $region1: #{history_qim_forward.1} parent=0
    #allocation3 [shape = 'u8[8192]{0}', space=vmem, size = 0x2000, scoped, tag = 'input window, operand 0']
    #allocation4 [shape = 's32[2]{0}', space=sflag, size = 0x8, scoped, tag = 'scoped memory for history_qim_forward.1']
    #allocation5 [shape = 's32[2]{0}', space=sflag, size = 0x8, scoped, tag = 'scoped memory for history_qim_forward.1']
    #allocation6 [shape = 'u8[8192]{0}', space=vmem, size = 0x2000, scoped, tag = 'input window, operand 1']
    #allocation7 [shape = 's32[2]{0}', space=sflag, size = 0x8, scoped, tag = 'scoped memory for history_qim_forward.1']
    #allocation8 [shape = 'u8[4096]{0}', space=vmem, size = 0x1000, scoped, tag = 'input window, operand 2, single buffered']
    #allocation9 [shape = 'u8[98304]{0}', space=vmem, size = 0x18000, scoped, tag = 'input window, operand 3, single buffered']
    #allocation10 [shape = 's32[1]{0}', space=sflag, size = 0x4, scoped, tag = 'scoped memory for history_qim_forward.1']
    #allocation11 [shape = 'u8[6144]{0}', space=vmem, size = 0x1800, scoped, tag = 'input window, operand 4, single buffered']
    #allocation12 [shape = 'u8[32768]{0}', space=vmem, size = 0x8000, scoped, tag = 'input window, operand 5, single buffered']
    #allocation13 [shape = 's32[1]{0}', space=sflag, size = 0x4, scoped, tag = 'scoped memory for history_qim_forward.1']
    #allocation14 [shape = 'u8[2048]{0}', space=vmem, size = 0x800, scoped, tag = 'input window, operand 6, single buffered']
    #allocation15 [shape = 'u8[8192]{0}', space=vmem, size = 0x2000, scoped, tag = 'input window, operand 7, single buffered']
    #allocation16 [shape = 's32[1]{0}', space=sflag, size = 0x4, scoped, tag = 'scoped memory for history_qim_forward.1']
    #allocation17 [shape = 'u8[512]{0}', space=vmem, size = 0x400, scoped, tag = 'input window, operand 8, single buffered']
    #allocation18 [shape = 'u8[512]{0}', space=vmem, size = 0x400, scoped, tag = 'input window, operand 9, single buffered']
    #allocation19 [shape = 's32[1]{0}', space=sflag, size = 0x4, scoped, tag = 'scoped memory for history_qim_forward.1']
    #allocation20 [shape = 'u8[512]{0}', space=vmem, size = 0x400, scoped, tag = 'input window, operand 10, single buffered']
    #allocation21 [shape = 'u8[8192]{0}', space=vmem, size = 0x2000, scoped, tag = 'output window, operand 0']
    %16 = vsyncpa [#allocation4], 0
    %s17 = scalar_lea.sflag [#allocation4], 1
    %18 = vsyncpa %s17, 0
    %19 = vsyncpa [#allocation7], 0
    %s20 = scalar_lea.sflag [#allocation7], 1
    %21 = vsyncpa %s20, 0
    %22 = vsyncpa [#allocation10], 0
    %23 = vsyncpa [#allocation13], 0
    %24 = vsyncpa [#allocation16], 0
    %25 = vsyncpa [#allocation19], 0
    %26 = vsyncpa [#allocation5], 0
    %s27 = scalar_lea.sflag [#allocation5], 1
    %28 = vsyncpa %s27, 0
    loop: start=0, step=1, limit=4
    $region2: #{history_qim_forward.1} parent=1 // loop_pre_header
      _
    $region3: #{history_qim_forward.1} parent=1 // loop_header
      %s30 = sphi 0, %s34
      %p31 = scmp.ge.s32.totalorder %s30, 4
      %s40 = sphi 0, %s42
      %s43 = sphi 0, %s40
      %s44 = sphi 0, %s43
      %s60 = sphi 0, %s44
      %s66 = sphi 0, %s68
      %s69 = sphi 0, %s66
      %s70 = sphi 0, %s69
      %s86 = sphi 0, %s70
      %s90 = sphi 0, %s90
      %s92 = sphi 0, %s90
      %s93 = sphi 0, %s92
      %s107 = sphi 0, %s93
      %s111 = sphi 0, %s111
      %s113 = sphi 0, %s111
      %s114 = sphi 0, %s113
      %s128 = sphi 0, %s114
      %s132 = sphi 0, %s132
      %s134 = sphi 0, %s132
      %s135 = sphi 0, %s134
      %s149 = sphi 0, %s135
      %s153 = sphi 0, %s153
      %s155 = sphi 0, %s153
      %s156 = sphi 0, %s155
      %s170 = sphi 0, %s156
      %s174 = sphi 0, %s174
      %s176 = sphi 0, %s174
      %s177 = sphi 0, %s176
      %s191 = sphi 0, %s177
      %s195 = sphi 0, %s195
      %s197 = sphi 0, %s195
      %s198 = sphi 0, %s197
      %s212 = sphi 0, %s198
      %s216 = sphi 0, %s216
      %s218 = sphi 0, %s216
      %s219 = sphi 0, %s218
      %s233 = sphi 0, %s219
      %s237 = sphi 0, %s237
      %s239 = sphi 0, %s237
      %s240 = sphi 0, %s239
      %s254 = sphi 0, %s240
      %s258 = sphi 0, %s258
      %s260 = sphi 0, %s258
      %s261 = sphi 0, %s260
      %s275 = sphi 0, %s261
      %s281 = sphi 0, %s283
      %s284 = sphi 0, %s281
      %s285 = sphi 0, %s284
      %s301 = sphi 0, %s285
    $region4: #{history_qim_forward.1} parent=1 // loop_header_branch
      %33 = sbr.rel (%p31) target = $region8
    $region5: #{history_qim_forward.1} parent=1 // loop_body
      %s35 = ssub.s32 %s30, 1
      %s36 = ssub.s32 %s30, 2
      %s37 = sadd.s32 %s30, 1
      %s38 = ssub.s32 %s30, %s37
      %p39 = scmp.eq.s32.totalorder %s38, 0
      %s41 = sadd.s32 %s40, 1
      %s42 = scalar_select %p39, %s40, %s41
      %p45 = pneg %p39
      %p46 = scmp.eq.s32.totalorder %s30, 1
      %p47 = por %p45, %p46
      %p48 = scmp.ne.s32.totalorder %s40, %s43
      %p49 = scmp.eq.s32.totalorder %s30, 0
      %p50 = por %p48, %p49
      %p51 = scmp.ne.s32.totalorder %s40, %s43
      %p52 = scmp.eq.s32.totalorder %s35, 1
      %p53 = por %p51, %p52
      %p54 = scmp.ne.s32.totalorder %s43, %s44
      %p55 = scmp.eq.s32.totalorder %s35, 0
      %p56 = por %p54, %p55
      %p57 = scmp.ne.s32.totalorder %s43, %s44
      %p58 = scmp.eq.s32.totalorder %s36, 1
      %p59 = por %p57, %p58
      %p61 = scmp.ne.s32.totalorder %s44, %s60
      %p62 = scmp.eq.s32.totalorder %s36, 0
      %p63 = por %p61, %p62
      %s64 = ssub.s32 %s30, %s37
      %p65 = scmp.eq.s32.totalorder %s64, 0
      %s67 = sadd.s32 %s66, 1
      %s68 = scalar_select %p65, %s66, %s67
      %p71 = pneg %p65
      %p72 = scmp.eq.s32.totalorder %s30, 1
      %p73 = por %p71, %p72
      %p74 = scmp.ne.s32.totalorder %s66, %s69
      %p75 = scmp.eq.s32.totalorder %s30, 0
      %p76 = por %p74, %p75
      %p77 = scmp.ne.s32.totalorder %s66, %s69
      %p78 = scmp.eq.s32.totalorder %s35, 1
      %p79 = por %p77, %p78
      %p80 = scmp.ne.s32.totalorder %s69, %s70
      %p81 = scmp.eq.s32.totalorder %s35, 0
      %p82 = por %p80, %p81
      %p83 = scmp.ne.s32.totalorder %s69, %s70
      %p84 = scmp.eq.s32.totalorder %s36, 1
      %p85 = por %p83, %p84
      %p87 = scmp.ne.s32.totalorder %s70, %s86
      %p88 = scmp.eq.s32.totalorder %s36, 0
      %p89 = por %p87, %p88
      %s91 = sadd.s32 %s90, 1
      %p94 = scmp.eq.s32.totalorder %s30, 1
      %p95 = scmp.ne.s32.totalorder %s90, %s92
      %p96 = scmp.eq.s32.totalorder %s30, 0
      %p97 = por %p95, %p96
      %p98 = scmp.ne.s32.totalorder %s90, %s92
      %p99 = scmp.eq.s32.totalorder %s35, 1
      %p100 = por %p98, %p99
      %p101 = scmp.ne.s32.totalorder %s92, %s93
      %p102 = scmp.eq.s32.totalorder %s35, 0
      %p103 = por %p101, %p102
      %p104 = scmp.ne.s32.totalorder %s92, %s93
      %p105 = scmp.eq.s32.totalorder %s36, 1
      %p106 = por %p104, %p105
      %p108 = scmp.ne.s32.totalorder %s93, %s107
      %p109 = scmp.eq.s32.totalorder %s36, 0
      %p110 = por %p108, %p109
      %s112 = sadd.s32 %s111, 1
      %p115 = scmp.eq.s32.totalorder %s30, 1
      %p116 = scmp.ne.s32.totalorder %s111, %s113
      %p117 = scmp.eq.s32.totalorder %s30, 0
      %p118 = por %p116, %p117
      %p119 = scmp.ne.s32.totalorder %s111, %s113
      %p120 = scmp.eq.s32.totalorder %s35, 1
      %p121 = por %p119, %p120
      %p122 = scmp.ne.s32.totalorder %s113, %s114
      %p123 = scmp.eq.s32.totalorder %s35, 0
      %p124 = por %p122, %p123
      %p125 = scmp.ne.s32.totalorder %s113, %s114
      %p126 = scmp.eq.s32.totalorder %s36, 1
      %p127 = por %p125, %p126
      %p129 = scmp.ne.s32.totalorder %s114, %s128
      %p130 = scmp.eq.s32.totalorder %s36, 0
      %p131 = por %p129, %p130
      %s133 = sadd.s32 %s132, 1
      %p136 = scmp.eq.s32.totalorder %s30, 1
      %p137 = scmp.ne.s32.totalorder %s132, %s134
      %p138 = scmp.eq.s32.totalorder %s30, 0
      %p139 = por %p137, %p138
      %p140 = scmp.ne.s32.totalorder %s132, %s134
      %p141 = scmp.eq.s32.totalorder %s35, 1
      %p142 = por %p140, %p141
      %p143 = scmp.ne.s32.totalorder %s134, %s135
      %p144 = scmp.eq.s32.totalorder %s35, 0
      %p145 = por %p143, %p144
      %p146 = scmp.ne.s32.totalorder %s134, %s135
      %p147 = scmp.eq.s32.totalorder %s36, 1
      %p148 = por %p146, %p147
      %p150 = scmp.ne.s32.totalorder %s135, %s149
      %p151 = scmp.eq.s32.totalorder %s36, 0
      %p152 = por %p150, %p151
      %s154 = sadd.s32 %s153, 1
      %p157 = scmp.eq.s32.totalorder %s30, 1
      %p158 = scmp.ne.s32.totalorder %s153, %s155
      %p159 = scmp.eq.s32.totalorder %s30, 0
      %p160 = por %p158, %p159
      %p161 = scmp.ne.s32.totalorder %s153, %s155
      %p162 = scmp.eq.s32.totalorder %s35, 1
      %p163 = por %p161, %p162
      %p164 = scmp.ne.s32.totalorder %s155, %s156
      %p165 = scmp.eq.s32.totalorder %s35, 0
      %p166 = por %p164, %p165
      %p167 = scmp.ne.s32.totalorder %s155, %s156
      %p168 = scmp.eq.s32.totalorder %s36, 1
      %p169 = por %p167, %p168
      %p171 = scmp.ne.s32.totalorder %s156, %s170
      %p172 = scmp.eq.s32.totalorder %s36, 0
      %p173 = por %p171, %p172
      %s175 = sadd.s32 %s174, 1
      %p178 = scmp.eq.s32.totalorder %s30, 1
      %p179 = scmp.ne.s32.totalorder %s174, %s176
      %p180 = scmp.eq.s32.totalorder %s30, 0
      %p181 = por %p179, %p180
      %p182 = scmp.ne.s32.totalorder %s174, %s176
      %p183 = scmp.eq.s32.totalorder %s35, 1
      %p184 = por %p182, %p183
      %p185 = scmp.ne.s32.totalorder %s176, %s177
      %p186 = scmp.eq.s32.totalorder %s35, 0
      %p187 = por %p185, %p186
      %p188 = scmp.ne.s32.totalorder %s176, %s177
      %p189 = scmp.eq.s32.totalorder %s36, 1
      %p190 = por %p188, %p189
      %p192 = scmp.ne.s32.totalorder %s177, %s191
      %p193 = scmp.eq.s32.totalorder %s36, 0
      %p194 = por %p192, %p193
      %s196 = sadd.s32 %s195, 1
      %p199 = scmp.eq.s32.totalorder %s30, 1
      %p200 = scmp.ne.s32.totalorder %s195, %s197
      %p201 = scmp.eq.s32.totalorder %s30, 0
      %p202 = por %p200, %p201
      %p203 = scmp.ne.s32.totalorder %s195, %s197
      %p204 = scmp.eq.s32.totalorder %s35, 1
      %p205 = por %p203, %p204
      %p206 = scmp.ne.s32.totalorder %s197, %s198
      %p207 = scmp.eq.s32.totalorder %s35, 0
      %p208 = por %p206, %p207
      %p209 = scmp.ne.s32.totalorder %s197, %s198
      %p210 = scmp.eq.s32.totalorder %s36, 1
      %p211 = por %p209, %p210
      %p213 = scmp.ne.s32.totalorder %s198, %s212
      %p214 = scmp.eq.s32.totalorder %s36, 0
      %p215 = por %p213, %p214
      %s217 = sadd.s32 %s216, 1
      %p220 = scmp.eq.s32.totalorder %s30, 1
      %p221 = scmp.ne.s32.totalorder %s216, %s218
      %p222 = scmp.eq.s32.totalorder %s30, 0
      %p223 = por %p221, %p222
      %p224 = scmp.ne.s32.totalorder %s216, %s218
      %p225 = scmp.eq.s32.totalorder %s35, 1
      %p226 = por %p224, %p225
      %p227 = scmp.ne.s32.totalorder %s218, %s219
      %p228 = scmp.eq.s32.totalorder %s35, 0
      %p229 = por %p227, %p228
      %p230 = scmp.ne.s32.totalorder %s218, %s219
      %p231 = scmp.eq.s32.totalorder %s36, 1
      %p232 = por %p230, %p231
      %p234 = scmp.ne.s32.totalorder %s219, %s233
      %p235 = scmp.eq.s32.totalorder %s36, 0
      %p236 = por %p234, %p235
      %s238 = sadd.s32 %s237, 1
      %p241 = scmp.eq.s32.totalorder %s30, 1
      %p242 = scmp.ne.s32.totalorder %s237, %s239
      %p243 = scmp.eq.s32.totalorder %s30, 0
      %p244 = por %p242, %p243
      %p245 = scmp.ne.s32.totalorder %s237, %s239
      %p246 = scmp.eq.s32.totalorder %s35, 1
      %p247 = por %p245, %p246
      %p248 = scmp.ne.s32.totalorder %s239, %s240
      %p249 = scmp.eq.s32.totalorder %s35, 0
      %p250 = por %p248, %p249
      %p251 = scmp.ne.s32.totalorder %s239, %s240
      %p252 = scmp.eq.s32.totalorder %s36, 1
      %p253 = por %p251, %p252
      %p255 = scmp.ne.s32.totalorder %s240, %s254
      %p256 = scmp.eq.s32.totalorder %s36, 0
      %p257 = por %p255, %p256
      %s259 = sadd.s32 %s258, 1
      %p262 = scmp.eq.s32.totalorder %s30, 1
      %p263 = scmp.ne.s32.totalorder %s258, %s260
      %p264 = scmp.eq.s32.totalorder %s30, 0
      %p265 = por %p263, %p264
      %p266 = scmp.ne.s32.totalorder %s258, %s260
      %p267 = scmp.eq.s32.totalorder %s35, 1
      %p268 = por %p266, %p267
      %p269 = scmp.ne.s32.totalorder %s260, %s261
      %p270 = scmp.eq.s32.totalorder %s35, 0
      %p271 = por %p269, %p270
      %p272 = scmp.ne.s32.totalorder %s260, %s261
      %p273 = scmp.eq.s32.totalorder %s36, 1
      %p274 = por %p272, %p273
      %p276 = scmp.ne.s32.totalorder %s261, %s275
      %p277 = scmp.eq.s32.totalorder %s36, 0
      %p278 = por %p276, %p277
      %s279 = ssub.s32 %s30, %s37
      %p280 = scmp.eq.s32.totalorder %s279, 0
      %s282 = sadd.s32 %s281, 1
      %s283 = scalar_select %p280, %s281, %s282
      %p286 = pneg %p280
      %p287 = scmp.eq.s32.totalorder %s30, 1
      %p288 = por %p286, %p287
      %p289 = scmp.ne.s32.totalorder %s281, %s284
      %p290 = scmp.eq.s32.totalorder %s30, 0
      %p291 = por %p289, %p290
      %p292 = scmp.ne.s32.totalorder %s281, %s284
      %p293 = scmp.eq.s32.totalorder %s35, 1
      %p294 = por %p292, %p293
      %p295 = scmp.ne.s32.totalorder %s284, %s285
      %p296 = scmp.eq.s32.totalorder %s35, 0
      %p297 = por %p295, %p296
      %p298 = scmp.ne.s32.totalorder %s284, %s285
      %p299 = scmp.eq.s32.totalorder %s36, 1
      %p300 = por %p298, %p299
      %p302 = scmp.ne.s32.totalorder %s285, %s301
      %p303 = scmp.eq.s32.totalorder %s36, 0
      %p304 = por %p302, %p303
      %p305 = scmp.le.s32.totalorder 1, %s30
      %p306 = scmp.lt.s32.totalorder %s30, 3
      %p307 = pnand %p305, %p306
      %p308 = pneg %p307
      // Predicated region
      $region9: #{history_qim_forward.1} parent=5 // pred_check
        _
      $region10: #{history_qim_forward.1} parent=5 // pred_check_branch
        %310 = sbr.rel (%p307) target = $region12
      $region11: #{history_qim_forward.1} parent=5 // pred_region
        %s311 = ssub.s32 %s30, 1
        // Predicated region
        $region13: #{history_qim_forward.1} parent=11 // pred_check
          %p312 = pneg %p103
        $region14: #{history_qim_forward.1} parent=11 // pred_check_branch
          %314 = sbr.rel (%p312) target = $region16
        $region15: #{history_qim_forward.1} parent=11 // pred_region
          %s316 = ssub.s32 128, 128
          %317 = vsyncadd [#allocation7], %s316
          %s319 = sshll.u32 [#allocation8], 4
          %s320 = int_to_ptr.vmem [resolvable:$true] %s319
          %322 = dma.hbm_to_vmem [thread:$0]  %s2, 128, %s320, [#allocation7]
        $region16: #{history_qim_forward.1} parent=11 // pred_fallthru
          _
        // Predicated region
        $region17: #{history_qim_forward.1} parent=11 // pred_check
          %p323 = pneg %p124
        $region18: #{history_qim_forward.1} parent=11 // pred_check_branch
          %325 = sbr.rel (%p323) target = $region20
        $region19: #{history_qim_forward.1} parent=11 // pred_region
          %s327 = ssub.s32 3072, 3072
          %328 = vsyncadd [#allocation10], %s327
          %s329 = sshll.u32 [#allocation9], 4
          %s330 = int_to_ptr.vmem [resolvable:$true] %s329
          %335 = dma.hbm_to_vmem [thread:$0]  %s3, 3072, %s330, [#allocation10], 64, 64, 4
        $region20: #{history_qim_forward.1} parent=11 // pred_fallthru
          _
        // Predicated region
        $region21: #{history_qim_forward.1} parent=11 // pred_check
          %p336 = pneg %p145
        $region22: #{history_qim_forward.1} parent=11 // pred_check_branch
          %338 = sbr.rel (%p336) target = $region24
        $region23: #{history_qim_forward.1} parent=11 // pred_region
          %s340 = ssub.s32 192, 192
          %341 = vsyncadd [#allocation10], %s340
          %s342 = sshll.u32 [#allocation11], 4
          %s343 = int_to_ptr.vmem [resolvable:$true] %s342
          %348 = dma.hbm_to_vmem [thread:$0]  %s4, 192, %s343, [#allocation10], 16, 16, 1
        $region24: #{history_qim_forward.1} parent=11 // pred_fallthru
          _
        // Predicated region
        $region25: #{history_qim_forward.1} parent=11 // pred_check
          %p349 = pneg %p166
        $region26: #{history_qim_forward.1} parent=11 // pred_check_branch
          %351 = sbr.rel (%p349) target = $region28
        $region27: #{history_qim_forward.1} parent=11 // pred_region
          %s353 = ssub.s32 1024, 1024
          %354 = vsyncadd [#allocation13], %s353
          %s355 = sshll.u32 [#allocation12], 4
          %s356 = int_to_ptr.vmem [resolvable:$true] %s355
          %361 = dma.hbm_to_vmem [thread:$0]  %s5, 1024, %s356, [#allocation13], 64, 64, 4
        $region28: #{history_qim_forward.1} parent=11 // pred_fallthru
          _
        // Predicated region
        $region29: #{history_qim_forward.1} parent=11 // pred_check
          %p362 = pneg %p187
        $region30: #{history_qim_forward.1} parent=11 // pred_check_branch
          %364 = sbr.rel (%p362) target = $region32
        $region31: #{history_qim_forward.1} parent=11 // pred_region
          %s366 = ssub.s32 64, 64
          %367 = vsyncadd [#allocation13], %s366
          %s368 = sshll.u32 [#allocation14], 4
          %s369 = int_to_ptr.vmem [resolvable:$true] %s368
          %374 = dma.hbm_to_vmem [thread:$0]  %s6, 64, %s369, [#allocation13], 16, 16, 1
        $region32: #{history_qim_forward.1} parent=11 // pred_fallthru
          _
        // Predicated region
        $region33: #{history_qim_forward.1} parent=11 // pred_check
          %p375 = pneg %p208
        $region34: #{history_qim_forward.1} parent=11 // pred_check_branch
          %377 = sbr.rel (%p375) target = $region36
        $region35: #{history_qim_forward.1} parent=11 // pred_region
          %s379 = ssub.s32 256, 256
          %380 = vsyncadd [#allocation16], %s379
          %s381 = sshll.u32 [#allocation15], 4
          %s382 = int_to_ptr.vmem [resolvable:$true] %s381
          %387 = dma.hbm_to_vmem [thread:$0]  %s7, 256, %s382, [#allocation16], 64, 64, 4
        $region36: #{history_qim_forward.1} parent=11 // pred_fallthru
          _
        // Predicated region
        $region37: #{history_qim_forward.1} parent=11 // pred_check
          %p388 = pneg %p229
        $region38: #{history_qim_forward.1} parent=11 // pred_check_branch
          %390 = sbr.rel (%p388) target = $region40
        $region39: #{history_qim_forward.1} parent=11 // pred_region
          %s392 = ssub.s32 16, 16
          %393 = vsyncadd [#allocation16], %s392
          %s395 = sshll.u32 [#allocation17], 4
          %s396 = int_to_ptr.vmem [resolvable:$true] %s395
          %398 = dma.hbm_to_vmem [thread:$0]  %s8, 16, %s396, [#allocation16]
        $region40: #{history_qim_forward.1} parent=11 // pred_fallthru
          _
        // Predicated region
        $region41: #{history_qim_forward.1} parent=11 // pred_check
          %p399 = pneg %p250
        $region42: #{history_qim_forward.1} parent=11 // pred_check_branch
          %401 = sbr.rel (%p399) target = $region44
        $region43: #{history_qim_forward.1} parent=11 // pred_region
          %s403 = ssub.s32 16, 16
          %404 = vsyncadd [#allocation19], %s403
          %s406 = sshll.u32 [#allocation18], 4
          %s407 = int_to_ptr.vmem [resolvable:$true] %s406
          %409 = dma.hbm_to_vmem [thread:$0]  %s9, 16, %s407, [#allocation19]
        $region44: #{history_qim_forward.1} parent=11 // pred_fallthru
          _
        // Predicated region
        $region45: #{history_qim_forward.1} parent=11 // pred_check
          %p410 = pneg %p271
        $region46: #{history_qim_forward.1} parent=11 // pred_check_branch
          %412 = sbr.rel (%p410) target = $region48
        $region47: #{history_qim_forward.1} parent=11 // pred_region
          %s414 = ssub.s32 16, 16
          %415 = vsyncadd [#allocation19], %s414
          %s417 = sshll.u32 [#allocation20], 4
          %s418 = int_to_ptr.vmem [resolvable:$true] %s417
          %420 = dma.hbm_to_vmem [thread:$0]  %s10, 16, %s418, [#allocation19]
        $region48: #{history_qim_forward.1} parent=11 // pred_fallthru
          _
      $region12: #{history_qim_forward.1} parent=5 // pred_fallthru
        _
      %p421 = scmp.lt.s32.totalorder %s30, 2
      // Predicated region
      $region49: #{history_qim_forward.1} parent=5 // pred_check
        %p422 = pneg %p421
      $region50: #{history_qim_forward.1} parent=5 // pred_check_branch
        %424 = sbr.rel (%p422) target = $region52
      $region51: #{history_qim_forward.1} parent=5 // pred_region
        // Predicated region
        $region53: #{history_qim_forward.1} parent=51 // pred_check
          %p425 = pneg %p50
        $region54: #{history_qim_forward.1} parent=51 // pred_check_branch
          %427 = sbr.rel (%p425) target = $region56
        $region55: #{history_qim_forward.1} parent=51 // pred_region
          %s428 = sand.u32 %s40, 1
          %s429 = scalar_lea.sflag [#allocation4], %s428
          %s430 = sand.u32 %s40, 1
          %s431 = smul.addr %s430, 8
          %s432 = scalar_lea.vmem [#allocation3], %s431
          %s434 = ssub.s32 128, 128
          %435 = vsyncadd %s429, %s434
          %s436 = smul.addr %s30, 128
          %s437 = scalar_lea.hbm %s0, %s436
          %s439 = sshll.u32 %s432, 4
          %s440 = int_to_ptr.vmem [resolvable:$true] %s439
          %442 = dma.hbm_to_vmem [thread:$0]  %s437, 128, %s440, %s429
        $region56: #{history_qim_forward.1} parent=51 // pred_fallthru
          _
        // Predicated region
        $region57: #{history_qim_forward.1} parent=51 // pred_check
          %p443 = pneg %p76
        $region58: #{history_qim_forward.1} parent=51 // pred_check_branch
          %445 = sbr.rel (%p443) target = $region60
        $region59: #{history_qim_forward.1} parent=51 // pred_region
          %s446 = sand.u32 %s30, 1
          %s447 = scalar_lea.sflag [#allocation7], %s446
          %s448 = sand.u32 %s66, 1
          %s449 = smul.addr %s448, 8
          %s450 = scalar_lea.vmem [#allocation6], %s449
          %s452 = ssub.s32 128, 128
          %453 = vsyncadd %s447, %s452
          %s454 = smul.addr %s30, 128
          %s455 = scalar_lea.hbm %s1, %s454
          %s457 = sshll.u32 %s450, 4
          %s458 = int_to_ptr.vmem [resolvable:$true] %s457
          %460 = dma.hbm_to_vmem [thread:$0]  %s455, 128, %s458, %s447
        $region60: #{history_qim_forward.1} parent=51 // pred_fallthru
          _
      $region52: #{history_qim_forward.1} parent=5 // pred_fallthru
        _
      %p461 = scmp.le.s32.totalorder 1, %s30
      %p462 = scmp.lt.s32.totalorder %s30, 3
      %p463 = pnand %p461, %p462
      %p464 = pneg %p463
      // Predicated region
      $region61: #{history_qim_forward.1} parent=5 // pred_check
        _
      $region62: #{history_qim_forward.1} parent=5 // pred_check_branch
        %466 = sbr.rel (%p463) target = $region64
      $region63: #{history_qim_forward.1} parent=5 // pred_region
        %s467 = ssub.s32 %s30, 1
        %s468 = sand.u32 %s43, 1
        %s469 = scalar_lea.sflag [#allocation4], %s468
        %s470 = sand.u32 %s43, 1
        %s471 = smul.addr %s470, 8
        %s472 = scalar_lea.vmem [#allocation3], %s471
        // Predicated region
        $region65: #{history_qim_forward.1} parent=63 // pred_check
          %p473 = pneg %p56
        $region66: #{history_qim_forward.1} parent=63 // pred_check_branch
          %475 = sbr.rel (%p473) target = $region68
        $region67: #{history_qim_forward.1} parent=63 // pred_region
          %476 = dma.done %s469, 128
        $region68: #{history_qim_forward.1} parent=63 // pred_fallthru
          _
        %s477 = sand.u32 %s35, 1
        %s478 = scalar_lea.sflag [#allocation7], %s477
        %s479 = sand.u32 %s69, 1
        %s480 = smul.addr %s479, 8
        %s481 = scalar_lea.vmem [#allocation6], %s480
        // Predicated region
        $region69: #{history_qim_forward.1} parent=63 // pred_check
          %p482 = pneg %p82
        $region70: #{history_qim_forward.1} parent=63 // pred_check_branch
          %484 = sbr.rel (%p482) target = $region72
        $region71: #{history_qim_forward.1} parent=63 // pred_region
          %485 = dma.done %s478, 128
        $region72: #{history_qim_forward.1} parent=63 // pred_fallthru
          _
        // Predicated region
        $region73: #{history_qim_forward.1} parent=63 // pred_check
          %p486 = pneg %p103
        $region74: #{history_qim_forward.1} parent=63 // pred_check_branch
          %488 = sbr.rel (%p486) target = $region76
        $region75: #{history_qim_forward.1} parent=63 // pred_region
          %489 = dma.done [#allocation7], 128
        $region76: #{history_qim_forward.1} parent=63 // pred_fallthru
          _
        // Predicated region
        $region77: #{history_qim_forward.1} parent=63 // pred_check
          %p490 = pneg %p124
        $region78: #{history_qim_forward.1} parent=63 // pred_check_branch
          %492 = sbr.rel (%p490) target = $region80
        $region79: #{history_qim_forward.1} parent=63 // pred_region
          %493 = dma.done [#allocation10], 3072
        $region80: #{history_qim_forward.1} parent=63 // pred_fallthru
          _
        // Predicated region
        $region81: #{history_qim_forward.1} parent=63 // pred_check
          %p494 = pneg %p145
        $region82: #{history_qim_forward.1} parent=63 // pred_check_branch
          %496 = sbr.rel (%p494) target = $region84
        $region83: #{history_qim_forward.1} parent=63 // pred_region
          %497 = dma.done [#allocation10], 192
        $region84: #{history_qim_forward.1} parent=63 // pred_fallthru
          _
        // Predicated region
        $region85: #{history_qim_forward.1} parent=63 // pred_check
          %p498 = pneg %p166
        $region86: #{history_qim_forward.1} parent=63 // pred_check_branch
          %500 = sbr.rel (%p498) target = $region88
        $region87: #{history_qim_forward.1} parent=63 // pred_region
          %501 = dma.done [#allocation13], 1024
        $region88: #{history_qim_forward.1} parent=63 // pred_fallthru
          _
        // Predicated region
        $region89: #{history_qim_forward.1} parent=63 // pred_check
          %p502 = pneg %p187
        $region90: #{history_qim_forward.1} parent=63 // pred_check_branch
          %504 = sbr.rel (%p502) target = $region92
        $region91: #{history_qim_forward.1} parent=63 // pred_region
          %505 = dma.done [#allocation13], 64
        $region92: #{history_qim_forward.1} parent=63 // pred_fallthru
          _
        // Predicated region
        $region93: #{history_qim_forward.1} parent=63 // pred_check
          %p506 = pneg %p208
        $region94: #{history_qim_forward.1} parent=63 // pred_check_branch
          %508 = sbr.rel (%p506) target = $region96
        $region95: #{history_qim_forward.1} parent=63 // pred_region
          %509 = dma.done [#allocation16], 256
        $region96: #{history_qim_forward.1} parent=63 // pred_fallthru
          _
        // Predicated region
        $region97: #{history_qim_forward.1} parent=63 // pred_check
          %p510 = pneg %p229
        $region98: #{history_qim_forward.1} parent=63 // pred_check_branch
          %512 = sbr.rel (%p510) target = $region100
        $region99: #{history_qim_forward.1} parent=63 // pred_region
          %513 = dma.done [#allocation16], 16
        $region100: #{history_qim_forward.1} parent=63 // pred_fallthru
          _
        // Predicated region
        $region101: #{history_qim_forward.1} parent=63 // pred_check
          %p514 = pneg %p250
        $region102: #{history_qim_forward.1} parent=63 // pred_check_branch
          %516 = sbr.rel (%p514) target = $region104
        $region103: #{history_qim_forward.1} parent=63 // pred_region
          %517 = dma.done [#allocation19], 16
        $region104: #{history_qim_forward.1} parent=63 // pred_fallthru
          _
        // Predicated region
        $region105: #{history_qim_forward.1} parent=63 // pred_check
          %p518 = pneg %p271
        $region106: #{history_qim_forward.1} parent=63 // pred_check_branch
          %520 = sbr.rel (%p518) target = $region108
        $region107: #{history_qim_forward.1} parent=63 // pred_region
          %521 = dma.done [#allocation19], 16
        $region108: #{history_qim_forward.1} parent=63 // pred_fallthru
          _
        %s522 = sand.u32 %s43, 1
        %s523 = scalar_lea.sflag [#allocation4], %s522
        %s524 = sand.u32 %s43, 1
        %s525 = smul.addr %s524, 8
        %s526 = scalar_lea.vmem [#allocation3], %s525
        %p527 = pneg %p56
        %p528 = pneg %p53
        %s529 = sand.u32 %s35, 1
        %s530 = scalar_lea.sflag [#allocation7], %s529
        %s531 = sand.u32 %s69, 1
        %s532 = smul.addr %s531, 8
        %s533 = scalar_lea.vmem [#allocation6], %s532
        %p534 = pneg %p82
        %p535 = pneg %p79
        %p536 = pneg %p103
        %p537 = pneg %p100
        %p538 = pneg %p124
        %p539 = pneg %p121
        %p540 = pneg %p145
        %p541 = pneg %p142
        %p542 = pneg %p166
        %p543 = pneg %p163
        %p544 = pneg %p187
        %p545 = pneg %p184
        %p546 = pneg %p208
        %p547 = pneg %p205
        %p548 = pneg %p229
        %p549 = pneg %p226
        %p550 = pneg %p250
        %p551 = pneg %p247
        %p552 = pneg %p271
        %p553 = pneg %p268
        %p554 = pneg %p297
        %p555 = pneg %p294
        %s556 = sand.u32 %s284, 1
        %s557 = scalar_lea.sflag [#allocation5], %s556
        %s558 = sand.u32 %s284, 1
        %s559 = smul.addr %s558, 8
        %s560 = scalar_lea.vmem [#allocation21], %s559
        %v562 = vld [vmem:[%s472] sm:$0xff]
        %v563 = vld [vmem:[%s481] sm:$0xff]
        %v564 = vld [vmem:[#allocation8] sm:$0xff]
        %v565 = vpack.c.bf16 %v562, %v562
        %v566 = vadd.f32 %v562, %v563
        %v567 = vpack.c.bf16 %v566, %v566
        %v568 = vld [vmem:[#allocation9] sm:$0xf]
        %v569 = vld [vmem:[#allocation9 + $0x4] sm:$0xf]
        %v570 = vld [vmem:[#allocation9 + $0x8] sm:$0xf]
        %v571 = vld [vmem:[#allocation9 + $0xc] sm:$0xf]
        %v572 = vld [vmem:[#allocation11] sm:$0x1]
        %v574 = vlaneseq
        %v575 = vshrl.u32 %v574, 7
        %v576 = vsub.s32 0, %v575
        %v577 = vrot.slane %v572, %v576
        %v583 = vunpack.c.l.b16 %v568
        %v584 = vunpack.c.l.b16 %v569
        %v585 = vunpack.c.l.b16 %v570
        %v586 = vunpack.c.l.b16 %v571
        %v587 = vpack.c.b16 %v584, %v583
        %v588 = vpack.c.b16 %v586, %v585
        %vm591 = vcmask 261120
        %v593 = vsel %vm591, %v567, 0
        %595 = vmatprep.subr.bf16.mxu0 0
        %596 = vmatpush1.bf16.msra.mxu0 %v587
        %597 = vmatprep.subr.bf16.mxu0 0
        %598 = vmatpush1.bf16.msra.mxu0 %v588
        %599 = vmatprep.subr.bf16.mxu0 0
        %600 = vmatpush1.bf16.msra.mxu0 0
        %601 = vmatprep.subr.bf16.mxu0 0
        %602 = vmatpush1.bf16.msra.mxu0 0
        %603 = vmatprep.subr.bf16.mxu0 0
        %604 = vmatpush1.bf16.msra.mxu0 0
        %605 = vmatprep.subr.bf16.mxu0 0
        %606 = vmatpush1.bf16.msra.mxu0 0
        %607 = vmatprep.subr.bf16.mxu0 0
        %608 = vmatpush1.bf16.msra.mxu0 0
        %609 = vmatprep.subr.bf16.mxu0 0
        %610 = vmatpush1.bf16.msra.mxu0 0
        %611 = vmatprep.subr.bf16.mxu0 0
        %612 = vmatpush1.bf16.msra.mxu0 0
        %613 = vmatprep.subr.bf16.mxu0 0
        %614 = vmatpush1.bf16.msra.mxu0 0
        %615 = vmatprep.subr.bf16.mxu0 0
        %616 = vmatpush1.bf16.msra.mxu0 0
        %617 = vmatprep.subr.bf16.mxu0 0
        %618 = vmatpush1.bf16.msra.mxu0 0
        %619 = vmatprep.subr.bf16.mxu0 0
        %620 = vmatpush1.bf16.msra.mxu0 0
        %621 = vmatprep.subr.bf16.mxu0 0
        %622 = vmatpush1.bf16.msra.mxu0 0
        %623 = vmatprep.subr.bf16.mxu0 0
        %624 = vmatpush1.bf16.msra.mxu0 0
        %625 = vmatprep.subr.bf16.mxu0 0
        %626 = vmatpush1.bf16.msra.mxu0 0
        %627 = vmatprep.mubr.bf16.mxu0 0
        %628 = vmatmul.mubr.bf16.gmra.mrb[0].mxu0 %v593
        %v629 = vpop.f32.mrb[0].mxu0
        %v630 = vadd.f32 %v577, %v629
        %v631 = vpop.f32.mrb[0].mxu0
        %v632 = vpop.f32.mrb[0].mxu0
        %v633 = vpop.f32.mrb[0].mxu0
        %634 = vdwg.mxu0
        %v635 = vpack.c.bf16 %v630, %v630
        %s636 = scalar_lea.vmem [#allocation9], 16
        %v637 = vld [vmem:[%s636] sm:$0xf]
        %v638 = vld [vmem:[%s636 + $0x4] sm:$0xf]
        %v639 = vld [vmem:[%s636 + $0x8] sm:$0xf]
        %v640 = vld [vmem:[%s636 + $0xc] sm:$0xf]
        %s641 = scalar_lea.vmem [#allocation11], 1
        %v642 = vld [vmem:[%s641] sm:$0x1]
        %v644 = vlaneseq
        %v645 = vshrl.u32 %v644, 7
        %v646 = vsub.s32 0, %v645
        %v647 = vrot.slane %v642, %v646
        %v653 = vunpack.c.l.b16 %v637
        %v654 = vunpack.c.l.b16 %v638
        %v655 = vunpack.c.l.b16 %v639
        %v656 = vunpack.c.l.b16 %v640
        %v657 = vpack.c.b16 %v654, %v653
        %v658 = vpack.c.b16 %v656, %v655
        %661 = vmatprep.subr.bf16.mxu0 0
        %662 = vmatpush1.bf16.msra.mxu0 %v657
        %663 = vmatprep.subr.bf16.mxu0 0
        %664 = vmatpush1.bf16.msra.mxu0 %v658
        %665 = vmatprep.subr.bf16.mxu0 0
        %666 = vmatpush1.bf16.msra.mxu0 0
        %667 = vmatprep.subr.bf16.mxu0 0
        %668 = vmatpush1.bf16.msra.mxu0 0
        %669 = vmatprep.subr.bf16.mxu0 0
        %670 = vmatpush1.bf16.msra.mxu0 0
        %671 = vmatprep.subr.bf16.mxu0 0
        %672 = vmatpush1.bf16.msra.mxu0 0
        %673 = vmatprep.subr.bf16.mxu0 0
        %674 = vmatpush1.bf16.msra.mxu0 0
        %675 = vmatprep.subr.bf16.mxu0 0
        %676 = vmatpush1.bf16.msra.mxu0 0
        %677 = vmatprep.subr.bf16.mxu0 0
        %678 = vmatpush1.bf16.msra.mxu0 0
        %679 = vmatprep.subr.bf16.mxu0 0
        %680 = vmatpush1.bf16.msra.mxu0 0
        %681 = vmatprep.subr.bf16.mxu0 0
        %682 = vmatpush1.bf16.msra.mxu0 0
        %683 = vmatprep.subr.bf16.mxu0 0
        %684 = vmatpush1.bf16.msra.mxu0 0
        %685 = vmatprep.subr.bf16.mxu0 0
        %686 = vmatpush1.bf16.msra.mxu0 0
        %687 = vmatprep.subr.bf16.mxu0 0
        %688 = vmatpush1.bf16.msra.mxu0 0
        %689 = vmatprep.subr.bf16.mxu0 0
        %690 = vmatpush1.bf16.msra.mxu0 0
        %691 = vmatprep.subr.bf16.mxu0 0
        %692 = vmatpush1.bf16.msra.mxu0 0
        %693 = vmatprep.mubr.bf16.mxu0 0
        %694 = vmatmul.mubr.bf16.gmra.mrb[0].mxu0 %v593
        %v695 = vpop.f32.mrb[0].mxu0
        %v696 = vadd.f32 %v647, %v695
        %v697 = vpop.f32.mrb[0].mxu0
        %v698 = vpop.f32.mrb[0].mxu0
        %v699 = vpop.f32.mrb[0].mxu0
        %700 = vdwg.mxu0
        %v701 = vpack.c.bf16 %v696, %v696
        %s702 = scalar_lea.vmem [#allocation9], 32
        %v703 = vld [vmem:[%s702] sm:$0xf]
        %v704 = vld [vmem:[%s702 + $0x4] sm:$0xf]
        %v705 = vld [vmem:[%s702 + $0x8] sm:$0xf]
        %v706 = vld [vmem:[%s702 + $0xc] sm:$0xf]
        %s707 = scalar_lea.vmem [#allocation11], 2
        %v708 = vld [vmem:[%s707] sm:$0x1]
        %v710 = vlaneseq
        %v711 = vshrl.u32 %v710, 7
        %v712 = vsub.s32 0, %v711
        %v713 = vrot.slane %v708, %v712
        %v719 = vunpack.c.l.b16 %v703
        %v720 = vunpack.c.l.b16 %v704
        %v721 = vunpack.c.l.b16 %v705
        %v722 = vunpack.c.l.b16 %v706
        %v723 = vpack.c.b16 %v720, %v719
        %v724 = vpack.c.b16 %v722, %v721
        %v728 = vsel %vm591, %v565, 0
        %730 = vmatprep.subr.bf16.mxu0 0
        %731 = vmatpush1.bf16.msra.mxu0 %v723
        %732 = vmatprep.subr.bf16.mxu0 0
        %733 = vmatpush1.bf16.msra.mxu0 %v724
        %734 = vmatprep.subr.bf16.mxu0 0
        %735 = vmatpush1.bf16.msra.mxu0 0
        %736 = vmatprep.subr.bf16.mxu0 0
        %737 = vmatpush1.bf16.msra.mxu0 0
        %738 = vmatprep.subr.bf16.mxu0 0
        %739 = vmatpush1.bf16.msra.mxu0 0
        %740 = vmatprep.subr.bf16.mxu0 0
        %741 = vmatpush1.bf16.msra.mxu0 0
        %742 = vmatprep.subr.bf16.mxu0 0
        %743 = vmatpush1.bf16.msra.mxu0 0
        %744 = vmatprep.subr.bf16.mxu0 0
        %745 = vmatpush1.bf16.msra.mxu0 0
        %746 = vmatprep.subr.bf16.mxu0 0
        %747 = vmatpush1.bf16.msra.mxu0 0
        %748 = vmatprep.subr.bf16.mxu0 0
        %749 = vmatpush1.bf16.msra.mxu0 0
        %750 = vmatprep.subr.bf16.mxu0 0
        %751 = vmatpush1.bf16.msra.mxu0 0
        %752 = vmatprep.subr.bf16.mxu0 0
        %753 = vmatpush1.bf16.msra.mxu0 0
        %754 = vmatprep.subr.bf16.mxu0 0
        %755 = vmatpush1.bf16.msra.mxu0 0
        %756 = vmatprep.subr.bf16.mxu0 0
        %757 = vmatpush1.bf16.msra.mxu0 0
        %758 = vmatprep.subr.bf16.mxu0 0
        %759 = vmatpush1.bf16.msra.mxu0 0
        %760 = vmatprep.subr.bf16.mxu0 0
        %761 = vmatpush1.bf16.msra.mxu0 0
        %762 = vmatprep.mubr.bf16.mxu0 0
        %763 = vmatmul.mubr.bf16.gmra.mrb[0].mxu0 %v728
        %v764 = vpop.f32.mrb[0].mxu0
        %v765 = vadd.f32 %v713, %v764
        %v766 = vpop.f32.mrb[0].mxu0
        %v767 = vpop.f32.mrb[0].mxu0
        %v768 = vpop.f32.mrb[0].mxu0
        %769 = vdwg.mxu0
        %v770 = vpack.c.bf16 %v765, %v765
        %vm771 = vcmask 64512
        %v773 = vsel %vm771, %v635, 0
        %v776 = vsel %vm771, %v701, 0
        %778 = vmatprep.subr.bf16.mxu0 0
        %779 = vmatpush1.bf16.xpose.msra.mxu0 %v776
        %780 = vmatprep.subr.bf16.mxu0 0
        %781 = vmatpush1.bf16.xpose.msra.mxu0 0
        %782 = vmatprep.subr.bf16.mxu0 0
        %783 = vmatpush1.bf16.xpose.msra.mxu0 0
        %784 = vmatprep.subr.bf16.mxu0 0
        %785 = vmatpush1.bf16.xpose.msra.mxu0 0
        %786 = vmatprep.subr.bf16.mxu0 0
        %787 = vmatpush1.bf16.xpose.msra.mxu0 0
        %788 = vmatprep.subr.bf16.mxu0 0
        %789 = vmatpush1.bf16.xpose.msra.mxu0 0
        %790 = vmatprep.subr.bf16.mxu0 0
        %791 = vmatpush1.bf16.xpose.msra.mxu0 0
        %792 = vmatprep.subr.bf16.mxu0 0
        %793 = vmatpush1.bf16.xpose.msra.mxu0 0
        %794 = vmatprep.subr.bf16.mxu0 0
        %795 = vmatpush1.bf16.xpose.msra.mxu0 0
        %796 = vmatprep.subr.bf16.mxu0 0
        %797 = vmatpush1.bf16.xpose.msra.mxu0 0
        %798 = vmatprep.subr.bf16.mxu0 0
        %799 = vmatpush1.bf16.xpose.msra.mxu0 0
        %800 = vmatprep.subr.bf16.mxu0 0
        %801 = vmatpush1.bf16.xpose.msra.mxu0 0
        %802 = vmatprep.subr.bf16.mxu0 0
        %803 = vmatpush1.bf16.xpose.msra.mxu0 0
        %804 = vmatprep.subr.bf16.mxu0 0
        %805 = vmatpush1.bf16.xpose.msra.mxu0 0
        %806 = vmatprep.subr.bf16.mxu0 0
        %807 = vmatpush1.bf16.xpose.msra.mxu0 0
        %808 = vmatprep.subr.bf16.mxu0 0
        %809 = vmatpush1.bf16.xpose.msra.mxu0 0
        %810 = vmatprep.mubr.bf16.mxu0 0
        %811 = vmatmul.mubr.bf16.gmra.mrb[0].mxu0 %v773
        %v812 = vpop.f32.mrb[0].mxu0
        %v813 = vadd.f32 %v564, %v812
        %v814 = vpop.f32.mrb[0].mxu0
        %v815 = vpop.f32.mrb[0].mxu0
        %v816 = vpop.f32.mrb[0].mxu0
        %817 = vdwg.mxu0
        %v818 = vsel %vm771, %v813, -inf
        %819 = vmax.xlane.f32.xlu0 %v818
        %v820 = vpop.xlane.xlu0 %819
        %v821 = vsub.f32 %v813, %v820
        %v822 = vmul.f32 %v821, 1.442695
        %v823 = vpow.pop %v822
        %v824 = vsel %vm771, %v823, 0.0
        %825 = vadd.xlane.f32.xlu0 %v824
        %v826 = vpop.xlane.xlu0 %825
        %v827 = vrcp.pop %v826
        %v828 = vmul.f32 %v823, %v827
        %v829 = vpack.c.bf16 %v828, %v828
        %v831 = vsel %vm771, %v829, 0
        %vm833 = vcmask 1043456
        %v835 = vsel %vm833, %v770, 0
        %837 = vmatprep.subr.bf16.mxu0 0
        %838 = vmatpush1.bf16.msra.mxu0 %v835
        %839 = vmatprep.subr.bf16.mxu0 0
        %840 = vmatpush1.bf16.msra.mxu0 0
        %841 = vmatprep.subr.bf16.mxu0 0
        %842 = vmatpush1.bf16.msra.mxu0 0
        %843 = vmatprep.subr.bf16.mxu0 0
        %844 = vmatpush1.bf16.msra.mxu0 0
        %845 = vmatprep.subr.bf16.mxu0 0
        %846 = vmatpush1.bf16.msra.mxu0 0
        %847 = vmatprep.subr.bf16.mxu0 0
        %848 = vmatpush1.bf16.msra.mxu0 0
        %849 = vmatprep.subr.bf16.mxu0 0
        %850 = vmatpush1.bf16.msra.mxu0 0
        %851 = vmatprep.subr.bf16.mxu0 0
        %852 = vmatpush1.bf16.msra.mxu0 0
        %853 = vmatprep.subr.bf16.mxu0 0
        %854 = vmatpush1.bf16.msra.mxu0 0
        %855 = vmatprep.subr.bf16.mxu0 0
        %856 = vmatpush1.bf16.msra.mxu0 0
        %857 = vmatprep.subr.bf16.mxu0 0
        %858 = vmatpush1.bf16.msra.mxu0 0
        %859 = vmatprep.subr.bf16.mxu0 0
        %860 = vmatpush1.bf16.msra.mxu0 0
        %861 = vmatprep.subr.bf16.mxu0 0
        %862 = vmatpush1.bf16.msra.mxu0 0
        %863 = vmatprep.subr.bf16.mxu0 0
        %864 = vmatpush1.bf16.msra.mxu0 0
        %865 = vmatprep.subr.bf16.mxu0 0
        %866 = vmatpush1.bf16.msra.mxu0 0
        %867 = vmatprep.subr.bf16.mxu0 0
        %868 = vmatpush1.bf16.msra.mxu0 0
        %869 = vmatprep.mubr.bf16.mxu0 0
        %870 = vmatmul.mubr.bf16.gmra.mrb[0].mxu0 %v831
        %v871 = vpop.f32.mrb[0].mxu0
        %v872 = vadd.f32 0.0, %v871
        %v873 = vpop.f32.mrb[0].mxu0
        %v874 = vpop.f32.mrb[0].mxu0
        %v875 = vpop.f32.mrb[0].mxu0
        %876 = vdwg.mxu0
        %v877 = vpack.c.bf16 %v872, %v872
        %vm878 = vcmask 60416
        %879 = vst.msk [vmem:[#allocation2] sm:$0xf] %vm878, %v877
        %881 = vrot.lane.b32.xlu0 %v635, 120
        %v882 = vpop.permute.xlu0 %881
        %884 = vrot.lane.b32.xlu0 %v701, 120
        %v885 = vpop.permute.xlu0 %884
        %v887 = vsel %vm771, %v882, 0
        %v890 = vsel %vm771, %v885, 0
        %892 = vmatprep.subr.bf16.mxu0 0
        %893 = vmatpush1.bf16.xpose.msra.mxu0 %v890
        %894 = vmatprep.subr.bf16.mxu0 0
        %895 = vmatpush1.bf16.xpose.msra.mxu0 0
        %896 = vmatprep.subr.bf16.mxu0 0
        %897 = vmatpush1.bf16.xpose.msra.mxu0 0
        %898 = vmatprep.subr.bf16.mxu0 0
        %899 = vmatpush1.bf16.xpose.msra.mxu0 0
        %900 = vmatprep.subr.bf16.mxu0 0
        %901 = vmatpush1.bf16.xpose.msra.mxu0 0
        %902 = vmatprep.subr.bf16.mxu0 0
        %903 = vmatpush1.bf16.xpose.msra.mxu0 0
        %904 = vmatprep.subr.bf16.mxu0 0
        %905 = vmatpush1.bf16.xpose.msra.mxu0 0
        %906 = vmatprep.subr.bf16.mxu0 0
        %907 = vmatpush1.bf16.xpose.msra.mxu0 0
        %908 = vmatprep.subr.bf16.mxu0 0
        %909 = vmatpush1.bf16.xpose.msra.mxu0 0
        %910 = vmatprep.subr.bf16.mxu0 0
        %911 = vmatpush1.bf16.xpose.msra.mxu0 0
        %912 = vmatprep.subr.bf16.mxu0 0
        %913 = vmatpush1.bf16.xpose.msra.mxu0 0
        %914 = vmatprep.subr.bf16.mxu0 0
        %915 = vmatpush1.bf16.xpose.msra.mxu0 0
        %916 = vmatprep.subr.bf16.mxu0 0
        %917 = vmatpush1.bf16.xpose.msra.mxu0 0
        %918 = vmatprep.subr.bf16.mxu0 0
        %919 = vmatpush1.bf16.xpose.msra.mxu0 0
        %920 = vmatprep.subr.bf16.mxu0 0
        %921 = vmatpush1.bf16.xpose.msra.mxu0 0
        %922 = vmatprep.subr.bf16.mxu0 0
        %923 = vmatpush1.bf16.xpose.msra.mxu0 0
        %924 = vmatprep.mubr.bf16.mxu0 0
        %925 = vmatmul.mubr.bf16.gmra.mrb[0].mxu0 %v887
        %v926 = vpop.f32.mrb[0].mxu0
        %v927 = vadd.f32 %v564, %v926
        %v928 = vpop.f32.mrb[0].mxu0
        %v929 = vpop.f32.mrb[0].mxu0
        %v930 = vpop.f32.mrb[0].mxu0
        %931 = vdwg.mxu0
        %v932 = vsel %vm771, %v927, -inf
        %933 = vmax.xlane.f32.xlu0 %v932
        %v934 = vpop.xlane.xlu0 %933
        %v935 = vsub.f32 %v927, %v934
        %v936 = vmul.f32 %v935, 1.442695
        %v937 = vpow.pop %v936
        %v938 = vsel %vm771, %v937, 0.0
        %939 = vadd.xlane.f32.xlu0 %v938
        %v940 = vpop.xlane.xlu0 %939
        %v941 = vrcp.pop %v940
        %v942 = vmul.f32 %v937, %v941
        %v943 = vpack.c.bf16 %v942, %v942
        %945 = vrot.lane.b32.xlu0 %v770, 120
        %v946 = vpop.permute.xlu0 %945
        %v948 = vsel %vm771, %v943, 0
        %v951 = vsel %vm833, %v946, 0
        %953 = vmatprep.subr.bf16.mxu0 0
        %954 = vmatpush1.bf16.msra.mxu0 %v951
        %955 = vmatprep.subr.bf16.mxu0 0
        %956 = vmatpush1.bf16.msra.mxu0 0
        %957 = vmatprep.subr.bf16.mxu0 0
        %958 = vmatpush1.bf16.msra.mxu0 0
        %959 = vmatprep.subr.bf16.mxu0 0
        %960 = vmatpush1.bf16.msra.mxu0 0
        %961 = vmatprep.subr.bf16.mxu0 0
        %962 = vmatpush1.bf16.msra.mxu0 0
        %963 = vmatprep.subr.bf16.mxu0 0
        %964 = vmatpush1.bf16.msra.mxu0 0
        %965 = vmatprep.subr.bf16.mxu0 0
        %966 = vmatpush1.bf16.msra.mxu0 0
        %967 = vmatprep.subr.bf16.mxu0 0
        %968 = vmatpush1.bf16.msra.mxu0 0
        %969 = vmatprep.subr.bf16.mxu0 0
        %970 = vmatpush1.bf16.msra.mxu0 0
        %971 = vmatprep.subr.bf16.mxu0 0
        %972 = vmatpush1.bf16.msra.mxu0 0
        %973 = vmatprep.subr.bf16.mxu0 0
        %974 = vmatpush1.bf16.msra.mxu0 0
        %975 = vmatprep.subr.bf16.mxu0 0
        %976 = vmatpush1.bf16.msra.mxu0 0
        %977 = vmatprep.subr.bf16.mxu0 0
        %978 = vmatpush1.bf16.msra.mxu0 0
        %979 = vmatprep.subr.bf16.mxu0 0
        %980 = vmatpush1.bf16.msra.mxu0 0
        %981 = vmatprep.subr.bf16.mxu0 0
        %982 = vmatpush1.bf16.msra.mxu0 0
        %983 = vmatprep.subr.bf16.mxu0 0
        %984 = vmatpush1.bf16.msra.mxu0 0
        %985 = vmatprep.mubr.bf16.mxu0 0
        %986 = vmatmul.mubr.bf16.gmra.mrb[0].mxu0 %v948
        %v987 = vpop.f32.mrb[0].mxu0
        %v988 = vadd.f32 0.0, %v987
        %v989 = vpop.f32.mrb[0].mxu0
        %v990 = vpop.f32.mrb[0].mxu0
        %v991 = vpop.f32.mrb[0].mxu0
        %992 = vdwg.mxu0
        %v993 = vpack.c.bf16 %v988, %v988
        %v995 = vunpack.c.l.b16 %v993
        %v996 = vpack.c.b16 %v995, %v995
        %997 = vrot.lane.b32.xlu0 %v996, 8
        %v998 = vpop.permute.xlu0 %997
        %vm1000 = vcmask 126016
        %1001 = vst.msk [vmem:[#allocation2] sm:$0xf] %vm1000, %v998
        %1002 = vrot.lane.b32.xlu0 %v635, 112
        %v1003 = vpop.permute.xlu0 %1002
        %1004 = vrot.lane.b32.xlu0 %v701, 112
        %v1005 = vpop.permute.xlu0 %1004
        %v1007 = vsel %vm771, %v1003, 0
        %v1010 = vsel %vm771, %v1005, 0
        %1012 = vmatprep.subr.bf16.mxu0 0
        %1013 = vmatpush1.bf16.xpose.msra.mxu0 %v1010
        %1014 = vmatprep.subr.bf16.mxu0 0
        %1015 = vmatpush1.bf16.xpose.msra.mxu0 0
        %1016 = vmatprep.subr.bf16.mxu0 0
        %1017 = vmatpush1.bf16.xpose.msra.mxu0 0
        %1018 = vmatprep.subr.bf16.mxu0 0
        %1019 = vmatpush1.bf16.xpose.msra.mxu0 0
        %1020 = vmatprep.subr.bf16.mxu0 0
        %1021 = vmatpush1.bf16.xpose.msra.mxu0 0
        %1022 = vmatprep.subr.bf16.mxu0 0
        %1023 = vmatpush1.bf16.xpose.msra.mxu0 0
        %1024 = vmatprep.subr.bf16.mxu0 0
        %1025 = vmatpush1.bf16.xpose.msra.mxu0 0
        %1026 = vmatprep.subr.bf16.mxu0 0
        %1027 = vmatpush1.bf16.xpose.msra.mxu0 0
        %1028 = vmatprep.subr.bf16.mxu0 0
        %1029 = vmatpush1.bf16.xpose.msra.mxu0 0
        %1030 = vmatprep.subr.bf16.mxu0 0
        %1031 = vmatpush1.bf16.xpose.msra.mxu0 0
        %1032 = vmatprep.subr.bf16.mxu0 0
        %1033 = vmatpush1.bf16.xpose.msra.mxu0 0
        %1034 = vmatprep.subr.bf16.mxu0 0
        %1035 = vmatpush1.bf16.xpose.msra.mxu0 0
        %1036 = vmatprep.subr.bf16.mxu0 0
        %1037 = vmatpush1.bf16.xpose.msra.mxu0 0
        %1038 = vmatprep.subr.bf16.mxu0 0
        %1039 = vmatpush1.bf16.xpose.msra.mxu0 0
        %1040 = vmatprep.subr.bf16.mxu0 0
        %1041 = vmatpush1.bf16.xpose.msra.mxu0 0
        %1042 = vmatprep.subr.bf16.mxu0 0
        %1043 = vmatpush1.bf16.xpose.msra.mxu0 0
        %1044 = vmatprep.mubr.bf16.mxu0 0
        %1045 = vmatmul.mubr.bf16.gmra.mrb[0].mxu0 %v1007
        %v1046 = vpop.f32.mrb[0].mxu0
        %v1047 = vadd.f32 %v564, %v1046
        %v1048 = vpop.f32.mrb[0].mxu0
        %v1049 = vpop.f32.mrb[0].mxu0
        %v1050 = vpop.f32.mrb[0].mxu0
        %1051 = vdwg.mxu0
        %v1052 = vsel %vm771, %v1047, -inf
        %1053 = vmax.xlane.f32.xlu0 %v1052
        %v1054 = vpop.xlane.xlu0 %1053
        %v1055 = vsub.f32 %v1047, %v1054
        %v1056 = vmul.f32 %v1055, 1.442695
        %v1057 = vpow.pop %v1056
        %v1058 = vsel %vm771, %v1057, 0.0
        %1059 = vadd.xlane.f32.xlu0 %v1058
        %v1060 = vpop.xlane.xlu0 %1059
        %v1061 = vrcp.pop %v1060
        %v1062 = vmul.f32 %v1057, %v1061
        %v1063 = vpack.c.bf16 %v1062, %v1062
        %1064 = vrot.lane.b32.xlu0 %v770, 112
        %v1065 = vpop.permute.xlu0 %1064
        %v1067 = vsel %vm771, %v1063, 0
        %v1070 = vsel %vm833, %v1065, 0
        %1072 = vmatprep.subr.bf16.mxu0 0
        %1073 = vmatpush1.bf16.msra.mxu0 %v1070
        %1074 = vmatprep.subr.bf16.mxu0 0
        %1075 = vmatpush1.bf16.msra.mxu0 0
        %1076 = vmatprep.subr.bf16.mxu0 0
        %1077 = vmatpush1.bf16.msra.mxu0 0
        %1078 = vmatprep.subr.bf16.mxu0 0
        %1079 = vmatpush1.bf16.msra.mxu0 0
        %1080 = vmatprep.subr.bf16.mxu0 0
        %1081 = vmatpush1.bf16.msra.mxu0 0
        %1082 = vmatprep.subr.bf16.mxu0 0
        %1083 = vmatpush1.bf16.msra.mxu0 0
        %1084 = vmatprep.subr.bf16.mxu0 0
        %1085 = vmatpush1.bf16.msra.mxu0 0
        %1086 = vmatprep.subr.bf16.mxu0 0
        %1087 = vmatpush1.bf16.msra.mxu0 0
        %1088 = vmatprep.subr.bf16.mxu0 0
        %1089 = vmatpush1.bf16.msra.mxu0 0
        %1090 = vmatprep.subr.bf16.mxu0 0
        %1091 = vmatpush1.bf16.msra.mxu0 0
        %1092 = vmatprep.subr.bf16.mxu0 0
        %1093 = vmatpush1.bf16.msra.mxu0 0
        %1094 = vmatprep.subr.bf16.mxu0 0
        %1095 = vmatpush1.bf16.msra.mxu0 0
        %1096 = vmatprep.subr.bf16.mxu0 0
        %1097 = vmatpush1.bf16.msra.mxu0 0
        %1098 = vmatprep.subr.bf16.mxu0 0
        %1099 = vmatpush1.bf16.msra.mxu0 0
        %1100 = vmatprep.subr.bf16.mxu0 0
        %1101 = vmatpush1.bf16.msra.mxu0 0
        %1102 = vmatprep.subr.bf16.mxu0 0
        %1103 = vmatpush1.bf16.msra.mxu0 0
        %1104 = vmatprep.mubr.bf16.mxu0 0
        %1105 = vmatmul.mubr.bf16.gmra.mrb[0].mxu0 %v1067
        %v1106 = vpop.f32.mrb[0].mxu0
        %v1107 = vadd.f32 0.0, %v1106
        %v1108 = vpop.f32.mrb[0].mxu0
        %v1109 = vpop.f32.mrb[0].mxu0
        %v1110 = vpop.f32.mrb[0].mxu0
        %1111 = vdwg.mxu0
        %v1112 = vpack.c.bf16 %v1107, %v1107
        %v1114 = vunpack.c.l.b16 %v1112
        %v1115 = vpack.c.b16 %v1114, %v1114
        %1116 = vrot.lane.b32.xlu0 %v1115, 16
        %v1117 = vpop.permute.xlu0 %1116
        %vm1119 = vcmask 191616
        %1120 = vst.msk [vmem:[#allocation2] sm:$0xf] %vm1119, %v1117
        %1121 = vrot.lane.b32.xlu0 %v635, 104
        %v1122 = vpop.permute.xlu0 %1121
        %1123 = vrot.lane.b32.xlu0 %v701, 104
        %v1124 = vpop.permute.xlu0 %1123
        %v1126 = vsel %vm771, %v1122, 0
        %v1129 = vsel %vm771, %v1124, 0
        %1131 = vmatprep.subr.bf16.mxu0 0
        %1132 = vmatpush1.bf16.xpose.msra.mxu0 %v1129
        %1133 = vmatprep.subr.bf16.mxu0 0
        %1134 = vmatpush1.bf16.xpose.msra.mxu0 0
        %1135 = vmatprep.subr.bf16.mxu0 0
        %1136 = vmatpush1.bf16.xpose.msra.mxu0 0
        %1137 = vmatprep.subr.bf16.mxu0 0
        %1138 = vmatpush1.bf16.xpose.msra.mxu0 0
        %1139 = vmatprep.subr.bf16.mxu0 0
        %1140 = vmatpush1.bf16.xpose.msra.mxu0 0
        %1141 = vmatprep.subr.bf16.mxu0 0
        %1142 = vmatpush1.bf16.xpose.msra.mxu0 0
        %1143 = vmatprep.subr.bf16.mxu0 0
        %1144 = vmatpush1.bf16.xpose.msra.mxu0 0
        %1145 = vmatprep.subr.bf16.mxu0 0
        %1146 = vmatpush1.bf16.xpose.msra.mxu0 0
        %1147 = vmatprep.subr.bf16.mxu0 0
        %1148 = vmatpush1.bf16.xpose.msra.mxu0 0
        %1149 = vmatprep.subr.bf16.mxu0 0
        %1150 = vmatpush1.bf16.xpose.msra.mxu0 0
        %1151 = vmatprep.subr.bf16.mxu0 0
        %1152 = vmatpush1.bf16.xpose.msra.mxu0 0
        %1153 = vmatprep.subr.bf16.mxu0 0
        %1154 = vmatpush1.bf16.xpose.msra.mxu0 0
        %1155 = vmatprep.subr.bf16.mxu0 0
        %1156 = vmatpush1.bf16.xpose.msra.mxu0 0
        %1157 = vmatprep.subr.bf16.mxu0 0
        %1158 = vmatpush1.bf16.xpose.msra.mxu0 0
        %1159 = vmatprep.subr.bf16.mxu0 0
        %1160 = vmatpush1.bf16.xpose.msra.mxu0 0
        %1161 = vmatprep.subr.bf16.mxu0 0
        %1162 = vmatpush1.bf16.xpose.msra.mxu0 0
        %1163 = vmatprep.mubr.bf16.mxu0 0
        %1164 = vmatmul.mubr.bf16.gmra.mrb[0].mxu0 %v1126
        %v1165 = vpop.f32.mrb[0].mxu0
        %v1166 = vadd.f32 %v564, %v1165
        %v1167 = vpop.f32.mrb[0].mxu0
        %v1168 = vpop.f32.mrb[0].mxu0
        %v1169 = vpop.f32.mrb[0].mxu0
        %1170 = vdwg.mxu0
        %v1171 = vsel %vm771, %v1166, -inf
        %1172 = vmax.xlane.f32.xlu0 %v1171
        %v1173 = vpop.xlane.xlu0 %1172
        %v1174 = vsub.f32 %v1166, %v1173
        %v1175 = vmul.f32 %v1174, 1.442695
        %v1176 = vpow.pop %v1175
        %v1177 = vsel %vm771, %v1176, 0.0
        %1178 = vadd.xlane.f32.xlu0 %v1177
        %v1179 = vpop.xlane.xlu0 %1178
        %v1180 = vrcp.pop %v1179
        %v1181 = vmul.f32 %v1176, %v1180
        %v1182 = vpack.c.bf16 %v1181, %v1181
        %1183 = vrot.lane.b32.xlu0 %v770, 104
        %v1184 = vpop.permute.xlu0 %1183
        %v1186 = vsel %vm771, %v1182, 0
        %v1189 = vsel %vm833, %v1184, 0
        %1191 = vmatprep.subr.bf16.mxu0 0
        %1192 = vmatpush1.bf16.msra.mxu0 %v1189
        %1193 = vmatprep.subr.bf16.mxu0 0
        %1194 = vmatpush1.bf16.msra.mxu0 0
        %1195 = vmatprep.subr.bf16.mxu0 0
        %1196 = vmatpush1.bf16.msra.mxu0 0
        %1197 = vmatprep.subr.bf16.mxu0 0
        %1198 = vmatpush1.bf16.msra.mxu0 0
        %1199 = vmatprep.subr.bf16.mxu0 0
        %1200 = vmatpush1.bf16.msra.mxu0 0
        %1201 = vmatprep.subr.bf16.mxu0 0
        %1202 = vmatpush1.bf16.msra.mxu0 0
        %1203 = vmatprep.subr.bf16.mxu0 0
        %1204 = vmatpush1.bf16.msra.mxu0 0
        %1205 = vmatprep.subr.bf16.mxu0 0
        %1206 = vmatpush1.bf16.msra.mxu0 0
        %1207 = vmatprep.subr.bf16.mxu0 0
        %1208 = vmatpush1.bf16.msra.mxu0 0
        %1209 = vmatprep.subr.bf16.mxu0 0
        %1210 = vmatpush1.bf16.msra.mxu0 0
        %1211 = vmatprep.subr.bf16.mxu0 0
        %1212 = vmatpush1.bf16.msra.mxu0 0
        %1213 = vmatprep.subr.bf16.mxu0 0
        %1214 = vmatpush1.bf16.msra.mxu0 0
        %1215 = vmatprep.subr.bf16.mxu0 0
        %1216 = vmatpush1.bf16.msra.mxu0 0
        %1217 = vmatprep.subr.bf16.mxu0 0
        %1218 = vmatpush1.bf16.msra.mxu0 0
        %1219 = vmatprep.subr.bf16.mxu0 0
        %1220 = vmatpush1.bf16.msra.mxu0 0
        %1221 = vmatprep.subr.bf16.mxu0 0
        %1222 = vmatpush1.bf16.msra.mxu0 0
        %1223 = vmatprep.mubr.bf16.mxu0 0
        %1224 = vmatmul.mubr.bf16.gmra.mrb[0].mxu0 %v1186
        %v1225 = vpop.f32.mrb[0].mxu0
        %v1226 = vadd.f32 0.0, %v1225
        %v1227 = vpop.f32.mrb[0].mxu0
        %v1228 = vpop.f32.mrb[0].mxu0
        %v1229 = vpop.f32.mrb[0].mxu0
        %1230 = vdwg.mxu0
        %v1231 = vpack.c.bf16 %v1226, %v1226
        %v1233 = vunpack.c.l.b16 %v1231
        %v1234 = vpack.c.b16 %v1233, %v1233
        %1235 = vrot.lane.b32.xlu0 %v1234, 24
        %v1236 = vpop.permute.xlu0 %1235
        %vm1238 = vcmask 257216
        %1239 = vst.msk [vmem:[#allocation2] sm:$0xf] %vm1238, %v1236
        %v1240 = vld [vmem:[#allocation2] sm:$0xf]
        %v1241 = vld [vmem:[#allocation12] sm:$0xf]
        %v1242 = vld [vmem:[#allocation12 + $0x4] sm:$0xf]
        %v1243 = vld [vmem:[#allocation12 + $0x8] sm:$0xf]
        %v1244 = vld [vmem:[#allocation12 + $0xc] sm:$0xf]
        %v1245 = vld [vmem:[#allocation14] sm:$0x1]
        %v1247 = vlaneseq
        %v1248 = vshrl.u32 %v1247, 7
        %v1249 = vsub.s32 0, %v1248
        %v1250 = vrot.slane %v1245, %v1249
        %v1256 = vunpack.c.l.b16 %v1241
        %v1257 = vunpack.c.l.b16 %v1242
        %v1258 = vunpack.c.l.b16 %v1243
        %v1259 = vunpack.c.l.b16 %v1244
        %v1260 = vpack.c.b16 %v1257, %v1256
        %v1261 = vpack.c.b16 %v1259, %v1258
        %v1265 = vsel %vm591, %v1240, 0
        %1267 = vmatprep.subr.bf16.mxu0 0
        %1268 = vmatpush1.bf16.msra.mxu0 %v1260
        %1269 = vmatprep.subr.bf16.mxu0 0
        %1270 = vmatpush1.bf16.msra.mxu0 %v1261
        %1271 = vmatprep.subr.bf16.mxu0 0
        %1272 = vmatpush1.bf16.msra.mxu0 0
        %1273 = vmatprep.subr.bf16.mxu0 0
        %1274 = vmatpush1.bf16.msra.mxu0 0
        %1275 = vmatprep.subr.bf16.mxu0 0
        %1276 = vmatpush1.bf16.msra.mxu0 0
        %1277 = vmatprep.subr.bf16.mxu0 0
        %1278 = vmatpush1.bf16.msra.mxu0 0
        %1279 = vmatprep.subr.bf16.mxu0 0
        %1280 = vmatpush1.bf16.msra.mxu0 0
        %1281 = vmatprep.subr.bf16.mxu0 0
        %1282 = vmatpush1.bf16.msra.mxu0 0
        %1283 = vmatprep.subr.bf16.mxu0 0
        %1284 = vmatpush1.bf16.msra.mxu0 0
        %1285 = vmatprep.subr.bf16.mxu0 0
        %1286 = vmatpush1.bf16.msra.mxu0 0
        %1287 = vmatprep.subr.bf16.mxu0 0
        %1288 = vmatpush1.bf16.msra.mxu0 0
        %1289 = vmatprep.subr.bf16.mxu0 0
        %1290 = vmatpush1.bf16.msra.mxu0 0
        %1291 = vmatprep.subr.bf16.mxu0 0
        %1292 = vmatpush1.bf16.msra.mxu0 0
        %1293 = vmatprep.subr.bf16.mxu0 0
        %1294 = vmatpush1.bf16.msra.mxu0 0
        %1295 = vmatprep.subr.bf16.mxu0 0
        %1296 = vmatpush1.bf16.msra.mxu0 0
        %1297 = vmatprep.subr.bf16.mxu0 0
        %1298 = vmatpush1.bf16.msra.mxu0 0
        %1299 = vmatprep.mubr.bf16.mxu0 0
        %1300 = vmatmul.mubr.bf16.gmra.mrb[0].mxu0 %v1265
        %v1301 = vpop.f32.mrb[0].mxu0
        %v1302 = vadd.f32 %v1250, %v1301
        %v1303 = vpop.f32.mrb[0].mxu0
        %v1304 = vpop.f32.mrb[0].mxu0
        %v1305 = vpop.f32.mrb[0].mxu0
        %1306 = vdwg.mxu0
        %v1307 = vpack.c.bf16 %v1302, %v1302
        %s1308 = scalar_lea.vmem [#allocation9], 48
        %v1309 = vld [vmem:[%s1308] sm:$0xf]
        %v1310 = vld [vmem:[%s1308 + $0x4] sm:$0xf]
        %v1311 = vld [vmem:[%s1308 + $0x8] sm:$0xf]
        %v1312 = vld [vmem:[%s1308 + $0xc] sm:$0xf]
        %s1313 = scalar_lea.vmem [#allocation11], 3
        %v1314 = vld [vmem:[%s1313] sm:$0x1]
        %v1316 = vlaneseq
        %v1317 = vshrl.u32 %v1316, 7
        %v1318 = vsub.s32 0, %v1317
        %v1319 = vrot.slane %v1314, %v1318
        %v1325 = vunpack.c.l.b16 %v1309
        %v1326 = vunpack.c.l.b16 %v1310
        %v1327 = vunpack.c.l.b16 %v1311
        %v1328 = vunpack.c.l.b16 %v1312
        %v1329 = vpack.c.b16 %v1326, %v1325
        %v1330 = vpack.c.b16 %v1328, %v1327
        %v1334 = vsel %vm591, %v1307, 0
        %1336 = vmatprep.subr.bf16.mxu0 0
        %1337 = vmatpush1.bf16.msra.mxu0 %v1329
        %1338 = vmatprep.subr.bf16.mxu0 0
        %1339 = vmatpush1.bf16.msra.mxu0 %v1330
        %1340 = vmatprep.subr.bf16.mxu0 0
        %1341 = vmatpush1.bf16.msra.mxu0 0
        %1342 = vmatprep.subr.bf16.mxu0 0
        %1343 = vmatpush1.bf16.msra.mxu0 0
        %1344 = vmatprep.subr.bf16.mxu0 0
        %1345 = vmatpush1.bf16.msra.mxu0 0
        %1346 = vmatprep.subr.bf16.mxu0 0
        %1347 = vmatpush1.bf16.msra.mxu0 0
        %1348 = vmatprep.subr.bf16.mxu0 0
        %1349 = vmatpush1.bf16.msra.mxu0 0
        %1350 = vmatprep.subr.bf16.mxu0 0
        %1351 = vmatpush1.bf16.msra.mxu0 0
        %1352 = vmatprep.subr.bf16.mxu0 0
        %1353 = vmatpush1.bf16.msra.mxu0 0
        %1354 = vmatprep.subr.bf16.mxu0 0
        %1355 = vmatpush1.bf16.msra.mxu0 0
        %1356 = vmatprep.subr.bf16.mxu0 0
        %1357 = vmatpush1.bf16.msra.mxu0 0
        %1358 = vmatprep.subr.bf16.mxu0 0
        %1359 = vmatpush1.bf16.msra.mxu0 0
        %1360 = vmatprep.subr.bf16.mxu0 0
        %1361 = vmatpush1.bf16.msra.mxu0 0
        %1362 = vmatprep.subr.bf16.mxu0 0
        %1363 = vmatpush1.bf16.msra.mxu0 0
        %1364 = vmatprep.subr.bf16.mxu0 0
        %1365 = vmatpush1.bf16.msra.mxu0 0
        %1366 = vmatprep.subr.bf16.mxu0 0
        %1367 = vmatpush1.bf16.msra.mxu0 0
        %1368 = vmatprep.mubr.bf16.mxu0 0
        %1369 = vmatmul.mubr.bf16.gmra.mrb[0].mxu0 %v1334
        %v1370 = vpop.f32.mrb[0].mxu0
        %v1371 = vadd.f32 %v1319, %v1370
        %v1372 = vpop.f32.mrb[0].mxu0
        %v1373 = vpop.f32.mrb[0].mxu0
        %v1374 = vpop.f32.mrb[0].mxu0
        %1375 = vdwg.mxu0
        %v1376 = vpack.c.bf16 %v1371, %v1371
        %s1377 = scalar_lea.vmem [#allocation9], 64
        %v1378 = vld [vmem:[%s1377] sm:$0xf]
        %v1379 = vld [vmem:[%s1377 + $0x4] sm:$0xf]
        %v1380 = vld [vmem:[%s1377 + $0x8] sm:$0xf]
        %v1381 = vld [vmem:[%s1377 + $0xc] sm:$0xf]
        %s1382 = scalar_lea.vmem [#allocation11], 4
        %v1383 = vld [vmem:[%s1382] sm:$0x1]
        %v1385 = vlaneseq
        %v1386 = vshrl.u32 %v1385, 7
        %v1387 = vsub.s32 0, %v1386
        %v1388 = vrot.slane %v1383, %v1387
        %v1394 = vunpack.c.l.b16 %v1378
        %v1395 = vunpack.c.l.b16 %v1379
        %v1396 = vunpack.c.l.b16 %v1380
        %v1397 = vunpack.c.l.b16 %v1381
        %v1398 = vpack.c.b16 %v1395, %v1394
        %v1399 = vpack.c.b16 %v1397, %v1396
        %1402 = vmatprep.subr.bf16.mxu0 0
        %1403 = vmatpush1.bf16.msra.mxu0 %v1398
        %1404 = vmatprep.subr.bf16.mxu0 0
        %1405 = vmatpush1.bf16.msra.mxu0 %v1399
        %1406 = vmatprep.subr.bf16.mxu0 0
        %1407 = vmatpush1.bf16.msra.mxu0 0
        %1408 = vmatprep.subr.bf16.mxu0 0
        %1409 = vmatpush1.bf16.msra.mxu0 0
        %1410 = vmatprep.subr.bf16.mxu0 0
        %1411 = vmatpush1.bf16.msra.mxu0 0
        %1412 = vmatprep.subr.bf16.mxu0 0
        %1413 = vmatpush1.bf16.msra.mxu0 0
        %1414 = vmatprep.subr.bf16.mxu0 0
        %1415 = vmatpush1.bf16.msra.mxu0 0
        %1416 = vmatprep.subr.bf16.mxu0 0
        %1417 = vmatpush1.bf16.msra.mxu0 0
        %1418 = vmatprep.subr.bf16.mxu0 0
        %1419 = vmatpush1.bf16.msra.mxu0 0
        %1420 = vmatprep.subr.bf16.mxu0 0
        %1421 = vmatpush1.bf16.msra.mxu0 0
        %1422 = vmatprep.subr.bf16.mxu0 0
        %1423 = vmatpush1.bf16.msra.mxu0 0
        %1424 = vmatprep.subr.bf16.mxu0 0
        %1425 = vmatpush1.bf16.msra.mxu0 0
        %1426 = vmatprep.subr.bf16.mxu0 0
        %1427 = vmatpush1.bf16.msra.mxu0 0
        %1428 = vmatprep.subr.bf16.mxu0 0
        %1429 = vmatpush1.bf16.msra.mxu0 0
        %1430 = vmatprep.subr.bf16.mxu0 0
        %1431 = vmatpush1.bf16.msra.mxu0 0
        %1432 = vmatprep.subr.bf16.mxu0 0
        %1433 = vmatpush1.bf16.msra.mxu0 0
        %1434 = vmatprep.mubr.bf16.mxu0 0
        %1435 = vmatmul.mubr.bf16.gmra.mrb[0].mxu0 %v728
        %v1436 = vpop.f32.mrb[0].mxu0
        %v1437 = vadd.f32 %v1388, %v1436
        %v1438 = vpop.f32.mrb[0].mxu0
        %v1439 = vpop.f32.mrb[0].mxu0
        %v1440 = vpop.f32.mrb[0].mxu0
        %1441 = vdwg.mxu0
        %v1442 = vpack.c.bf16 %v1437, %v1437
        %s1443 = scalar_lea.vmem [#allocation9], 80
        %v1444 = vld [vmem:[%s1443] sm:$0xf]
        %v1445 = vld [vmem:[%s1443 + $0x4] sm:$0xf]
        %v1446 = vld [vmem:[%s1443 + $0x8] sm:$0xf]
        %v1447 = vld [vmem:[%s1443 + $0xc] sm:$0xf]
        %s1448 = scalar_lea.vmem [#allocation11], 5
        %v1449 = vld [vmem:[%s1448] sm:$0x1]
        %v1451 = vlaneseq
        %v1452 = vshrl.u32 %v1451, 7
        %v1453 = vsub.s32 0, %v1452
        %v1454 = vrot.slane %v1449, %v1453
        %v1460 = vunpack.c.l.b16 %v1444
        %v1461 = vunpack.c.l.b16 %v1445
        %v1462 = vunpack.c.l.b16 %v1446
        %v1463 = vunpack.c.l.b16 %v1447
        %v1464 = vpack.c.b16 %v1461, %v1460
        %v1465 = vpack.c.b16 %v1463, %v1462
        %1468 = vmatprep.subr.bf16.mxu0 0
        %1469 = vmatpush1.bf16.msra.mxu0 %v1464
        %1470 = vmatprep.subr.bf16.mxu0 0
        %1471 = vmatpush1.bf16.msra.mxu0 %v1465
        %1472 = vmatprep.subr.bf16.mxu0 0
        %1473 = vmatpush1.bf16.msra.mxu0 0
        %1474 = vmatprep.subr.bf16.mxu0 0
        %1475 = vmatpush1.bf16.msra.mxu0 0
        %1476 = vmatprep.subr.bf16.mxu0 0
        %1477 = vmatpush1.bf16.msra.mxu0 0
        %1478 = vmatprep.subr.bf16.mxu0 0
        %1479 = vmatpush1.bf16.msra.mxu0 0
        %1480 = vmatprep.subr.bf16.mxu0 0
        %1481 = vmatpush1.bf16.msra.mxu0 0
        %1482 = vmatprep.subr.bf16.mxu0 0
        %1483 = vmatpush1.bf16.msra.mxu0 0
        %1484 = vmatprep.subr.bf16.mxu0 0
        %1485 = vmatpush1.bf16.msra.mxu0 0
        %1486 = vmatprep.subr.bf16.mxu0 0
        %1487 = vmatpush1.bf16.msra.mxu0 0
        %1488 = vmatprep.subr.bf16.mxu0 0
        %1489 = vmatpush1.bf16.msra.mxu0 0
        %1490 = vmatprep.subr.bf16.mxu0 0
        %1491 = vmatpush1.bf16.msra.mxu0 0
        %1492 = vmatprep.subr.bf16.mxu0 0
        %1493 = vmatpush1.bf16.msra.mxu0 0
        %1494 = vmatprep.subr.bf16.mxu0 0
        %1495 = vmatpush1.bf16.msra.mxu0 0
        %1496 = vmatprep.subr.bf16.mxu0 0
        %1497 = vmatpush1.bf16.msra.mxu0 0
        %1498 = vmatprep.subr.bf16.mxu0 0
        %1499 = vmatpush1.bf16.msra.mxu0 0
        %1500 = vmatprep.mubr.bf16.mxu0 0
        %1501 = vmatmul.mubr.bf16.gmra.mrb[0].mxu0 %v728
        %v1502 = vpop.f32.mrb[0].mxu0
        %v1503 = vadd.f32 %v1454, %v1502
        %v1504 = vpop.f32.mrb[0].mxu0
        %v1505 = vpop.f32.mrb[0].mxu0
        %v1506 = vpop.f32.mrb[0].mxu0
        %1507 = vdwg.mxu0
        %v1508 = vpack.c.bf16 %v1503, %v1503
        %v1510 = vsel %vm771, %v1376, 0
        %v1513 = vsel %vm771, %v1442, 0
        %1515 = vmatprep.subr.bf16.mxu0 0
        %1516 = vmatpush1.bf16.xpose.msra.mxu0 %v1513
        %1517 = vmatprep.subr.bf16.mxu0 0
        %1518 = vmatpush1.bf16.xpose.msra.mxu0 0
        %1519 = vmatprep.subr.bf16.mxu0 0
        %1520 = vmatpush1.bf16.xpose.msra.mxu0 0
        %1521 = vmatprep.subr.bf16.mxu0 0
        %1522 = vmatpush1.bf16.xpose.msra.mxu0 0
        %1523 = vmatprep.subr.bf16.mxu0 0
        %1524 = vmatpush1.bf16.xpose.msra.mxu0 0
        %1525 = vmatprep.subr.bf16.mxu0 0
        %1526 = vmatpush1.bf16.xpose.msra.mxu0 0
        %1527 = vmatprep.subr.bf16.mxu0 0
        %1528 = vmatpush1.bf16.xpose.msra.mxu0 0
        %1529 = vmatprep.subr.bf16.mxu0 0
        %1530 = vmatpush1.bf16.xpose.msra.mxu0 0
        %1531 = vmatprep.subr.bf16.mxu0 0
        %1532 = vmatpush1.bf16.xpose.msra.mxu0 0
        %1533 = vmatprep.subr.bf16.mxu0 0
        %1534 = vmatpush1.bf16.xpose.msra.mxu0 0
        %1535 = vmatprep.subr.bf16.mxu0 0
        %1536 = vmatpush1.bf16.xpose.msra.mxu0 0
        %1537 = vmatprep.subr.bf16.mxu0 0
        %1538 = vmatpush1.bf16.xpose.msra.mxu0 0
        %1539 = vmatprep.subr.bf16.mxu0 0
        %1540 = vmatpush1.bf16.xpose.msra.mxu0 0
        %1541 = vmatprep.subr.bf16.mxu0 0
        %1542 = vmatpush1.bf16.xpose.msra.mxu0 0
        %1543 = vmatprep.subr.bf16.mxu0 0
        %1544 = vmatpush1.bf16.xpose.msra.mxu0 0
        %1545 = vmatprep.subr.bf16.mxu0 0
        %1546 = vmatpush1.bf16.xpose.msra.mxu0 0
        %1547 = vmatprep.mubr.bf16.mxu0 0
        %1548 = vmatmul.mubr.bf16.gmra.mrb[0].mxu0 %v1510
        %v1549 = vpop.f32.mrb[0].mxu0
        %v1550 = vadd.f32 %v564, %v1549
        %v1551 = vpop.f32.mrb[0].mxu0
        %v1552 = vpop.f32.mrb[0].mxu0
        %v1553 = vpop.f32.mrb[0].mxu0
        %1554 = vdwg.mxu0
        %v1555 = vsel %vm771, %v1550, -inf
        %1556 = vmax.xlane.f32.xlu0 %v1555
        %v1557 = vpop.xlane.xlu0 %1556
        %v1558 = vsub.f32 %v1550, %v1557
        %v1559 = vmul.f32 %v1558, 1.442695
        %v1560 = vpow.pop %v1559
        %v1561 = vsel %vm771, %v1560, 0.0
        %1562 = vadd.xlane.f32.xlu0 %v1561
        %v1563 = vpop.xlane.xlu0 %1562
        %v1564 = vrcp.pop %v1563
        %v1565 = vmul.f32 %v1560, %v1564
        %v1566 = vpack.c.bf16 %v1565, %v1565
        %v1568 = vsel %vm771, %v1566, 0
        %v1571 = vsel %vm833, %v1508, 0
        %1573 = vmatprep.subr.bf16.mxu0 0
        %1574 = vmatpush1.bf16.msra.mxu0 %v1571
        %1575 = vmatprep.subr.bf16.mxu0 0
        %1576 = vmatpush1.bf16.msra.mxu0 0
        %1577 = vmatprep.subr.bf16.mxu0 0
        %1578 = vmatpush1.bf16.msra.mxu0 0
        %1579 = vmatprep.subr.bf16.mxu0 0
        %1580 = vmatpush1.bf16.msra.mxu0 0
        %1581 = vmatprep.subr.bf16.mxu0 0
        %1582 = vmatpush1.bf16.msra.mxu0 0
        %1583 = vmatprep.subr.bf16.mxu0 0
        %1584 = vmatpush1.bf16.msra.mxu0 0
        %1585 = vmatprep.subr.bf16.mxu0 0
        %1586 = vmatpush1.bf16.msra.mxu0 0
        %1587 = vmatprep.subr.bf16.mxu0 0
        %1588 = vmatpush1.bf16.msra.mxu0 0
        %1589 = vmatprep.subr.bf16.mxu0 0
        %1590 = vmatpush1.bf16.msra.mxu0 0
        %1591 = vmatprep.subr.bf16.mxu0 0
        %1592 = vmatpush1.bf16.msra.mxu0 0
        %1593 = vmatprep.subr.bf16.mxu0 0
        %1594 = vmatpush1.bf16.msra.mxu0 0
        %1595 = vmatprep.subr.bf16.mxu0 0
        %1596 = vmatpush1.bf16.msra.mxu0 0
        %1597 = vmatprep.subr.bf16.mxu0 0
        %1598 = vmatpush1.bf16.msra.mxu0 0
        %1599 = vmatprep.subr.bf16.mxu0 0
        %1600 = vmatpush1.bf16.msra.mxu0 0
        %1601 = vmatprep.subr.bf16.mxu0 0
        %1602 = vmatpush1.bf16.msra.mxu0 0
        %1603 = vmatprep.subr.bf16.mxu0 0
        %1604 = vmatpush1.bf16.msra.mxu0 0
        %1605 = vmatprep.mubr.bf16.mxu0 0
        %1606 = vmatmul.mubr.bf16.gmra.mrb[0].mxu0 %v1568
        %v1607 = vpop.f32.mrb[0].mxu0
        %v1608 = vadd.f32 0.0, %v1607
        %v1609 = vpop.f32.mrb[0].mxu0
        %v1610 = vpop.f32.mrb[0].mxu0
        %v1611 = vpop.f32.mrb[0].mxu0
        %1612 = vdwg.mxu0
        %v1613 = vpack.c.bf16 %v1608, %v1608
        %1614 = vst.msk [vmem:[#allocation2] sm:$0xf] %vm878, %v1613
        %1616 = vrot.lane.b32.xlu0 %v1376, 120
        %v1617 = vpop.permute.xlu0 %1616
        %1619 = vrot.lane.b32.xlu0 %v1442, 120
        %v1620 = vpop.permute.xlu0 %1619
        %v1622 = vsel %vm771, %v1617, 0
        %v1625 = vsel %vm771, %v1620, 0
        %1627 = vmatprep.subr.bf16.mxu0 0
        %1628 = vmatpush1.bf16.xpose.msra.mxu0 %v1625
        %1629 = vmatprep.subr.bf16.mxu0 0
        %1630 = vmatpush1.bf16.xpose.msra.mxu0 0
        %1631 = vmatprep.subr.bf16.mxu0 0
        %1632 = vmatpush1.bf16.xpose.msra.mxu0 0
        %1633 = vmatprep.subr.bf16.mxu0 0
        %1634 = vmatpush1.bf16.xpose.msra.mxu0 0
        %1635 = vmatprep.subr.bf16.mxu0 0
        %1636 = vmatpush1.bf16.xpose.msra.mxu0 0
        %1637 = vmatprep.subr.bf16.mxu0 0
        %1638 = vmatpush1.bf16.xpose.msra.mxu0 0
        %1639 = vmatprep.subr.bf16.mxu0 0
        %1640 = vmatpush1.bf16.xpose.msra.mxu0 0
        %1641 = vmatprep.subr.bf16.mxu0 0
        %1642 = vmatpush1.bf16.xpose.msra.mxu0 0
        %1643 = vmatprep.subr.bf16.mxu0 0
        %1644 = vmatpush1.bf16.xpose.msra.mxu0 0
        %1645 = vmatprep.subr.bf16.mxu0 0
        %1646 = vmatpush1.bf16.xpose.msra.mxu0 0
        %1647 = vmatprep.subr.bf16.mxu0 0
        %1648 = vmatpush1.bf16.xpose.msra.mxu0 0
        %1649 = vmatprep.subr.bf16.mxu0 0
        %1650 = vmatpush1.bf16.xpose.msra.mxu0 0
        %1651 = vmatprep.subr.bf16.mxu0 0
        %1652 = vmatpush1.bf16.xpose.msra.mxu0 0
        %1653 = vmatprep.subr.bf16.mxu0 0
        %1654 = vmatpush1.bf16.xpose.msra.mxu0 0
        %1655 = vmatprep.subr.bf16.mxu0 0
        %1656 = vmatpush1.bf16.xpose.msra.mxu0 0
        %1657 = vmatprep.subr.bf16.mxu0 0
        %1658 = vmatpush1.bf16.xpose.msra.mxu0 0
        %1659 = vmatprep.mubr.bf16.mxu0 0
        %1660 = vmatmul.mubr.bf16.gmra.mrb[0].mxu0 %v1622
        %v1661 = vpop.f32.mrb[0].mxu0
        %v1662 = vadd.f32 %v564, %v1661
        %v1663 = vpop.f32.mrb[0].mxu0
        %v1664 = vpop.f32.mrb[0].mxu0
        %v1665 = vpop.f32.mrb[0].mxu0
        %1666 = vdwg.mxu0
        %v1667 = vsel %vm771, %v1662, -inf
        %1668 = vmax.xlane.f32.xlu0 %v1667
        %v1669 = vpop.xlane.xlu0 %1668
        %v1670 = vsub.f32 %v1662, %v1669
        %v1671 = vmul.f32 %v1670, 1.442695
        %v1672 = vpow.pop %v1671
        %v1673 = vsel %vm771, %v1672, 0.0
        %1674 = vadd.xlane.f32.xlu0 %v1673
        %v1675 = vpop.xlane.xlu0 %1674
        %v1676 = vrcp.pop %v1675
        %v1677 = vmul.f32 %v1672, %v1676
        %v1678 = vpack.c.bf16 %v1677, %v1677
        %1680 = vrot.lane.b32.xlu0 %v1508, 120
        %v1681 = vpop.permute.xlu0 %1680
        %v1683 = vsel %vm771, %v1678, 0
        %v1686 = vsel %vm833, %v1681, 0
        %1688 = vmatprep.subr.bf16.mxu0 0
        %1689 = vmatpush1.bf16.msra.mxu0 %v1686
        %1690 = vmatprep.subr.bf16.mxu0 0
        %1691 = vmatpush1.bf16.msra.mxu0 0
        %1692 = vmatprep.subr.bf16.mxu0 0
        %1693 = vmatpush1.bf16.msra.mxu0 0
        %1694 = vmatprep.subr.bf16.mxu0 0
        %1695 = vmatpush1.bf16.msra.mxu0 0
        %1696 = vmatprep.subr.bf16.mxu0 0
        %1697 = vmatpush1.bf16.msra.mxu0 0
        %1698 = vmatprep.subr.bf16.mxu0 0
        %1699 = vmatpush1.bf16.msra.mxu0 0
        %1700 = vmatprep.subr.bf16.mxu0 0
        %1701 = vmatpush1.bf16.msra.mxu0 0
        %1702 = vmatprep.subr.bf16.mxu0 0
        %1703 = vmatpush1.bf16.msra.mxu0 0
        %1704 = vmatprep.subr.bf16.mxu0 0
        %1705 = vmatpush1.bf16.msra.mxu0 0
        %1706 = vmatprep.subr.bf16.mxu0 0
        %1707 = vmatpush1.bf16.msra.mxu0 0
        %1708 = vmatprep.subr.bf16.mxu0 0
        %1709 = vmatpush1.bf16.msra.mxu0 0
        %1710 = vmatprep.subr.bf16.mxu0 0
        %1711 = vmatpush1.bf16.msra.mxu0 0
        %1712 = vmatprep.subr.bf16.mxu0 0
        %1713 = vmatpush1.bf16.msra.mxu0 0
        %1714 = vmatprep.subr.bf16.mxu0 0
        %1715 = vmatpush1.bf16.msra.mxu0 0
        %1716 = vmatprep.subr.bf16.mxu0 0
        %1717 = vmatpush1.bf16.msra.mxu0 0
        %1718 = vmatprep.subr.bf16.mxu0 0
        %1719 = vmatpush1.bf16.msra.mxu0 0
        %1720 = vmatprep.mubr.bf16.mxu0 0
        %1721 = vmatmul.mubr.bf16.gmra.mrb[0].mxu0 %v1683
        %v1722 = vpop.f32.mrb[0].mxu0
        %v1723 = vadd.f32 0.0, %v1722
        %v1724 = vpop.f32.mrb[0].mxu0
        %v1725 = vpop.f32.mrb[0].mxu0
        %v1726 = vpop.f32.mrb[0].mxu0
        %1727 = vdwg.mxu0
        %v1728 = vpack.c.bf16 %v1723, %v1723
        %v1730 = vunpack.c.l.b16 %v1728
        %v1731 = vpack.c.b16 %v1730, %v1730
        %1732 = vrot.lane.b32.xlu0 %v1731, 8
        %v1733 = vpop.permute.xlu0 %1732
        %1735 = vst.msk [vmem:[#allocation2] sm:$0xf] %vm1000, %v1733
        %1736 = vrot.lane.b32.xlu0 %v1376, 112
        %v1737 = vpop.permute.xlu0 %1736
        %1738 = vrot.lane.b32.xlu0 %v1442, 112
        %v1739 = vpop.permute.xlu0 %1738
        %v1741 = vsel %vm771, %v1737, 0
        %v1744 = vsel %vm771, %v1739, 0
        %1746 = vmatprep.subr.bf16.mxu0 0
        %1747 = vmatpush1.bf16.xpose.msra.mxu0 %v1744
        %1748 = vmatprep.subr.bf16.mxu0 0
        %1749 = vmatpush1.bf16.xpose.msra.mxu0 0
        %1750 = vmatprep.subr.bf16.mxu0 0
        %1751 = vmatpush1.bf16.xpose.msra.mxu0 0
        %1752 = vmatprep.subr.bf16.mxu0 0
        %1753 = vmatpush1.bf16.xpose.msra.mxu0 0
        %1754 = vmatprep.subr.bf16.mxu0 0
        %1755 = vmatpush1.bf16.xpose.msra.mxu0 0
        %1756 = vmatprep.subr.bf16.mxu0 0
        %1757 = vmatpush1.bf16.xpose.msra.mxu0 0
        %1758 = vmatprep.subr.bf16.mxu0 0
        %1759 = vmatpush1.bf16.xpose.msra.mxu0 0
        %1760 = vmatprep.subr.bf16.mxu0 0
        %1761 = vmatpush1.bf16.xpose.msra.mxu0 0
        %1762 = vmatprep.subr.bf16.mxu0 0
        %1763 = vmatpush1.bf16.xpose.msra.mxu0 0
        %1764 = vmatprep.subr.bf16.mxu0 0
        %1765 = vmatpush1.bf16.xpose.msra.mxu0 0
        %1766 = vmatprep.subr.bf16.mxu0 0
        %1767 = vmatpush1.bf16.xpose.msra.mxu0 0
        %1768 = vmatprep.subr.bf16.mxu0 0
        %1769 = vmatpush1.bf16.xpose.msra.mxu0 0
        %1770 = vmatprep.subr.bf16.mxu0 0
        %1771 = vmatpush1.bf16.xpose.msra.mxu0 0
        %1772 = vmatprep.subr.bf16.mxu0 0
        %1773 = vmatpush1.bf16.xpose.msra.mxu0 0
        %1774 = vmatprep.subr.bf16.mxu0 0
        %1775 = vmatpush1.bf16.xpose.msra.mxu0 0
        %1776 = vmatprep.subr.bf16.mxu0 0
        %1777 = vmatpush1.bf16.xpose.msra.mxu0 0
        %1778 = vmatprep.mubr.bf16.mxu0 0
        %1779 = vmatmul.mubr.bf16.gmra.mrb[0].mxu0 %v1741
        %v1780 = vpop.f32.mrb[0].mxu0
        %v1781 = vadd.f32 %v564, %v1780
        %v1782 = vpop.f32.mrb[0].mxu0
        %v1783 = vpop.f32.mrb[0].mxu0
        %v1784 = vpop.f32.mrb[0].mxu0
        %1785 = vdwg.mxu0
        %v1786 = vsel %vm771, %v1781, -inf
        %1787 = vmax.xlane.f32.xlu0 %v1786
        %v1788 = vpop.xlane.xlu0 %1787
        %v1789 = vsub.f32 %v1781, %v1788
        %v1790 = vmul.f32 %v1789, 1.442695
        %v1791 = vpow.pop %v1790
        %v1792 = vsel %vm771, %v1791, 0.0
        %1793 = vadd.xlane.f32.xlu0 %v1792
        %v1794 = vpop.xlane.xlu0 %1793
        %v1795 = vrcp.pop %v1794
        %v1796 = vmul.f32 %v1791, %v1795
        %v1797 = vpack.c.bf16 %v1796, %v1796
        %1798 = vrot.lane.b32.xlu0 %v1508, 112
        %v1799 = vpop.permute.xlu0 %1798
        %v1801 = vsel %vm771, %v1797, 0
        %v1804 = vsel %vm833, %v1799, 0
        %1806 = vmatprep.subr.bf16.mxu0 0
        %1807 = vmatpush1.bf16.msra.mxu0 %v1804
        %1808 = vmatprep.subr.bf16.mxu0 0
        %1809 = vmatpush1.bf16.msra.mxu0 0
        %1810 = vmatprep.subr.bf16.mxu0 0
        %1811 = vmatpush1.bf16.msra.mxu0 0
        %1812 = vmatprep.subr.bf16.mxu0 0
        %1813 = vmatpush1.bf16.msra.mxu0 0
        %1814 = vmatprep.subr.bf16.mxu0 0
        %1815 = vmatpush1.bf16.msra.mxu0 0
        %1816 = vmatprep.subr.bf16.mxu0 0
        %1817 = vmatpush1.bf16.msra.mxu0 0
        %1818 = vmatprep.subr.bf16.mxu0 0
        %1819 = vmatpush1.bf16.msra.mxu0 0
        %1820 = vmatprep.subr.bf16.mxu0 0
        %1821 = vmatpush1.bf16.msra.mxu0 0
        %1822 = vmatprep.subr.bf16.mxu0 0
        %1823 = vmatpush1.bf16.msra.mxu0 0
        %1824 = vmatprep.subr.bf16.mxu0 0
        %1825 = vmatpush1.bf16.msra.mxu0 0
        %1826 = vmatprep.subr.bf16.mxu0 0
        %1827 = vmatpush1.bf16.msra.mxu0 0
        %1828 = vmatprep.subr.bf16.mxu0 0
        %1829 = vmatpush1.bf16.msra.mxu0 0
        %1830 = vmatprep.subr.bf16.mxu0 0
        %1831 = vmatpush1.bf16.msra.mxu0 0
        %1832 = vmatprep.subr.bf16.mxu0 0
        %1833 = vmatpush1.bf16.msra.mxu0 0
        %1834 = vmatprep.subr.bf16.mxu0 0
        %1835 = vmatpush1.bf16.msra.mxu0 0
        %1836 = vmatprep.subr.bf16.mxu0 0
        %1837 = vmatpush1.bf16.msra.mxu0 0
        %1838 = vmatprep.mubr.bf16.mxu0 0
        %1839 = vmatmul.mubr.bf16.gmra.mrb[0].mxu0 %v1801
        %v1840 = vpop.f32.mrb[0].mxu0
        %v1841 = vadd.f32 0.0, %v1840
        %v1842 = vpop.f32.mrb[0].mxu0
        %v1843 = vpop.f32.mrb[0].mxu0
        %v1844 = vpop.f32.mrb[0].mxu0
        %1845 = vdwg.mxu0
        %v1846 = vpack.c.bf16 %v1841, %v1841
        %v1848 = vunpack.c.l.b16 %v1846
        %v1849 = vpack.c.b16 %v1848, %v1848
        %1850 = vrot.lane.b32.xlu0 %v1849, 16
        %v1851 = vpop.permute.xlu0 %1850
        %1853 = vst.msk [vmem:[#allocation2] sm:$0xf] %vm1119, %v1851
        %1854 = vrot.lane.b32.xlu0 %v1376, 104
        %v1855 = vpop.permute.xlu0 %1854
        %1856 = vrot.lane.b32.xlu0 %v1442, 104
        %v1857 = vpop.permute.xlu0 %1856
        %v1859 = vsel %vm771, %v1855, 0
        %v1862 = vsel %vm771, %v1857, 0
        %1864 = vmatprep.subr.bf16.mxu0 0
        %1865 = vmatpush1.bf16.xpose.msra.mxu0 %v1862
        %1866 = vmatprep.subr.bf16.mxu0 0
        %1867 = vmatpush1.bf16.xpose.msra.mxu0 0
        %1868 = vmatprep.subr.bf16.mxu0 0
        %1869 = vmatpush1.bf16.xpose.msra.mxu0 0
        %1870 = vmatprep.subr.bf16.mxu0 0
        %1871 = vmatpush1.bf16.xpose.msra.mxu0 0
        %1872 = vmatprep.subr.bf16.mxu0 0
        %1873 = vmatpush1.bf16.xpose.msra.mxu0 0
        %1874 = vmatprep.subr.bf16.mxu0 0
        %1875 = vmatpush1.bf16.xpose.msra.mxu0 0
        %1876 = vmatprep.subr.bf16.mxu0 0
        %1877 = vmatpush1.bf16.xpose.msra.mxu0 0
        %1878 = vmatprep.subr.bf16.mxu0 0
        %1879 = vmatpush1.bf16.xpose.msra.mxu0 0
        %1880 = vmatprep.subr.bf16.mxu0 0
        %1881 = vmatpush1.bf16.xpose.msra.mxu0 0
        %1882 = vmatprep.subr.bf16.mxu0 0
        %1883 = vmatpush1.bf16.xpose.msra.mxu0 0
        %1884 = vmatprep.subr.bf16.mxu0 0
        %1885 = vmatpush1.bf16.xpose.msra.mxu0 0
        %1886 = vmatprep.subr.bf16.mxu0 0
        %1887 = vmatpush1.bf16.xpose.msra.mxu0 0
        %1888 = vmatprep.subr.bf16.mxu0 0
        %1889 = vmatpush1.bf16.xpose.msra.mxu0 0
        %1890 = vmatprep.subr.bf16.mxu0 0
        %1891 = vmatpush1.bf16.xpose.msra.mxu0 0
        %1892 = vmatprep.subr.bf16.mxu0 0
        %1893 = vmatpush1.bf16.xpose.msra.mxu0 0
        %1894 = vmatprep.subr.bf16.mxu0 0
        %1895 = vmatpush1.bf16.xpose.msra.mxu0 0
        %1896 = vmatprep.mubr.bf16.mxu0 0
        %1897 = vmatmul.mubr.bf16.gmra.mrb[0].mxu0 %v1859
        %v1898 = vpop.f32.mrb[0].mxu0
        %v1899 = vadd.f32 %v564, %v1898
        %v1900 = vpop.f32.mrb[0].mxu0
        %v1901 = vpop.f32.mrb[0].mxu0
        %v1902 = vpop.f32.mrb[0].mxu0
        %1903 = vdwg.mxu0
        %v1904 = vsel %vm771, %v1899, -inf
        %1905 = vmax.xlane.f32.xlu0 %v1904
        %v1906 = vpop.xlane.xlu0 %1905
        %v1907 = vsub.f32 %v1899, %v1906
        %v1908 = vmul.f32 %v1907, 1.442695
        %v1909 = vpow.pop %v1908
        %v1910 = vsel %vm771, %v1909, 0.0
        %1911 = vadd.xlane.f32.xlu0 %v1910
        %v1912 = vpop.xlane.xlu0 %1911
        %v1913 = vrcp.pop %v1912
        %v1914 = vmul.f32 %v1909, %v1913
        %v1915 = vpack.c.bf16 %v1914, %v1914
        %1916 = vrot.lane.b32.xlu0 %v1508, 104
        %v1917 = vpop.permute.xlu0 %1916
        %v1919 = vsel %vm771, %v1915, 0
        %v1922 = vsel %vm833, %v1917, 0
        %1924 = vmatprep.subr.bf16.mxu0 0
        %1925 = vmatpush1.bf16.msra.mxu0 %v1922
        %1926 = vmatprep.subr.bf16.mxu0 0
        %1927 = vmatpush1.bf16.msra.mxu0 0
        %1928 = vmatprep.subr.bf16.mxu0 0
        %1929 = vmatpush1.bf16.msra.mxu0 0
        %1930 = vmatprep.subr.bf16.mxu0 0
        %1931 = vmatpush1.bf16.msra.mxu0 0
        %1932 = vmatprep.subr.bf16.mxu0 0
        %1933 = vmatpush1.bf16.msra.mxu0 0
        %1934 = vmatprep.subr.bf16.mxu0 0
        %1935 = vmatpush1.bf16.msra.mxu0 0
        %1936 = vmatprep.subr.bf16.mxu0 0
        %1937 = vmatpush1.bf16.msra.mxu0 0
        %1938 = vmatprep.subr.bf16.mxu0 0
        %1939 = vmatpush1.bf16.msra.mxu0 0
        %1940 = vmatprep.subr.bf16.mxu0 0
        %1941 = vmatpush1.bf16.msra.mxu0 0
        %1942 = vmatprep.subr.bf16.mxu0 0
        %1943 = vmatpush1.bf16.msra.mxu0 0
        %1944 = vmatprep.subr.bf16.mxu0 0
        %1945 = vmatpush1.bf16.msra.mxu0 0
        %1946 = vmatprep.subr.bf16.mxu0 0
        %1947 = vmatpush1.bf16.msra.mxu0 0
        %1948 = vmatprep.subr.bf16.mxu0 0
        %1949 = vmatpush1.bf16.msra.mxu0 0
        %1950 = vmatprep.subr.bf16.mxu0 0
        %1951 = vmatpush1.bf16.msra.mxu0 0
        %1952 = vmatprep.subr.bf16.mxu0 0
        %1953 = vmatpush1.bf16.msra.mxu0 0
        %1954 = vmatprep.subr.bf16.mxu0 0
        %1955 = vmatpush1.bf16.msra.mxu0 0
        %1956 = vmatprep.mubr.bf16.mxu0 0
        %1957 = vmatmul.mubr.bf16.gmra.mrb[0].mxu0 %v1919
        %v1958 = vpop.f32.mrb[0].mxu0
        %v1959 = vadd.f32 0.0, %v1958
        %v1960 = vpop.f32.mrb[0].mxu0
        %v1961 = vpop.f32.mrb[0].mxu0
        %v1962 = vpop.f32.mrb[0].mxu0
        %1963 = vdwg.mxu0
        %v1964 = vpack.c.bf16 %v1959, %v1959
        %v1966 = vunpack.c.l.b16 %v1964
        %v1967 = vpack.c.b16 %v1966, %v1966
        %1968 = vrot.lane.b32.xlu0 %v1967, 24
        %v1969 = vpop.permute.xlu0 %1968
        %1971 = vst.msk [vmem:[#allocation2] sm:$0xf] %vm1238, %v1969
        %v1972 = vld [vmem:[#allocation2] sm:$0xf]
        %s1973 = scalar_lea.vmem [#allocation12], 16
        %v1974 = vld [vmem:[%s1973] sm:$0xf]
        %v1975 = vld [vmem:[%s1973 + $0x4] sm:$0xf]
        %v1976 = vld [vmem:[%s1973 + $0x8] sm:$0xf]
        %v1977 = vld [vmem:[%s1973 + $0xc] sm:$0xf]
        %s1978 = scalar_lea.vmem [#allocation14], 1
        %v1979 = vld [vmem:[%s1978] sm:$0x1]
        %v1981 = vlaneseq
        %v1982 = vshrl.u32 %v1981, 7
        %v1983 = vsub.s32 0, %v1982
        %v1984 = vrot.slane %v1979, %v1983
        %v1990 = vunpack.c.l.b16 %v1974
        %v1991 = vunpack.c.l.b16 %v1975
        %v1992 = vunpack.c.l.b16 %v1976
        %v1993 = vunpack.c.l.b16 %v1977
        %v1994 = vpack.c.b16 %v1991, %v1990
        %v1995 = vpack.c.b16 %v1993, %v1992
        %v1999 = vsel %vm591, %v1972, 0
        %2001 = vmatprep.subr.bf16.mxu0 0
        %2002 = vmatpush1.bf16.msra.mxu0 %v1994
        %2003 = vmatprep.subr.bf16.mxu0 0
        %2004 = vmatpush1.bf16.msra.mxu0 %v1995
        %2005 = vmatprep.subr.bf16.mxu0 0
        %2006 = vmatpush1.bf16.msra.mxu0 0
        %2007 = vmatprep.subr.bf16.mxu0 0
        %2008 = vmatpush1.bf16.msra.mxu0 0
        %2009 = vmatprep.subr.bf16.mxu0 0
        %2010 = vmatpush1.bf16.msra.mxu0 0
        %2011 = vmatprep.subr.bf16.mxu0 0
        %2012 = vmatpush1.bf16.msra.mxu0 0
        %2013 = vmatprep.subr.bf16.mxu0 0
        %2014 = vmatpush1.bf16.msra.mxu0 0
        %2015 = vmatprep.subr.bf16.mxu0 0
        %2016 = vmatpush1.bf16.msra.mxu0 0
        %2017 = vmatprep.subr.bf16.mxu0 0
        %2018 = vmatpush1.bf16.msra.mxu0 0
        %2019 = vmatprep.subr.bf16.mxu0 0
        %2020 = vmatpush1.bf16.msra.mxu0 0
        %2021 = vmatprep.subr.bf16.mxu0 0
        %2022 = vmatpush1.bf16.msra.mxu0 0
        %2023 = vmatprep.subr.bf16.mxu0 0
        %2024 = vmatpush1.bf16.msra.mxu0 0
        %2025 = vmatprep.subr.bf16.mxu0 0
        %2026 = vmatpush1.bf16.msra.mxu0 0
        %2027 = vmatprep.subr.bf16.mxu0 0
        %2028 = vmatpush1.bf16.msra.mxu0 0
        %2029 = vmatprep.subr.bf16.mxu0 0
        %2030 = vmatpush1.bf16.msra.mxu0 0
        %2031 = vmatprep.subr.bf16.mxu0 0
        %2032 = vmatpush1.bf16.msra.mxu0 0
        %2033 = vmatprep.mubr.bf16.mxu0 0
        %2034 = vmatmul.mubr.bf16.gmra.mrb[0].mxu0 %v1999
        %v2035 = vpop.f32.mrb[0].mxu0
        %v2036 = vadd.f32 %v1984, %v2035
        %v2037 = vpop.f32.mrb[0].mxu0
        %v2038 = vpop.f32.mrb[0].mxu0
        %v2039 = vpop.f32.mrb[0].mxu0
        %2040 = vdwg.mxu0
        %s2041 = scalar_lea.vmem [#allocation9], 96
        %v2042 = vld [vmem:[%s2041] sm:$0xf]
        %v2043 = vld [vmem:[%s2041 + $0x4] sm:$0xf]
        %v2044 = vld [vmem:[%s2041 + $0x8] sm:$0xf]
        %v2045 = vld [vmem:[%s2041 + $0xc] sm:$0xf]
        %s2046 = scalar_lea.vmem [#allocation11], 6
        %v2047 = vld [vmem:[%s2046] sm:$0x1]
        %v2049 = vlaneseq
        %v2050 = vshrl.u32 %v2049, 7
        %v2051 = vsub.s32 0, %v2050
        %v2052 = vrot.slane %v2047, %v2051
        %v2058 = vunpack.c.l.b16 %v2042
        %v2059 = vunpack.c.l.b16 %v2043
        %v2060 = vunpack.c.l.b16 %v2044
        %v2061 = vunpack.c.l.b16 %v2045
        %v2062 = vpack.c.b16 %v2059, %v2058
        %v2063 = vpack.c.b16 %v2061, %v2060
        %2066 = vmatprep.subr.bf16.mxu0 0
        %2067 = vmatpush1.bf16.msra.mxu0 %v2062
        %2068 = vmatprep.subr.bf16.mxu0 0
        %2069 = vmatpush1.bf16.msra.mxu0 %v2063
        %2070 = vmatprep.subr.bf16.mxu0 0
        %2071 = vmatpush1.bf16.msra.mxu0 0
        %2072 = vmatprep.subr.bf16.mxu0 0
        %2073 = vmatpush1.bf16.msra.mxu0 0
        %2074 = vmatprep.subr.bf16.mxu0 0
        %2075 = vmatpush1.bf16.msra.mxu0 0
        %2076 = vmatprep.subr.bf16.mxu0 0
        %2077 = vmatpush1.bf16.msra.mxu0 0
        %2078 = vmatprep.subr.bf16.mxu0 0
        %2079 = vmatpush1.bf16.msra.mxu0 0
        %2080 = vmatprep.subr.bf16.mxu0 0
        %2081 = vmatpush1.bf16.msra.mxu0 0
        %2082 = vmatprep.subr.bf16.mxu0 0
        %2083 = vmatpush1.bf16.msra.mxu0 0
        %2084 = vmatprep.subr.bf16.mxu0 0
        %2085 = vmatpush1.bf16.msra.mxu0 0
        %2086 = vmatprep.subr.bf16.mxu0 0
        %2087 = vmatpush1.bf16.msra.mxu0 0
        %2088 = vmatprep.subr.bf16.mxu0 0
        %2089 = vmatpush1.bf16.msra.mxu0 0
        %2090 = vmatprep.subr.bf16.mxu0 0
        %2091 = vmatpush1.bf16.msra.mxu0 0
        %2092 = vmatprep.subr.bf16.mxu0 0
        %2093 = vmatpush1.bf16.msra.mxu0 0
        %2094 = vmatprep.subr.bf16.mxu0 0
        %2095 = vmatpush1.bf16.msra.mxu0 0
        %2096 = vmatprep.subr.bf16.mxu0 0
        %2097 = vmatpush1.bf16.msra.mxu0 0
        %2098 = vmatprep.mubr.bf16.mxu0 0
        %2099 = vmatmul.mubr.bf16.gmra.mrb[0].mxu0 %v593
        %v2100 = vpop.f32.mrb[0].mxu0
        %v2101 = vadd.f32 %v2052, %v2100
        %v2102 = vpop.f32.mrb[0].mxu0
        %v2103 = vpop.f32.mrb[0].mxu0
        %v2104 = vpop.f32.mrb[0].mxu0
        %2105 = vdwg.mxu0
        %v2106 = vpack.c.bf16 %v2101, %v2101
        %s2107 = scalar_lea.vmem [#allocation9], 112
        %v2108 = vld [vmem:[%s2107] sm:$0xf]
        %v2109 = vld [vmem:[%s2107 + $0x4] sm:$0xf]
        %v2110 = vld [vmem:[%s2107 + $0x8] sm:$0xf]
        %v2111 = vld [vmem:[%s2107 + $0xc] sm:$0xf]
        %s2112 = scalar_lea.vmem [#allocation11], 7
        %v2113 = vld [vmem:[%s2112] sm:$0x1]
        %v2115 = vlaneseq
        %v2116 = vshrl.u32 %v2115, 7
        %v2117 = vsub.s32 0, %v2116
        %v2118 = vrot.slane %v2113, %v2117
        %v2124 = vunpack.c.l.b16 %v2108
        %v2125 = vunpack.c.l.b16 %v2109
        %v2126 = vunpack.c.l.b16 %v2110
        %v2127 = vunpack.c.l.b16 %v2111
        %v2128 = vpack.c.b16 %v2125, %v2124
        %v2129 = vpack.c.b16 %v2127, %v2126
        %2132 = vmatprep.subr.bf16.mxu0 0
        %2133 = vmatpush1.bf16.msra.mxu0 %v2128
        %2134 = vmatprep.subr.bf16.mxu0 0
        %2135 = vmatpush1.bf16.msra.mxu0 %v2129
        %2136 = vmatprep.subr.bf16.mxu0 0
        %2137 = vmatpush1.bf16.msra.mxu0 0
        %2138 = vmatprep.subr.bf16.mxu0 0
        %2139 = vmatpush1.bf16.msra.mxu0 0
        %2140 = vmatprep.subr.bf16.mxu0 0
        %2141 = vmatpush1.bf16.msra.mxu0 0
        %2142 = vmatprep.subr.bf16.mxu0 0
        %2143 = vmatpush1.bf16.msra.mxu0 0
        %2144 = vmatprep.subr.bf16.mxu0 0
        %2145 = vmatpush1.bf16.msra.mxu0 0
        %2146 = vmatprep.subr.bf16.mxu0 0
        %2147 = vmatpush1.bf16.msra.mxu0 0
        %2148 = vmatprep.subr.bf16.mxu0 0
        %2149 = vmatpush1.bf16.msra.mxu0 0
        %2150 = vmatprep.subr.bf16.mxu0 0
        %2151 = vmatpush1.bf16.msra.mxu0 0
        %2152 = vmatprep.subr.bf16.mxu0 0
        %2153 = vmatpush1.bf16.msra.mxu0 0
        %2154 = vmatprep.subr.bf16.mxu0 0
        %2155 = vmatpush1.bf16.msra.mxu0 0
        %2156 = vmatprep.subr.bf16.mxu0 0
        %2157 = vmatpush1.bf16.msra.mxu0 0
        %2158 = vmatprep.subr.bf16.mxu0 0
        %2159 = vmatpush1.bf16.msra.mxu0 0
        %2160 = vmatprep.subr.bf16.mxu0 0
        %2161 = vmatpush1.bf16.msra.mxu0 0
        %2162 = vmatprep.subr.bf16.mxu0 0
        %2163 = vmatpush1.bf16.msra.mxu0 0
        %2164 = vmatprep.mubr.bf16.mxu0 0
        %2165 = vmatmul.mubr.bf16.gmra.mrb[0].mxu0 %v593
        %v2166 = vpop.f32.mrb[0].mxu0
        %v2167 = vadd.f32 %v2118, %v2166
        %v2168 = vpop.f32.mrb[0].mxu0
        %v2169 = vpop.f32.mrb[0].mxu0
        %v2170 = vpop.f32.mrb[0].mxu0
        %2171 = vdwg.mxu0
        %v2172 = vpack.c.bf16 %v2167, %v2167
        %s2173 = scalar_lea.vmem [#allocation9], 128
        %v2174 = vld [vmem:[%s2173] sm:$0xf]
        %v2175 = vld [vmem:[%s2173 + $0x4] sm:$0xf]
        %v2176 = vld [vmem:[%s2173 + $0x8] sm:$0xf]
        %v2177 = vld [vmem:[%s2173 + $0xc] sm:$0xf]
        %s2178 = scalar_lea.vmem [#allocation11], 8
        %v2179 = vld [vmem:[%s2178] sm:$0x1]
        %v2181 = vlaneseq
        %v2182 = vshrl.u32 %v2181, 7
        %v2183 = vsub.s32 0, %v2182
        %v2184 = vrot.slane %v2179, %v2183
        %v2190 = vunpack.c.l.b16 %v2174
        %v2191 = vunpack.c.l.b16 %v2175
        %v2192 = vunpack.c.l.b16 %v2176
        %v2193 = vunpack.c.l.b16 %v2177
        %v2194 = vpack.c.b16 %v2191, %v2190
        %v2195 = vpack.c.b16 %v2193, %v2192
        %2198 = vmatprep.subr.bf16.mxu0 0
        %2199 = vmatpush1.bf16.msra.mxu0 %v2194
        %2200 = vmatprep.subr.bf16.mxu0 0
        %2201 = vmatpush1.bf16.msra.mxu0 %v2195
        %2202 = vmatprep.subr.bf16.mxu0 0
        %2203 = vmatpush1.bf16.msra.mxu0 0
        %2204 = vmatprep.subr.bf16.mxu0 0
        %2205 = vmatpush1.bf16.msra.mxu0 0
        %2206 = vmatprep.subr.bf16.mxu0 0
        %2207 = vmatpush1.bf16.msra.mxu0 0
        %2208 = vmatprep.subr.bf16.mxu0 0
        %2209 = vmatpush1.bf16.msra.mxu0 0
        %2210 = vmatprep.subr.bf16.mxu0 0
        %2211 = vmatpush1.bf16.msra.mxu0 0
        %2212 = vmatprep.subr.bf16.mxu0 0
        %2213 = vmatpush1.bf16.msra.mxu0 0
        %2214 = vmatprep.subr.bf16.mxu0 0
        %2215 = vmatpush1.bf16.msra.mxu0 0
        %2216 = vmatprep.subr.bf16.mxu0 0
        %2217 = vmatpush1.bf16.msra.mxu0 0
        %2218 = vmatprep.subr.bf16.mxu0 0
        %2219 = vmatpush1.bf16.msra.mxu0 0
        %2220 = vmatprep.subr.bf16.mxu0 0
        %2221 = vmatpush1.bf16.msra.mxu0 0
        %2222 = vmatprep.subr.bf16.mxu0 0
        %2223 = vmatpush1.bf16.msra.mxu0 0
        %2224 = vmatprep.subr.bf16.mxu0 0
        %2225 = vmatpush1.bf16.msra.mxu0 0
        %2226 = vmatprep.subr.bf16.mxu0 0
        %2227 = vmatpush1.bf16.msra.mxu0 0
        %2228 = vmatprep.subr.bf16.mxu0 0
        %2229 = vmatpush1.bf16.msra.mxu0 0
        %2230 = vmatprep.mubr.bf16.mxu0 0
        %2231 = vmatmul.mubr.bf16.gmra.mrb[0].mxu0 %v728
        %v2232 = vpop.f32.mrb[0].mxu0
        %v2233 = vadd.f32 %v2184, %v2232
        %v2234 = vpop.f32.mrb[0].mxu0
        %v2235 = vpop.f32.mrb[0].mxu0
        %v2236 = vpop.f32.mrb[0].mxu0
        %2237 = vdwg.mxu0
        %v2238 = vpack.c.bf16 %v2233, %v2233
        %v2240 = vsel %vm771, %v2106, 0
        %v2243 = vsel %vm771, %v2172, 0
        %2245 = vmatprep.subr.bf16.mxu0 0
        %2246 = vmatpush1.bf16.xpose.msra.mxu0 %v2243
        %2247 = vmatprep.subr.bf16.mxu0 0
        %2248 = vmatpush1.bf16.xpose.msra.mxu0 0
        %2249 = vmatprep.subr.bf16.mxu0 0
        %2250 = vmatpush1.bf16.xpose.msra.mxu0 0
        %2251 = vmatprep.subr.bf16.mxu0 0
        %2252 = vmatpush1.bf16.xpose.msra.mxu0 0
        %2253 = vmatprep.subr.bf16.mxu0 0
        %2254 = vmatpush1.bf16.xpose.msra.mxu0 0
        %2255 = vmatprep.subr.bf16.mxu0 0
        %2256 = vmatpush1.bf16.xpose.msra.mxu0 0
        %2257 = vmatprep.subr.bf16.mxu0 0
        %2258 = vmatpush1.bf16.xpose.msra.mxu0 0
        %2259 = vmatprep.subr.bf16.mxu0 0
        %2260 = vmatpush1.bf16.xpose.msra.mxu0 0
        %2261 = vmatprep.subr.bf16.mxu0 0
        %2262 = vmatpush1.bf16.xpose.msra.mxu0 0
        %2263 = vmatprep.subr.bf16.mxu0 0
        %2264 = vmatpush1.bf16.xpose.msra.mxu0 0
        %2265 = vmatprep.subr.bf16.mxu0 0
        %2266 = vmatpush1.bf16.xpose.msra.mxu0 0
        %2267 = vmatprep.subr.bf16.mxu0 0
        %2268 = vmatpush1.bf16.xpose.msra.mxu0 0
        %2269 = vmatprep.subr.bf16.mxu0 0
        %2270 = vmatpush1.bf16.xpose.msra.mxu0 0
        %2271 = vmatprep.subr.bf16.mxu0 0
        %2272 = vmatpush1.bf16.xpose.msra.mxu0 0
        %2273 = vmatprep.subr.bf16.mxu0 0
        %2274 = vmatpush1.bf16.xpose.msra.mxu0 0
        %2275 = vmatprep.subr.bf16.mxu0 0
        %2276 = vmatpush1.bf16.xpose.msra.mxu0 0
        %2277 = vmatprep.mubr.bf16.mxu0 0
        %2278 = vmatmul.mubr.bf16.gmra.mrb[0].mxu0 %v2240
        %v2279 = vpop.f32.mrb[0].mxu0
        %v2280 = vadd.f32 %v564, %v2279
        %v2281 = vpop.f32.mrb[0].mxu0
        %v2282 = vpop.f32.mrb[0].mxu0
        %v2283 = vpop.f32.mrb[0].mxu0
        %2284 = vdwg.mxu0
        %v2285 = vsel %vm771, %v2280, -inf
        %2286 = vmax.xlane.f32.xlu0 %v2285
        %v2287 = vpop.xlane.xlu0 %2286
        %v2288 = vsub.f32 %v2280, %v2287
        %v2289 = vmul.f32 %v2288, 1.442695
        %v2290 = vpow.pop %v2289
        %v2291 = vsel %vm771, %v2290, 0.0
        %2292 = vadd.xlane.f32.xlu0 %v2291
        %v2293 = vpop.xlane.xlu0 %2292
        %v2294 = vrcp.pop %v2293
        %v2295 = vmul.f32 %v2290, %v2294
        %v2296 = vpack.c.bf16 %v2295, %v2295
        %v2298 = vsel %vm771, %v2296, 0
        %v2301 = vsel %vm833, %v2238, 0
        %2303 = vmatprep.subr.bf16.mxu0 0
        %2304 = vmatpush1.bf16.msra.mxu0 %v2301
        %2305 = vmatprep.subr.bf16.mxu0 0
        %2306 = vmatpush1.bf16.msra.mxu0 0
        %2307 = vmatprep.subr.bf16.mxu0 0
        %2308 = vmatpush1.bf16.msra.mxu0 0
        %2309 = vmatprep.subr.bf16.mxu0 0
        %2310 = vmatpush1.bf16.msra.mxu0 0
        %2311 = vmatprep.subr.bf16.mxu0 0
        %2312 = vmatpush1.bf16.msra.mxu0 0
        %2313 = vmatprep.subr.bf16.mxu0 0
        %2314 = vmatpush1.bf16.msra.mxu0 0
        %2315 = vmatprep.subr.bf16.mxu0 0
        %2316 = vmatpush1.bf16.msra.mxu0 0
        %2317 = vmatprep.subr.bf16.mxu0 0
        %2318 = vmatpush1.bf16.msra.mxu0 0
        %2319 = vmatprep.subr.bf16.mxu0 0
        %2320 = vmatpush1.bf16.msra.mxu0 0
        %2321 = vmatprep.subr.bf16.mxu0 0
        %2322 = vmatpush1.bf16.msra.mxu0 0
        %2323 = vmatprep.subr.bf16.mxu0 0
        %2324 = vmatpush1.bf16.msra.mxu0 0
        %2325 = vmatprep.subr.bf16.mxu0 0
        %2326 = vmatpush1.bf16.msra.mxu0 0
        %2327 = vmatprep.subr.bf16.mxu0 0
        %2328 = vmatpush1.bf16.msra.mxu0 0
        %2329 = vmatprep.subr.bf16.mxu0 0
        %2330 = vmatpush1.bf16.msra.mxu0 0
        %2331 = vmatprep.subr.bf16.mxu0 0
        %2332 = vmatpush1.bf16.msra.mxu0 0
        %2333 = vmatprep.subr.bf16.mxu0 0
        %2334 = vmatpush1.bf16.msra.mxu0 0
        %2335 = vmatprep.mubr.bf16.mxu0 0
        %2336 = vmatmul.mubr.bf16.gmra.mrb[0].mxu0 %v2298
        %v2337 = vpop.f32.mrb[0].mxu0
        %v2338 = vadd.f32 0.0, %v2337
        %v2339 = vpop.f32.mrb[0].mxu0
        %v2340 = vpop.f32.mrb[0].mxu0
        %v2341 = vpop.f32.mrb[0].mxu0
        %2342 = vdwg.mxu0
        %v2343 = vpack.c.bf16 %v2338, %v2338
        %2344 = vst.msk [vmem:[#allocation2] sm:$0xf] %vm878, %v2343
        %2346 = vrot.lane.b32.xlu0 %v2106, 120
        %v2347 = vpop.permute.xlu0 %2346
        %2349 = vrot.lane.b32.xlu0 %v2172, 120
        %v2350 = vpop.permute.xlu0 %2349
        %v2352 = vsel %vm771, %v2347, 0
        %v2355 = vsel %vm771, %v2350, 0
        %2357 = vmatprep.subr.bf16.mxu0 0
        %2358 = vmatpush1.bf16.xpose.msra.mxu0 %v2355
        %2359 = vmatprep.subr.bf16.mxu0 0
        %2360 = vmatpush1.bf16.xpose.msra.mxu0 0
        %2361 = vmatprep.subr.bf16.mxu0 0
        %2362 = vmatpush1.bf16.xpose.msra.mxu0 0
        %2363 = vmatprep.subr.bf16.mxu0 0
        %2364 = vmatpush1.bf16.xpose.msra.mxu0 0
        %2365 = vmatprep.subr.bf16.mxu0 0
        %2366 = vmatpush1.bf16.xpose.msra.mxu0 0
        %2367 = vmatprep.subr.bf16.mxu0 0
        %2368 = vmatpush1.bf16.xpose.msra.mxu0 0
        %2369 = vmatprep.subr.bf16.mxu0 0
        %2370 = vmatpush1.bf16.xpose.msra.mxu0 0
        %2371 = vmatprep.subr.bf16.mxu0 0
        %2372 = vmatpush1.bf16.xpose.msra.mxu0 0
        %2373 = vmatprep.subr.bf16.mxu0 0
        %2374 = vmatpush1.bf16.xpose.msra.mxu0 0
        %2375 = vmatprep.subr.bf16.mxu0 0
        %2376 = vmatpush1.bf16.xpose.msra.mxu0 0
        %2377 = vmatprep.subr.bf16.mxu0 0
        %2378 = vmatpush1.bf16.xpose.msra.mxu0 0
        %2379 = vmatprep.subr.bf16.mxu0 0
        %2380 = vmatpush1.bf16.xpose.msra.mxu0 0
        %2381 = vmatprep.subr.bf16.mxu0 0
        %2382 = vmatpush1.bf16.xpose.msra.mxu0 0
        %2383 = vmatprep.subr.bf16.mxu0 0
        %2384 = vmatpush1.bf16.xpose.msra.mxu0 0
        %2385 = vmatprep.subr.bf16.mxu0 0
        %2386 = vmatpush1.bf16.xpose.msra.mxu0 0
        %2387 = vmatprep.subr.bf16.mxu0 0
        %2388 = vmatpush1.bf16.xpose.msra.mxu0 0
        %2389 = vmatprep.mubr.bf16.mxu0 0
        %2390 = vmatmul.mubr.bf16.gmra.mrb[0].mxu0 %v2352
        %v2391 = vpop.f32.mrb[0].mxu0
        %v2392 = vadd.f32 %v564, %v2391
        %v2393 = vpop.f32.mrb[0].mxu0
        %v2394 = vpop.f32.mrb[0].mxu0
        %v2395 = vpop.f32.mrb[0].mxu0
        %2396 = vdwg.mxu0
        %v2397 = vsel %vm771, %v2392, -inf
        %2398 = vmax.xlane.f32.xlu0 %v2397
        %v2399 = vpop.xlane.xlu0 %2398
        %v2400 = vsub.f32 %v2392, %v2399
        %v2401 = vmul.f32 %v2400, 1.442695
        %v2402 = vpow.pop %v2401
        %v2403 = vsel %vm771, %v2402, 0.0
        %2404 = vadd.xlane.f32.xlu0 %v2403
        %v2405 = vpop.xlane.xlu0 %2404
        %v2406 = vrcp.pop %v2405
        %v2407 = vmul.f32 %v2402, %v2406
        %v2408 = vpack.c.bf16 %v2407, %v2407
        %2410 = vrot.lane.b32.xlu0 %v2238, 120
        %v2411 = vpop.permute.xlu0 %2410
        %v2413 = vsel %vm771, %v2408, 0
        %v2416 = vsel %vm833, %v2411, 0
        %2418 = vmatprep.subr.bf16.mxu0 0
        %2419 = vmatpush1.bf16.msra.mxu0 %v2416
        %2420 = vmatprep.subr.bf16.mxu0 0
        %2421 = vmatpush1.bf16.msra.mxu0 0
        %2422 = vmatprep.subr.bf16.mxu0 0
        %2423 = vmatpush1.bf16.msra.mxu0 0
        %2424 = vmatprep.subr.bf16.mxu0 0
        %2425 = vmatpush1.bf16.msra.mxu0 0
        %2426 = vmatprep.subr.bf16.mxu0 0
        %2427 = vmatpush1.bf16.msra.mxu0 0
        %2428 = vmatprep.subr.bf16.mxu0 0
        %2429 = vmatpush1.bf16.msra.mxu0 0
        %2430 = vmatprep.subr.bf16.mxu0 0
        %2431 = vmatpush1.bf16.msra.mxu0 0
        %2432 = vmatprep.subr.bf16.mxu0 0
        %2433 = vmatpush1.bf16.msra.mxu0 0
        %2434 = vmatprep.subr.bf16.mxu0 0
        %2435 = vmatpush1.bf16.msra.mxu0 0
        %2436 = vmatprep.subr.bf16.mxu0 0
        %2437 = vmatpush1.bf16.msra.mxu0 0
        %2438 = vmatprep.subr.bf16.mxu0 0
        %2439 = vmatpush1.bf16.msra.mxu0 0
        %2440 = vmatprep.subr.bf16.mxu0 0
        %2441 = vmatpush1.bf16.msra.mxu0 0
        %2442 = vmatprep.subr.bf16.mxu0 0
        %2443 = vmatpush1.bf16.msra.mxu0 0
        %2444 = vmatprep.subr.bf16.mxu0 0
        %2445 = vmatpush1.bf16.msra.mxu0 0
        %2446 = vmatprep.subr.bf16.mxu0 0
        %2447 = vmatpush1.bf16.msra.mxu0 0
        %2448 = vmatprep.subr.bf16.mxu0 0
        %2449 = vmatpush1.bf16.msra.mxu0 0
        %2450 = vmatprep.mubr.bf16.mxu0 0
        %2451 = vmatmul.mubr.bf16.gmra.mrb[0].mxu0 %v2413
        %v2452 = vpop.f32.mrb[0].mxu0
        %v2453 = vadd.f32 0.0, %v2452
        %v2454 = vpop.f32.mrb[0].mxu0
        %v2455 = vpop.f32.mrb[0].mxu0
        %v2456 = vpop.f32.mrb[0].mxu0
        %2457 = vdwg.mxu0
        %v2458 = vpack.c.bf16 %v2453, %v2453
        %v2460 = vunpack.c.l.b16 %v2458
        %v2461 = vpack.c.b16 %v2460, %v2460
        %2462 = vrot.lane.b32.xlu0 %v2461, 8
        %v2463 = vpop.permute.xlu0 %2462
        %2465 = vst.msk [vmem:[#allocation2] sm:$0xf] %vm1000, %v2463
        %2466 = vrot.lane.b32.xlu0 %v2106, 112
        %v2467 = vpop.permute.xlu0 %2466
        %2468 = vrot.lane.b32.xlu0 %v2172, 112
        %v2469 = vpop.permute.xlu0 %2468
        %v2471 = vsel %vm771, %v2467, 0
        %v2474 = vsel %vm771, %v2469, 0
        %2476 = vmatprep.subr.bf16.mxu0 0
        %2477 = vmatpush1.bf16.xpose.msra.mxu0 %v2474
        %2478 = vmatprep.subr.bf16.mxu0 0
        %2479 = vmatpush1.bf16.xpose.msra.mxu0 0
        %2480 = vmatprep.subr.bf16.mxu0 0
        %2481 = vmatpush1.bf16.xpose.msra.mxu0 0
        %2482 = vmatprep.subr.bf16.mxu0 0
        %2483 = vmatpush1.bf16.xpose.msra.mxu0 0
        %2484 = vmatprep.subr.bf16.mxu0 0
        %2485 = vmatpush1.bf16.xpose.msra.mxu0 0
        %2486 = vmatprep.subr.bf16.mxu0 0
        %2487 = vmatpush1.bf16.xpose.msra.mxu0 0
        %2488 = vmatprep.subr.bf16.mxu0 0
        %2489 = vmatpush1.bf16.xpose.msra.mxu0 0
        %2490 = vmatprep.subr.bf16.mxu0 0
        %2491 = vmatpush1.bf16.xpose.msra.mxu0 0
        %2492 = vmatprep.subr.bf16.mxu0 0
        %2493 = vmatpush1.bf16.xpose.msra.mxu0 0
        %2494 = vmatprep.subr.bf16.mxu0 0
        %2495 = vmatpush1.bf16.xpose.msra.mxu0 0
        %2496 = vmatprep.subr.bf16.mxu0 0
        %2497 = vmatpush1.bf16.xpose.msra.mxu0 0
        %2498 = vmatprep.subr.bf16.mxu0 0
        %2499 = vmatpush1.bf16.xpose.msra.mxu0 0
        %2500 = vmatprep.subr.bf16.mxu0 0
        %2501 = vmatpush1.bf16.xpose.msra.mxu0 0
        %2502 = vmatprep.subr.bf16.mxu0 0
        %2503 = vmatpush1.bf16.xpose.msra.mxu0 0
        %2504 = vmatprep.subr.bf16.mxu0 0
        %2505 = vmatpush1.bf16.xpose.msra.mxu0 0
        %2506 = vmatprep.subr.bf16.mxu0 0
        %2507 = vmatpush1.bf16.xpose.msra.mxu0 0
        %2508 = vmatprep.mubr.bf16.mxu0 0
        %2509 = vmatmul.mubr.bf16.gmra.mrb[0].mxu0 %v2471
        %v2510 = vpop.f32.mrb[0].mxu0
        %v2511 = vadd.f32 %v564, %v2510
        %v2512 = vpop.f32.mrb[0].mxu0
        %v2513 = vpop.f32.mrb[0].mxu0
        %v2514 = vpop.f32.mrb[0].mxu0
        %2515 = vdwg.mxu0
        %v2516 = vsel %vm771, %v2511, -inf
        %2517 = vmax.xlane.f32.xlu0 %v2516
        %v2518 = vpop.xlane.xlu0 %2517
        %v2519 = vsub.f32 %v2511, %v2518
        %v2520 = vmul.f32 %v2519, 1.442695
        %v2521 = vpow.pop %v2520
        %v2522 = vsel %vm771, %v2521, 0.0
        %2523 = vadd.xlane.f32.xlu0 %v2522
        %v2524 = vpop.xlane.xlu0 %2523
        %v2525 = vrcp.pop %v2524
        %v2526 = vmul.f32 %v2521, %v2525
        %v2527 = vpack.c.bf16 %v2526, %v2526
        %2528 = vrot.lane.b32.xlu0 %v2238, 112
        %v2529 = vpop.permute.xlu0 %2528
        %v2531 = vsel %vm771, %v2527, 0
        %v2534 = vsel %vm833, %v2529, 0
        %2536 = vmatprep.subr.bf16.mxu0 0
        %2537 = vmatpush1.bf16.msra.mxu0 %v2534
        %2538 = vmatprep.subr.bf16.mxu0 0
        %2539 = vmatpush1.bf16.msra.mxu0 0
        %2540 = vmatprep.subr.bf16.mxu0 0
        %2541 = vmatpush1.bf16.msra.mxu0 0
        %2542 = vmatprep.subr.bf16.mxu0 0
        %2543 = vmatpush1.bf16.msra.mxu0 0
        %2544 = vmatprep.subr.bf16.mxu0 0
        %2545 = vmatpush1.bf16.msra.mxu0 0
        %2546 = vmatprep.subr.bf16.mxu0 0
        %2547 = vmatpush1.bf16.msra.mxu0 0
        %2548 = vmatprep.subr.bf16.mxu0 0
        %2549 = vmatpush1.bf16.msra.mxu0 0
        %2550 = vmatprep.subr.bf16.mxu0 0
        %2551 = vmatpush1.bf16.msra.mxu0 0
        %2552 = vmatprep.subr.bf16.mxu0 0
        %2553 = vmatpush1.bf16.msra.mxu0 0
        %2554 = vmatprep.subr.bf16.mxu0 0
        %2555 = vmatpush1.bf16.msra.mxu0 0
        %2556 = vmatprep.subr.bf16.mxu0 0
        %2557 = vmatpush1.bf16.msra.mxu0 0
        %2558 = vmatprep.subr.bf16.mxu0 0
        %2559 = vmatpush1.bf16.msra.mxu0 0
        %2560 = vmatprep.subr.bf16.mxu0 0
        %2561 = vmatpush1.bf16.msra.mxu0 0
        %2562 = vmatprep.subr.bf16.mxu0 0
        %2563 = vmatpush1.bf16.msra.mxu0 0
        %2564 = vmatprep.subr.bf16.mxu0 0
        %2565 = vmatpush1.bf16.msra.mxu0 0
        %2566 = vmatprep.subr.bf16.mxu0 0
        %2567 = vmatpush1.bf16.msra.mxu0 0
        %2568 = vmatprep.mubr.bf16.mxu0 0
        %2569 = vmatmul.mubr.bf16.gmra.mrb[0].mxu0 %v2531
        %v2570 = vpop.f32.mrb[0].mxu0
        %v2571 = vadd.f32 0.0, %v2570
        %v2572 = vpop.f32.mrb[0].mxu0
        %v2573 = vpop.f32.mrb[0].mxu0
        %v2574 = vpop.f32.mrb[0].mxu0
        %2575 = vdwg.mxu0
        %v2576 = vpack.c.bf16 %v2571, %v2571
        %v2578 = vunpack.c.l.b16 %v2576
        %v2579 = vpack.c.b16 %v2578, %v2578
        %2580 = vrot.lane.b32.xlu0 %v2579, 16
        %v2581 = vpop.permute.xlu0 %2580
        %2583 = vst.msk [vmem:[#allocation2] sm:$0xf] %vm1119, %v2581
        %2584 = vrot.lane.b32.xlu0 %v2106, 104
        %v2585 = vpop.permute.xlu0 %2584
        %2586 = vrot.lane.b32.xlu0 %v2172, 104
        %v2587 = vpop.permute.xlu0 %2586
        %v2589 = vsel %vm771, %v2585, 0
        %v2592 = vsel %vm771, %v2587, 0
        %2594 = vmatprep.subr.bf16.mxu0 0
        %2595 = vmatpush1.bf16.xpose.msra.mxu0 %v2592
        %2596 = vmatprep.subr.bf16.mxu0 0
        %2597 = vmatpush1.bf16.xpose.msra.mxu0 0
        %2598 = vmatprep.subr.bf16.mxu0 0
        %2599 = vmatpush1.bf16.xpose.msra.mxu0 0
        %2600 = vmatprep.subr.bf16.mxu0 0
        %2601 = vmatpush1.bf16.xpose.msra.mxu0 0
        %2602 = vmatprep.subr.bf16.mxu0 0
        %2603 = vmatpush1.bf16.xpose.msra.mxu0 0
        %2604 = vmatprep.subr.bf16.mxu0 0
        %2605 = vmatpush1.bf16.xpose.msra.mxu0 0
        %2606 = vmatprep.subr.bf16.mxu0 0
        %2607 = vmatpush1.bf16.xpose.msra.mxu0 0
        %2608 = vmatprep.subr.bf16.mxu0 0
        %2609 = vmatpush1.bf16.xpose.msra.mxu0 0
        %2610 = vmatprep.subr.bf16.mxu0 0
        %2611 = vmatpush1.bf16.xpose.msra.mxu0 0
        %2612 = vmatprep.subr.bf16.mxu0 0
        %2613 = vmatpush1.bf16.xpose.msra.mxu0 0
        %2614 = vmatprep.subr.bf16.mxu0 0
        %2615 = vmatpush1.bf16.xpose.msra.mxu0 0
        %2616 = vmatprep.subr.bf16.mxu0 0
        %2617 = vmatpush1.bf16.xpose.msra.mxu0 0
        %2618 = vmatprep.subr.bf16.mxu0 0
        %2619 = vmatpush1.bf16.xpose.msra.mxu0 0
        %2620 = vmatprep.subr.bf16.mxu0 0
        %2621 = vmatpush1.bf16.xpose.msra.mxu0 0
        %2622 = vmatprep.subr.bf16.mxu0 0
        %2623 = vmatpush1.bf16.xpose.msra.mxu0 0
        %2624 = vmatprep.subr.bf16.mxu0 0
        %2625 = vmatpush1.bf16.xpose.msra.mxu0 0
        %2626 = vmatprep.mubr.bf16.mxu0 0
        %2627 = vmatmul.mubr.bf16.gmra.mrb[0].mxu0 %v2589
        %v2628 = vpop.f32.mrb[0].mxu0
        %v2629 = vadd.f32 %v564, %v2628
        %v2630 = vpop.f32.mrb[0].mxu0
        %v2631 = vpop.f32.mrb[0].mxu0
        %v2632 = vpop.f32.mrb[0].mxu0
        %2633 = vdwg.mxu0
        %v2634 = vsel %vm771, %v2629, -inf
        %2635 = vmax.xlane.f32.xlu0 %v2634
        %v2636 = vpop.xlane.xlu0 %2635
        %v2637 = vsub.f32 %v2629, %v2636
        %v2638 = vmul.f32 %v2637, 1.442695
        %v2639 = vpow.pop %v2638
        %v2640 = vsel %vm771, %v2639, 0.0
        %2641 = vadd.xlane.f32.xlu0 %v2640
        %v2642 = vpop.xlane.xlu0 %2641
        %v2643 = vrcp.pop %v2642
        %v2644 = vmul.f32 %v2639, %v2643
        %v2645 = vpack.c.bf16 %v2644, %v2644
        %2646 = vrot.lane.b32.xlu0 %v2238, 104
        %v2647 = vpop.permute.xlu0 %2646
        %v2649 = vsel %vm771, %v2645, 0
        %v2652 = vsel %vm833, %v2647, 0
        %2654 = vmatprep.subr.bf16.mxu0 0
        %2655 = vmatpush1.bf16.msra.mxu0 %v2652
        %2656 = vmatprep.subr.bf16.mxu0 0
        %2657 = vmatpush1.bf16.msra.mxu0 0
        %2658 = vmatprep.subr.bf16.mxu0 0
        %2659 = vmatpush1.bf16.msra.mxu0 0
        %2660 = vmatprep.subr.bf16.mxu0 0
        %2661 = vmatpush1.bf16.msra.mxu0 0
        %2662 = vmatprep.subr.bf16.mxu0 0
        %2663 = vmatpush1.bf16.msra.mxu0 0
        %2664 = vmatprep.subr.bf16.mxu0 0
        %2665 = vmatpush1.bf16.msra.mxu0 0
        %2666 = vmatprep.subr.bf16.mxu0 0
        %2667 = vmatpush1.bf16.msra.mxu0 0
        %2668 = vmatprep.subr.bf16.mxu0 0
        %2669 = vmatpush1.bf16.msra.mxu0 0
        %2670 = vmatprep.subr.bf16.mxu0 0
        %2671 = vmatpush1.bf16.msra.mxu0 0
        %2672 = vmatprep.subr.bf16.mxu0 0
        %2673 = vmatpush1.bf16.msra.mxu0 0
        %2674 = vmatprep.subr.bf16.mxu0 0
        %2675 = vmatpush1.bf16.msra.mxu0 0
        %2676 = vmatprep.subr.bf16.mxu0 0
        %2677 = vmatpush1.bf16.msra.mxu0 0
        %2678 = vmatprep.subr.bf16.mxu0 0
        %2679 = vmatpush1.bf16.msra.mxu0 0
        %2680 = vmatprep.subr.bf16.mxu0 0
        %2681 = vmatpush1.bf16.msra.mxu0 0
        %2682 = vmatprep.subr.bf16.mxu0 0
        %2683 = vmatpush1.bf16.msra.mxu0 0
        %2684 = vmatprep.subr.bf16.mxu0 0
        %2685 = vmatpush1.bf16.msra.mxu0 0
        %2686 = vmatprep.mubr.bf16.mxu0 0
        %2687 = vmatmul.mubr.bf16.gmra.mrb[0].mxu0 %v2649
        %v2688 = vpop.f32.mrb[0].mxu0
        %v2689 = vadd.f32 0.0, %v2688
        %v2690 = vpop.f32.mrb[0].mxu0
        %v2691 = vpop.f32.mrb[0].mxu0
        %v2692 = vpop.f32.mrb[0].mxu0
        %2693 = vdwg.mxu0
        %v2694 = vpack.c.bf16 %v2689, %v2689
        %v2696 = vunpack.c.l.b16 %v2694
        %v2697 = vpack.c.b16 %v2696, %v2696
        %2698 = vrot.lane.b32.xlu0 %v2697, 24
        %v2699 = vpop.permute.xlu0 %2698
        %2701 = vst.msk [vmem:[#allocation2] sm:$0xf] %vm1238, %v2699
        %v2702 = vld [vmem:[#allocation2] sm:$0xf]
        %s2703 = scalar_lea.vmem [#allocation12], 32
        %v2704 = vld [vmem:[%s2703] sm:$0xf]
        %v2705 = vld [vmem:[%s2703 + $0x4] sm:$0xf]
        %v2706 = vld [vmem:[%s2703 + $0x8] sm:$0xf]
        %v2707 = vld [vmem:[%s2703 + $0xc] sm:$0xf]
        %s2708 = scalar_lea.vmem [#allocation14], 2
        %v2709 = vld [vmem:[%s2708] sm:$0x1]
        %v2711 = vlaneseq
        %v2712 = vshrl.u32 %v2711, 7
        %v2713 = vsub.s32 0, %v2712
        %v2714 = vrot.slane %v2709, %v2713
        %v2720 = vunpack.c.l.b16 %v2704
        %v2721 = vunpack.c.l.b16 %v2705
        %v2722 = vunpack.c.l.b16 %v2706
        %v2723 = vunpack.c.l.b16 %v2707
        %v2724 = vpack.c.b16 %v2721, %v2720
        %v2725 = vpack.c.b16 %v2723, %v2722
        %v2729 = vsel %vm591, %v2702, 0
        %2731 = vmatprep.subr.bf16.mxu0 0
        %2732 = vmatpush1.bf16.msra.mxu0 %v2724
        %2733 = vmatprep.subr.bf16.mxu0 0
        %2734 = vmatpush1.bf16.msra.mxu0 %v2725
        %2735 = vmatprep.subr.bf16.mxu0 0
        %2736 = vmatpush1.bf16.msra.mxu0 0
        %2737 = vmatprep.subr.bf16.mxu0 0
        %2738 = vmatpush1.bf16.msra.mxu0 0
        %2739 = vmatprep.subr.bf16.mxu0 0
        %2740 = vmatpush1.bf16.msra.mxu0 0
        %2741 = vmatprep.subr.bf16.mxu0 0
        %2742 = vmatpush1.bf16.msra.mxu0 0
        %2743 = vmatprep.subr.bf16.mxu0 0
        %2744 = vmatpush1.bf16.msra.mxu0 0
        %2745 = vmatprep.subr.bf16.mxu0 0
        %2746 = vmatpush1.bf16.msra.mxu0 0
        %2747 = vmatprep.subr.bf16.mxu0 0
        %2748 = vmatpush1.bf16.msra.mxu0 0
        %2749 = vmatprep.subr.bf16.mxu0 0
        %2750 = vmatpush1.bf16.msra.mxu0 0
        %2751 = vmatprep.subr.bf16.mxu0 0
        %2752 = vmatpush1.bf16.msra.mxu0 0
        %2753 = vmatprep.subr.bf16.mxu0 0
        %2754 = vmatpush1.bf16.msra.mxu0 0
        %2755 = vmatprep.subr.bf16.mxu0 0
        %2756 = vmatpush1.bf16.msra.mxu0 0
        %2757 = vmatprep.subr.bf16.mxu0 0
        %2758 = vmatpush1.bf16.msra.mxu0 0
        %2759 = vmatprep.subr.bf16.mxu0 0
        %2760 = vmatpush1.bf16.msra.mxu0 0
        %2761 = vmatprep.subr.bf16.mxu0 0
        %2762 = vmatpush1.bf16.msra.mxu0 0
        %2763 = vmatprep.mubr.bf16.mxu0 0
        %2764 = vmatmul.mubr.bf16.gmra.mrb[0].mxu0 %v2729
        %v2765 = vpop.f32.mrb[0].mxu0
        %v2766 = vadd.f32 %v2714, %v2765
        %v2767 = vpop.f32.mrb[0].mxu0
        %v2768 = vpop.f32.mrb[0].mxu0
        %v2769 = vpop.f32.mrb[0].mxu0
        %2770 = vdwg.mxu0
        %v2771 = vpack.c.bf16 %v2766, %v2766
        %s2772 = scalar_lea.vmem [#allocation9], 144
        %v2773 = vld [vmem:[%s2772] sm:$0xf]
        %v2774 = vld [vmem:[%s2772 + $0x4] sm:$0xf]
        %v2775 = vld [vmem:[%s2772 + $0x8] sm:$0xf]
        %v2776 = vld [vmem:[%s2772 + $0xc] sm:$0xf]
        %s2777 = scalar_lea.vmem [#allocation11], 9
        %v2778 = vld [vmem:[%s2777] sm:$0x1]
        %v2780 = vlaneseq
        %v2781 = vshrl.u32 %v2780, 7
        %v2782 = vsub.s32 0, %v2781
        %v2783 = vrot.slane %v2778, %v2782
        %v2789 = vunpack.c.l.b16 %v2773
        %v2790 = vunpack.c.l.b16 %v2774
        %v2791 = vunpack.c.l.b16 %v2775
        %v2792 = vunpack.c.l.b16 %v2776
        %v2793 = vpack.c.b16 %v2790, %v2789
        %v2794 = vpack.c.b16 %v2792, %v2791
        %v2798 = vsel %vm591, %v2771, 0
        %2800 = vmatprep.subr.bf16.mxu0 0
        %2801 = vmatpush1.bf16.msra.mxu0 %v2793
        %2802 = vmatprep.subr.bf16.mxu0 0
        %2803 = vmatpush1.bf16.msra.mxu0 %v2794
        %2804 = vmatprep.subr.bf16.mxu0 0
        %2805 = vmatpush1.bf16.msra.mxu0 0
        %2806 = vmatprep.subr.bf16.mxu0 0
        %2807 = vmatpush1.bf16.msra.mxu0 0
        %2808 = vmatprep.subr.bf16.mxu0 0
        %2809 = vmatpush1.bf16.msra.mxu0 0
        %2810 = vmatprep.subr.bf16.mxu0 0
        %2811 = vmatpush1.bf16.msra.mxu0 0
        %2812 = vmatprep.subr.bf16.mxu0 0
        %2813 = vmatpush1.bf16.msra.mxu0 0
        %2814 = vmatprep.subr.bf16.mxu0 0
        %2815 = vmatpush1.bf16.msra.mxu0 0
        %2816 = vmatprep.subr.bf16.mxu0 0
        %2817 = vmatpush1.bf16.msra.mxu0 0
        %2818 = vmatprep.subr.bf16.mxu0 0
        %2819 = vmatpush1.bf16.msra.mxu0 0
        %2820 = vmatprep.subr.bf16.mxu0 0
        %2821 = vmatpush1.bf16.msra.mxu0 0
        %2822 = vmatprep.subr.bf16.mxu0 0
        %2823 = vmatpush1.bf16.msra.mxu0 0
        %2824 = vmatprep.subr.bf16.mxu0 0
        %2825 = vmatpush1.bf16.msra.mxu0 0
        %2826 = vmatprep.subr.bf16.mxu0 0
        %2827 = vmatpush1.bf16.msra.mxu0 0
        %2828 = vmatprep.subr.bf16.mxu0 0
        %2829 = vmatpush1.bf16.msra.mxu0 0
        %2830 = vmatprep.subr.bf16.mxu0 0
        %2831 = vmatpush1.bf16.msra.mxu0 0
        %2832 = vmatprep.mubr.bf16.mxu0 0
        %2833 = vmatmul.mubr.bf16.gmra.mrb[0].mxu0 %v2798
        %v2834 = vpop.f32.mrb[0].mxu0
        %v2835 = vadd.f32 %v2783, %v2834
        %v2836 = vpop.f32.mrb[0].mxu0
        %v2837 = vpop.f32.mrb[0].mxu0
        %v2838 = vpop.f32.mrb[0].mxu0
        %2839 = vdwg.mxu0
        %v2840 = vpack.c.bf16 %v2835, %v2835
        %s2841 = scalar_lea.vmem [#allocation9], 160
        %v2842 = vld [vmem:[%s2841] sm:$0xf]
        %v2843 = vld [vmem:[%s2841 + $0x4] sm:$0xf]
        %v2844 = vld [vmem:[%s2841 + $0x8] sm:$0xf]
        %v2845 = vld [vmem:[%s2841 + $0xc] sm:$0xf]
        %s2846 = scalar_lea.vmem [#allocation11], 10
        %v2847 = vld [vmem:[%s2846] sm:$0x1]
        %v2849 = vlaneseq
        %v2850 = vshrl.u32 %v2849, 7
        %v2851 = vsub.s32 0, %v2850
        %v2852 = vrot.slane %v2847, %v2851
        %v2858 = vunpack.c.l.b16 %v2842
        %v2859 = vunpack.c.l.b16 %v2843
        %v2860 = vunpack.c.l.b16 %v2844
        %v2861 = vunpack.c.l.b16 %v2845
        %v2862 = vpack.c.b16 %v2859, %v2858
        %v2863 = vpack.c.b16 %v2861, %v2860
        %2866 = vmatprep.subr.bf16.mxu0 0
        %2867 = vmatpush1.bf16.msra.mxu0 %v2862
        %2868 = vmatprep.subr.bf16.mxu0 0
        %2869 = vmatpush1.bf16.msra.mxu0 %v2863
        %2870 = vmatprep.subr.bf16.mxu0 0
        %2871 = vmatpush1.bf16.msra.mxu0 0
        %2872 = vmatprep.subr.bf16.mxu0 0
        %2873 = vmatpush1.bf16.msra.mxu0 0
        %2874 = vmatprep.subr.bf16.mxu0 0
        %2875 = vmatpush1.bf16.msra.mxu0 0
        %2876 = vmatprep.subr.bf16.mxu0 0
        %2877 = vmatpush1.bf16.msra.mxu0 0
        %2878 = vmatprep.subr.bf16.mxu0 0
        %2879 = vmatpush1.bf16.msra.mxu0 0
        %2880 = vmatprep.subr.bf16.mxu0 0
        %2881 = vmatpush1.bf16.msra.mxu0 0
        %2882 = vmatprep.subr.bf16.mxu0 0
        %2883 = vmatpush1.bf16.msra.mxu0 0
        %2884 = vmatprep.subr.bf16.mxu0 0
        %2885 = vmatpush1.bf16.msra.mxu0 0
        %2886 = vmatprep.subr.bf16.mxu0 0
        %2887 = vmatpush1.bf16.msra.mxu0 0
        %2888 = vmatprep.subr.bf16.mxu0 0
        %2889 = vmatpush1.bf16.msra.mxu0 0
        %2890 = vmatprep.subr.bf16.mxu0 0
        %2891 = vmatpush1.bf16.msra.mxu0 0
        %2892 = vmatprep.subr.bf16.mxu0 0
        %2893 = vmatpush1.bf16.msra.mxu0 0
        %2894 = vmatprep.subr.bf16.mxu0 0
        %2895 = vmatpush1.bf16.msra.mxu0 0
        %2896 = vmatprep.subr.bf16.mxu0 0
        %2897 = vmatpush1.bf16.msra.mxu0 0
        %2898 = vmatprep.mubr.bf16.mxu0 0
        %2899 = vmatmul.mubr.bf16.gmra.mrb[0].mxu0 %v728
        %v2900 = vpop.f32.mrb[0].mxu0
        %v2901 = vadd.f32 %v2852, %v2900
        %v2902 = vpop.f32.mrb[0].mxu0
        %v2903 = vpop.f32.mrb[0].mxu0
        %v2904 = vpop.f32.mrb[0].mxu0
        %2905 = vdwg.mxu0
        %v2906 = vpack.c.bf16 %v2901, %v2901
        %s2907 = scalar_lea.vmem [#allocation9], 176
        %v2908 = vld [vmem:[%s2907] sm:$0xf]
        %v2909 = vld [vmem:[%s2907 + $0x4] sm:$0xf]
        %v2910 = vld [vmem:[%s2907 + $0x8] sm:$0xf]
        %v2911 = vld [vmem:[%s2907 + $0xc] sm:$0xf]
        %s2912 = scalar_lea.vmem [#allocation11], 11
        %v2913 = vld [vmem:[%s2912] sm:$0x1]
        %v2915 = vlaneseq
        %v2916 = vshrl.u32 %v2915, 7
        %v2917 = vsub.s32 0, %v2916
        %v2918 = vrot.slane %v2913, %v2917
        %v2924 = vunpack.c.l.b16 %v2908
        %v2925 = vunpack.c.l.b16 %v2909
        %v2926 = vunpack.c.l.b16 %v2910
        %v2927 = vunpack.c.l.b16 %v2911
        %v2928 = vpack.c.b16 %v2925, %v2924
        %v2929 = vpack.c.b16 %v2927, %v2926
        %2932 = vmatprep.subr.bf16.mxu0 0
        %2933 = vmatpush1.bf16.msra.mxu0 %v2928
        %2934 = vmatprep.subr.bf16.mxu0 0
        %2935 = vmatpush1.bf16.msra.mxu0 %v2929
        %2936 = vmatprep.subr.bf16.mxu0 0
        %2937 = vmatpush1.bf16.msra.mxu0 0
        %2938 = vmatprep.subr.bf16.mxu0 0
        %2939 = vmatpush1.bf16.msra.mxu0 0
        %2940 = vmatprep.subr.bf16.mxu0 0
        %2941 = vmatpush1.bf16.msra.mxu0 0
        %2942 = vmatprep.subr.bf16.mxu0 0
        %2943 = vmatpush1.bf16.msra.mxu0 0
        %2944 = vmatprep.subr.bf16.mxu0 0
        %2945 = vmatpush1.bf16.msra.mxu0 0
        %2946 = vmatprep.subr.bf16.mxu0 0
        %2947 = vmatpush1.bf16.msra.mxu0 0
        %2948 = vmatprep.subr.bf16.mxu0 0
        %2949 = vmatpush1.bf16.msra.mxu0 0
        %2950 = vmatprep.subr.bf16.mxu0 0
        %2951 = vmatpush1.bf16.msra.mxu0 0
        %2952 = vmatprep.subr.bf16.mxu0 0
        %2953 = vmatpush1.bf16.msra.mxu0 0
        %2954 = vmatprep.subr.bf16.mxu0 0
        %2955 = vmatpush1.bf16.msra.mxu0 0
        %2956 = vmatprep.subr.bf16.mxu0 0
        %2957 = vmatpush1.bf16.msra.mxu0 0
        %2958 = vmatprep.subr.bf16.mxu0 0
        %2959 = vmatpush1.bf16.msra.mxu0 0
        %2960 = vmatprep.subr.bf16.mxu0 0
        %2961 = vmatpush1.bf16.msra.mxu0 0
        %2962 = vmatprep.subr.bf16.mxu0 0
        %2963 = vmatpush1.bf16.msra.mxu0 0
        %2964 = vmatprep.mubr.bf16.mxu0 0
        %2965 = vmatmul.mubr.bf16.gmra.mrb[0].mxu0 %v728
        %v2966 = vpop.f32.mrb[0].mxu0
        %v2967 = vadd.f32 %v2918, %v2966
        %v2968 = vpop.f32.mrb[0].mxu0
        %v2969 = vpop.f32.mrb[0].mxu0
        %v2970 = vpop.f32.mrb[0].mxu0
        %2971 = vdwg.mxu0
        %v2972 = vpack.c.bf16 %v2967, %v2967
        %v2974 = vsel %vm771, %v2840, 0
        %v2977 = vsel %vm771, %v2906, 0
        %2979 = vmatprep.subr.bf16.mxu0 0
        %2980 = vmatpush1.bf16.xpose.msra.mxu0 %v2977
        %2981 = vmatprep.subr.bf16.mxu0 0
        %2982 = vmatpush1.bf16.xpose.msra.mxu0 0
        %2983 = vmatprep.subr.bf16.mxu0 0
        %2984 = vmatpush1.bf16.xpose.msra.mxu0 0
        %2985 = vmatprep.subr.bf16.mxu0 0
        %2986 = vmatpush1.bf16.xpose.msra.mxu0 0
        %2987 = vmatprep.subr.bf16.mxu0 0
        %2988 = vmatpush1.bf16.xpose.msra.mxu0 0
        %2989 = vmatprep.subr.bf16.mxu0 0
        %2990 = vmatpush1.bf16.xpose.msra.mxu0 0
        %2991 = vmatprep.subr.bf16.mxu0 0
        %2992 = vmatpush1.bf16.xpose.msra.mxu0 0
        %2993 = vmatprep.subr.bf16.mxu0 0
        %2994 = vmatpush1.bf16.xpose.msra.mxu0 0
        %2995 = vmatprep.subr.bf16.mxu0 0
        %2996 = vmatpush1.bf16.xpose.msra.mxu0 0
        %2997 = vmatprep.subr.bf16.mxu0 0
        %2998 = vmatpush1.bf16.xpose.msra.mxu0 0
        %2999 = vmatprep.subr.bf16.mxu0 0
        %3000 = vmatpush1.bf16.xpose.msra.mxu0 0
        %3001 = vmatprep.subr.bf16.mxu0 0
        %3002 = vmatpush1.bf16.xpose.msra.mxu0 0
        %3003 = vmatprep.subr.bf16.mxu0 0
        %3004 = vmatpush1.bf16.xpose.msra.mxu0 0
        %3005 = vmatprep.subr.bf16.mxu0 0
        %3006 = vmatpush1.bf16.xpose.msra.mxu0 0
        %3007 = vmatprep.subr.bf16.mxu0 0
        %3008 = vmatpush1.bf16.xpose.msra.mxu0 0
        %3009 = vmatprep.subr.bf16.mxu0 0
        %3010 = vmatpush1.bf16.xpose.msra.mxu0 0
        %3011 = vmatprep.mubr.bf16.mxu0 0
        %3012 = vmatmul.mubr.bf16.gmra.mrb[0].mxu0 %v2974
        %v3013 = vpop.f32.mrb[0].mxu0
        %v3014 = vadd.f32 %v564, %v3013
        %v3015 = vpop.f32.mrb[0].mxu0
        %v3016 = vpop.f32.mrb[0].mxu0
        %v3017 = vpop.f32.mrb[0].mxu0
        %3018 = vdwg.mxu0
        %v3019 = vsel %vm771, %v3014, -inf
        %3020 = vmax.xlane.f32.xlu0 %v3019
        %v3021 = vpop.xlane.xlu0 %3020
        %v3022 = vsub.f32 %v3014, %v3021
        %v3023 = vmul.f32 %v3022, 1.442695
        %v3024 = vpow.pop %v3023
        %v3025 = vsel %vm771, %v3024, 0.0
        %3026 = vadd.xlane.f32.xlu0 %v3025
        %v3027 = vpop.xlane.xlu0 %3026
        %v3028 = vrcp.pop %v3027
        %v3029 = vmul.f32 %v3024, %v3028
        %v3030 = vpack.c.bf16 %v3029, %v3029
        %v3032 = vsel %vm771, %v3030, 0
        %v3035 = vsel %vm833, %v2972, 0
        %3037 = vmatprep.subr.bf16.mxu0 0
        %3038 = vmatpush1.bf16.msra.mxu0 %v3035
        %3039 = vmatprep.subr.bf16.mxu0 0
        %3040 = vmatpush1.bf16.msra.mxu0 0
        %3041 = vmatprep.subr.bf16.mxu0 0
        %3042 = vmatpush1.bf16.msra.mxu0 0
        %3043 = vmatprep.subr.bf16.mxu0 0
        %3044 = vmatpush1.bf16.msra.mxu0 0
        %3045 = vmatprep.subr.bf16.mxu0 0
        %3046 = vmatpush1.bf16.msra.mxu0 0
        %3047 = vmatprep.subr.bf16.mxu0 0
        %3048 = vmatpush1.bf16.msra.mxu0 0
        %3049 = vmatprep.subr.bf16.mxu0 0
        %3050 = vmatpush1.bf16.msra.mxu0 0
        %3051 = vmatprep.subr.bf16.mxu0 0
        %3052 = vmatpush1.bf16.msra.mxu0 0
        %3053 = vmatprep.subr.bf16.mxu0 0
        %3054 = vmatpush1.bf16.msra.mxu0 0
        %3055 = vmatprep.subr.bf16.mxu0 0
        %3056 = vmatpush1.bf16.msra.mxu0 0
        %3057 = vmatprep.subr.bf16.mxu0 0
        %3058 = vmatpush1.bf16.msra.mxu0 0
        %3059 = vmatprep.subr.bf16.mxu0 0
        %3060 = vmatpush1.bf16.msra.mxu0 0
        %3061 = vmatprep.subr.bf16.mxu0 0
        %3062 = vmatpush1.bf16.msra.mxu0 0
        %3063 = vmatprep.subr.bf16.mxu0 0
        %3064 = vmatpush1.bf16.msra.mxu0 0
        %3065 = vmatprep.subr.bf16.mxu0 0
        %3066 = vmatpush1.bf16.msra.mxu0 0
        %3067 = vmatprep.subr.bf16.mxu0 0
        %3068 = vmatpush1.bf16.msra.mxu0 0
        %3069 = vmatprep.mubr.bf16.mxu0 0
        %3070 = vmatmul.mubr.bf16.gmra.mrb[0].mxu0 %v3032
        %v3071 = vpop.f32.mrb[0].mxu0
        %v3072 = vadd.f32 0.0, %v3071
        %v3073 = vpop.f32.mrb[0].mxu0
        %v3074 = vpop.f32.mrb[0].mxu0
        %v3075 = vpop.f32.mrb[0].mxu0
        %3076 = vdwg.mxu0
        %v3077 = vpack.c.bf16 %v3072, %v3072
        %3078 = vst.msk [vmem:[#allocation2] sm:$0xf] %vm878, %v3077
        %3080 = vrot.lane.b32.xlu0 %v2840, 120
        %v3081 = vpop.permute.xlu0 %3080
        %3083 = vrot.lane.b32.xlu0 %v2906, 120
        %v3084 = vpop.permute.xlu0 %3083
        %v3086 = vsel %vm771, %v3081, 0
        %v3089 = vsel %vm771, %v3084, 0
        %3091 = vmatprep.subr.bf16.mxu0 0
        %3092 = vmatpush1.bf16.xpose.msra.mxu0 %v3089
        %3093 = vmatprep.subr.bf16.mxu0 0
        %3094 = vmatpush1.bf16.xpose.msra.mxu0 0
        %3095 = vmatprep.subr.bf16.mxu0 0
        %3096 = vmatpush1.bf16.xpose.msra.mxu0 0
        %3097 = vmatprep.subr.bf16.mxu0 0
        %3098 = vmatpush1.bf16.xpose.msra.mxu0 0
        %3099 = vmatprep.subr.bf16.mxu0 0
        %3100 = vmatpush1.bf16.xpose.msra.mxu0 0
        %3101 = vmatprep.subr.bf16.mxu0 0
        %3102 = vmatpush1.bf16.xpose.msra.mxu0 0
        %3103 = vmatprep.subr.bf16.mxu0 0
        %3104 = vmatpush1.bf16.xpose.msra.mxu0 0
        %3105 = vmatprep.subr.bf16.mxu0 0
        %3106 = vmatpush1.bf16.xpose.msra.mxu0 0
        %3107 = vmatprep.subr.bf16.mxu0 0
        %3108 = vmatpush1.bf16.xpose.msra.mxu0 0
        %3109 = vmatprep.subr.bf16.mxu0 0
        %3110 = vmatpush1.bf16.xpose.msra.mxu0 0
        %3111 = vmatprep.subr.bf16.mxu0 0
        %3112 = vmatpush1.bf16.xpose.msra.mxu0 0
        %3113 = vmatprep.subr.bf16.mxu0 0
        %3114 = vmatpush1.bf16.xpose.msra.mxu0 0
        %3115 = vmatprep.subr.bf16.mxu0 0
        %3116 = vmatpush1.bf16.xpose.msra.mxu0 0
        %3117 = vmatprep.subr.bf16.mxu0 0
        %3118 = vmatpush1.bf16.xpose.msra.mxu0 0
        %3119 = vmatprep.subr.bf16.mxu0 0
        %3120 = vmatpush1.bf16.xpose.msra.mxu0 0
        %3121 = vmatprep.subr.bf16.mxu0 0
        %3122 = vmatpush1.bf16.xpose.msra.mxu0 0
        %3123 = vmatprep.mubr.bf16.mxu0 0
        %3124 = vmatmul.mubr.bf16.gmra.mrb[0].mxu0 %v3086
        %v3125 = vpop.f32.mrb[0].mxu0
        %v3126 = vadd.f32 %v564, %v3125
        %v3127 = vpop.f32.mrb[0].mxu0
        %v3128 = vpop.f32.mrb[0].mxu0
        %v3129 = vpop.f32.mrb[0].mxu0
        %3130 = vdwg.mxu0
        %v3131 = vsel %vm771, %v3126, -inf
        %3132 = vmax.xlane.f32.xlu0 %v3131
        %v3133 = vpop.xlane.xlu0 %3132
        %v3134 = vsub.f32 %v3126, %v3133
        %v3135 = vmul.f32 %v3134, 1.442695
        %v3136 = vpow.pop %v3135
        %v3137 = vsel %vm771, %v3136, 0.0
        %3138 = vadd.xlane.f32.xlu0 %v3137
        %v3139 = vpop.xlane.xlu0 %3138
        %v3140 = vrcp.pop %v3139
        %v3141 = vmul.f32 %v3136, %v3140
        %v3142 = vpack.c.bf16 %v3141, %v3141
        %3144 = vrot.lane.b32.xlu0 %v2972, 120
        %v3145 = vpop.permute.xlu0 %3144
        %v3147 = vsel %vm771, %v3142, 0
        %v3150 = vsel %vm833, %v3145, 0
        %3152 = vmatprep.subr.bf16.mxu0 0
        %3153 = vmatpush1.bf16.msra.mxu0 %v3150
        %3154 = vmatprep.subr.bf16.mxu0 0
        %3155 = vmatpush1.bf16.msra.mxu0 0
        %3156 = vmatprep.subr.bf16.mxu0 0
        %3157 = vmatpush1.bf16.msra.mxu0 0
        %3158 = vmatprep.subr.bf16.mxu0 0
        %3159 = vmatpush1.bf16.msra.mxu0 0
        %3160 = vmatprep.subr.bf16.mxu0 0
        %3161 = vmatpush1.bf16.msra.mxu0 0
        %3162 = vmatprep.subr.bf16.mxu0 0
        %3163 = vmatpush1.bf16.msra.mxu0 0
        %3164 = vmatprep.subr.bf16.mxu0 0
        %3165 = vmatpush1.bf16.msra.mxu0 0
        %3166 = vmatprep.subr.bf16.mxu0 0
        %3167 = vmatpush1.bf16.msra.mxu0 0
        %3168 = vmatprep.subr.bf16.mxu0 0
        %3169 = vmatpush1.bf16.msra.mxu0 0
        %3170 = vmatprep.subr.bf16.mxu0 0
        %3171 = vmatpush1.bf16.msra.mxu0 0
        %3172 = vmatprep.subr.bf16.mxu0 0
        %3173 = vmatpush1.bf16.msra.mxu0 0
        %3174 = vmatprep.subr.bf16.mxu0 0
        %3175 = vmatpush1.bf16.msra.mxu0 0
        %3176 = vmatprep.subr.bf16.mxu0 0
        %3177 = vmatpush1.bf16.msra.mxu0 0
        %3178 = vmatprep.subr.bf16.mxu0 0
        %3179 = vmatpush1.bf16.msra.mxu0 0
        %3180 = vmatprep.subr.bf16.mxu0 0
        %3181 = vmatpush1.bf16.msra.mxu0 0
        %3182 = vmatprep.subr.bf16.mxu0 0
        %3183 = vmatpush1.bf16.msra.mxu0 0
        %3184 = vmatprep.mubr.bf16.mxu0 0
        %3185 = vmatmul.mubr.bf16.gmra.mrb[0].mxu0 %v3147
        %v3186 = vpop.f32.mrb[0].mxu0
        %v3187 = vadd.f32 0.0, %v3186
        %v3188 = vpop.f32.mrb[0].mxu0
        %v3189 = vpop.f32.mrb[0].mxu0
        %v3190 = vpop.f32.mrb[0].mxu0
        %3191 = vdwg.mxu0
        %v3192 = vpack.c.bf16 %v3187, %v3187
        %v3194 = vunpack.c.l.b16 %v3192
        %v3195 = vpack.c.b16 %v3194, %v3194
        %3196 = vrot.lane.b32.xlu0 %v3195, 8
        %v3197 = vpop.permute.xlu0 %3196
        %3199 = vst.msk [vmem:[#allocation2] sm:$0xf] %vm1000, %v3197
        %3200 = vrot.lane.b32.xlu0 %v2840, 112
        %v3201 = vpop.permute.xlu0 %3200
        %3202 = vrot.lane.b32.xlu0 %v2906, 112
        %v3203 = vpop.permute.xlu0 %3202
        %v3205 = vsel %vm771, %v3201, 0
        %v3208 = vsel %vm771, %v3203, 0
        %3210 = vmatprep.subr.bf16.mxu0 0
        %3211 = vmatpush1.bf16.xpose.msra.mxu0 %v3208
        %3212 = vmatprep.subr.bf16.mxu0 0
        %3213 = vmatpush1.bf16.xpose.msra.mxu0 0
        %3214 = vmatprep.subr.bf16.mxu0 0
        %3215 = vmatpush1.bf16.xpose.msra.mxu0 0
        %3216 = vmatprep.subr.bf16.mxu0 0
        %3217 = vmatpush1.bf16.xpose.msra.mxu0 0
        %3218 = vmatprep.subr.bf16.mxu0 0
        %3219 = vmatpush1.bf16.xpose.msra.mxu0 0
        %3220 = vmatprep.subr.bf16.mxu0 0
        %3221 = vmatpush1.bf16.xpose.msra.mxu0 0
        %3222 = vmatprep.subr.bf16.mxu0 0
        %3223 = vmatpush1.bf16.xpose.msra.mxu0 0
        %3224 = vmatprep.subr.bf16.mxu0 0
        %3225 = vmatpush1.bf16.xpose.msra.mxu0 0
        %3226 = vmatprep.subr.bf16.mxu0 0
        %3227 = vmatpush1.bf16.xpose.msra.mxu0 0
        %3228 = vmatprep.subr.bf16.mxu0 0
        %3229 = vmatpush1.bf16.xpose.msra.mxu0 0
        %3230 = vmatprep.subr.bf16.mxu0 0
        %3231 = vmatpush1.bf16.xpose.msra.mxu0 0
        %3232 = vmatprep.subr.bf16.mxu0 0
        %3233 = vmatpush1.bf16.xpose.msra.mxu0 0
        %3234 = vmatprep.subr.bf16.mxu0 0
        %3235 = vmatpush1.bf16.xpose.msra.mxu0 0
        %3236 = vmatprep.subr.bf16.mxu0 0
        %3237 = vmatpush1.bf16.xpose.msra.mxu0 0
        %3238 = vmatprep.subr.bf16.mxu0 0
        %3239 = vmatpush1.bf16.xpose.msra.mxu0 0
        %3240 = vmatprep.subr.bf16.mxu0 0
        %3241 = vmatpush1.bf16.xpose.msra.mxu0 0
        %3242 = vmatprep.mubr.bf16.mxu0 0
        %3243 = vmatmul.mubr.bf16.gmra.mrb[0].mxu0 %v3205
        %v3244 = vpop.f32.mrb[0].mxu0
        %v3245 = vadd.f32 %v564, %v3244
        %v3246 = vpop.f32.mrb[0].mxu0
        %v3247 = vpop.f32.mrb[0].mxu0
        %v3248 = vpop.f32.mrb[0].mxu0
        %3249 = vdwg.mxu0
        %v3250 = vsel %vm771, %v3245, -inf
        %3251 = vmax.xlane.f32.xlu0 %v3250
        %v3252 = vpop.xlane.xlu0 %3251
        %v3253 = vsub.f32 %v3245, %v3252
        %v3254 = vmul.f32 %v3253, 1.442695
        %v3255 = vpow.pop %v3254
        %v3256 = vsel %vm771, %v3255, 0.0
        %3257 = vadd.xlane.f32.xlu0 %v3256
        %v3258 = vpop.xlane.xlu0 %3257
        %v3259 = vrcp.pop %v3258
        %v3260 = vmul.f32 %v3255, %v3259
        %v3261 = vpack.c.bf16 %v3260, %v3260
        %3262 = vrot.lane.b32.xlu0 %v2972, 112
        %v3263 = vpop.permute.xlu0 %3262
        %v3265 = vsel %vm771, %v3261, 0
        %v3268 = vsel %vm833, %v3263, 0
        %3270 = vmatprep.subr.bf16.mxu0 0
        %3271 = vmatpush1.bf16.msra.mxu0 %v3268
        %3272 = vmatprep.subr.bf16.mxu0 0
        %3273 = vmatpush1.bf16.msra.mxu0 0
        %3274 = vmatprep.subr.bf16.mxu0 0
        %3275 = vmatpush1.bf16.msra.mxu0 0
        %3276 = vmatprep.subr.bf16.mxu0 0
        %3277 = vmatpush1.bf16.msra.mxu0 0
        %3278 = vmatprep.subr.bf16.mxu0 0
        %3279 = vmatpush1.bf16.msra.mxu0 0
        %3280 = vmatprep.subr.bf16.mxu0 0
        %3281 = vmatpush1.bf16.msra.mxu0 0
        %3282 = vmatprep.subr.bf16.mxu0 0
        %3283 = vmatpush1.bf16.msra.mxu0 0
        %3284 = vmatprep.subr.bf16.mxu0 0
        %3285 = vmatpush1.bf16.msra.mxu0 0
        %3286 = vmatprep.subr.bf16.mxu0 0
        %3287 = vmatpush1.bf16.msra.mxu0 0
        %3288 = vmatprep.subr.bf16.mxu0 0
        %3289 = vmatpush1.bf16.msra.mxu0 0
        %3290 = vmatprep.subr.bf16.mxu0 0
        %3291 = vmatpush1.bf16.msra.mxu0 0
        %3292 = vmatprep.subr.bf16.mxu0 0
        %3293 = vmatpush1.bf16.msra.mxu0 0
        %3294 = vmatprep.subr.bf16.mxu0 0
        %3295 = vmatpush1.bf16.msra.mxu0 0
        %3296 = vmatprep.subr.bf16.mxu0 0
        %3297 = vmatpush1.bf16.msra.mxu0 0
        %3298 = vmatprep.subr.bf16.mxu0 0
        %3299 = vmatpush1.bf16.msra.mxu0 0
        %3300 = vmatprep.subr.bf16.mxu0 0
        %3301 = vmatpush1.bf16.msra.mxu0 0
        %3302 = vmatprep.mubr.bf16.mxu0 0
        %3303 = vmatmul.mubr.bf16.gmra.mrb[0].mxu0 %v3265
        %v3304 = vpop.f32.mrb[0].mxu0
        %v3305 = vadd.f32 0.0, %v3304
        %v3306 = vpop.f32.mrb[0].mxu0
        %v3307 = vpop.f32.mrb[0].mxu0
        %v3308 = vpop.f32.mrb[0].mxu0
        %3309 = vdwg.mxu0
        %v3310 = vpack.c.bf16 %v3305, %v3305
        %v3312 = vunpack.c.l.b16 %v3310
        %v3313 = vpack.c.b16 %v3312, %v3312
        %3314 = vrot.lane.b32.xlu0 %v3313, 16
        %v3315 = vpop.permute.xlu0 %3314
        %3317 = vst.msk [vmem:[#allocation2] sm:$0xf] %vm1119, %v3315
        %3318 = vrot.lane.b32.xlu0 %v2840, 104
        %v3319 = vpop.permute.xlu0 %3318
        %3320 = vrot.lane.b32.xlu0 %v2906, 104
        %v3321 = vpop.permute.xlu0 %3320
        %v3323 = vsel %vm771, %v3319, 0
        %v3326 = vsel %vm771, %v3321, 0
        %3328 = vmatprep.subr.bf16.mxu0 0
        %3329 = vmatpush1.bf16.xpose.msra.mxu0 %v3326
        %3330 = vmatprep.subr.bf16.mxu0 0
        %3331 = vmatpush1.bf16.xpose.msra.mxu0 0
        %3332 = vmatprep.subr.bf16.mxu0 0
        %3333 = vmatpush1.bf16.xpose.msra.mxu0 0
        %3334 = vmatprep.subr.bf16.mxu0 0
        %3335 = vmatpush1.bf16.xpose.msra.mxu0 0
        %3336 = vmatprep.subr.bf16.mxu0 0
        %3337 = vmatpush1.bf16.xpose.msra.mxu0 0
        %3338 = vmatprep.subr.bf16.mxu0 0
        %3339 = vmatpush1.bf16.xpose.msra.mxu0 0
        %3340 = vmatprep.subr.bf16.mxu0 0
        %3341 = vmatpush1.bf16.xpose.msra.mxu0 0
        %3342 = vmatprep.subr.bf16.mxu0 0
        %3343 = vmatpush1.bf16.xpose.msra.mxu0 0
        %3344 = vmatprep.subr.bf16.mxu0 0
        %3345 = vmatpush1.bf16.xpose.msra.mxu0 0
        %3346 = vmatprep.subr.bf16.mxu0 0
        %3347 = vmatpush1.bf16.xpose.msra.mxu0 0
        %3348 = vmatprep.subr.bf16.mxu0 0
        %3349 = vmatpush1.bf16.xpose.msra.mxu0 0
        %3350 = vmatprep.subr.bf16.mxu0 0
        %3351 = vmatpush1.bf16.xpose.msra.mxu0 0
        %3352 = vmatprep.subr.bf16.mxu0 0
        %3353 = vmatpush1.bf16.xpose.msra.mxu0 0
        %3354 = vmatprep.subr.bf16.mxu0 0
        %3355 = vmatpush1.bf16.xpose.msra.mxu0 0
        %3356 = vmatprep.subr.bf16.mxu0 0
        %3357 = vmatpush1.bf16.xpose.msra.mxu0 0
        %3358 = vmatprep.subr.bf16.mxu0 0
        %3359 = vmatpush1.bf16.xpose.msra.mxu0 0
        %3360 = vmatprep.mubr.bf16.mxu0 0
        %3361 = vmatmul.mubr.bf16.gmra.mrb[0].mxu0 %v3323
        %v3362 = vpop.f32.mrb[0].mxu0
        %v3363 = vadd.f32 %v564, %v3362
        %v3364 = vpop.f32.mrb[0].mxu0
        %v3365 = vpop.f32.mrb[0].mxu0
        %v3366 = vpop.f32.mrb[0].mxu0
        %3367 = vdwg.mxu0
        %v3368 = vsel %vm771, %v3363, -inf
        %3369 = vmax.xlane.f32.xlu0 %v3368
        %v3370 = vpop.xlane.xlu0 %3369
        %v3371 = vsub.f32 %v3363, %v3370
        %v3372 = vmul.f32 %v3371, 1.442695
        %v3373 = vpow.pop %v3372
        %v3374 = vsel %vm771, %v3373, 0.0
        %3375 = vadd.xlane.f32.xlu0 %v3374
        %v3376 = vpop.xlane.xlu0 %3375
        %v3377 = vrcp.pop %v3376
        %v3378 = vmul.f32 %v3373, %v3377
        %v3379 = vpack.c.bf16 %v3378, %v3378
        %3380 = vrot.lane.b32.xlu0 %v2972, 104
        %v3381 = vpop.permute.xlu0 %3380
        %v3383 = vsel %vm771, %v3379, 0
        %v3386 = vsel %vm833, %v3381, 0
        %3388 = vmatprep.subr.bf16.mxu0 0
        %3389 = vmatpush1.bf16.msra.mxu0 %v3386
        %3390 = vmatprep.subr.bf16.mxu0 0
        %3391 = vmatpush1.bf16.msra.mxu0 0
        %3392 = vmatprep.subr.bf16.mxu0 0
        %3393 = vmatpush1.bf16.msra.mxu0 0
        %3394 = vmatprep.subr.bf16.mxu0 0
        %3395 = vmatpush1.bf16.msra.mxu0 0
        %3396 = vmatprep.subr.bf16.mxu0 0
        %3397 = vmatpush1.bf16.msra.mxu0 0
        %3398 = vmatprep.subr.bf16.mxu0 0
        %3399 = vmatpush1.bf16.msra.mxu0 0
        %3400 = vmatprep.subr.bf16.mxu0 0
        %3401 = vmatpush1.bf16.msra.mxu0 0
        %3402 = vmatprep.subr.bf16.mxu0 0
        %3403 = vmatpush1.bf16.msra.mxu0 0
        %3404 = vmatprep.subr.bf16.mxu0 0
        %3405 = vmatpush1.bf16.msra.mxu0 0
        %3406 = vmatprep.subr.bf16.mxu0 0
        %3407 = vmatpush1.bf16.msra.mxu0 0
        %3408 = vmatprep.subr.bf16.mxu0 0
        %3409 = vmatpush1.bf16.msra.mxu0 0
        %3410 = vmatprep.subr.bf16.mxu0 0
        %3411 = vmatpush1.bf16.msra.mxu0 0
        %3412 = vmatprep.subr.bf16.mxu0 0
        %3413 = vmatpush1.bf16.msra.mxu0 0
        %3414 = vmatprep.subr.bf16.mxu0 0
        %3415 = vmatpush1.bf16.msra.mxu0 0
        %3416 = vmatprep.subr.bf16.mxu0 0
        %3417 = vmatpush1.bf16.msra.mxu0 0
        %3418 = vmatprep.subr.bf16.mxu0 0
        %3419 = vmatpush1.bf16.msra.mxu0 0
        %3420 = vmatprep.mubr.bf16.mxu0 0
        %3421 = vmatmul.mubr.bf16.gmra.mrb[0].mxu0 %v3383
        %v3422 = vpop.f32.mrb[0].mxu0
        %v3423 = vadd.f32 0.0, %v3422
        %v3424 = vpop.f32.mrb[0].mxu0
        %v3425 = vpop.f32.mrb[0].mxu0
        %v3426 = vpop.f32.mrb[0].mxu0
        %3427 = vdwg.mxu0
        %v3428 = vpack.c.bf16 %v3423, %v3423
        %v3430 = vunpack.c.l.b16 %v3428
        %v3431 = vpack.c.b16 %v3430, %v3430
        %3432 = vrot.lane.b32.xlu0 %v3431, 24
        %v3433 = vpop.permute.xlu0 %3432
        %3435 = vst.msk [vmem:[#allocation2] sm:$0xf] %vm1238, %v3433
        %v3436 = vld [vmem:[#allocation2] sm:$0xf]
        %s3437 = scalar_lea.vmem [#allocation12], 48
        %v3438 = vld [vmem:[%s3437] sm:$0xf]
        %v3439 = vld [vmem:[%s3437 + $0x4] sm:$0xf]
        %v3440 = vld [vmem:[%s3437 + $0x8] sm:$0xf]
        %v3441 = vld [vmem:[%s3437 + $0xc] sm:$0xf]
        %s3442 = scalar_lea.vmem [#allocation14], 3
        %v3443 = vld [vmem:[%s3442] sm:$0x1]
        %v3445 = vlaneseq
        %v3446 = vshrl.u32 %v3445, 7
        %v3447 = vsub.s32 0, %v3446
        %v3448 = vrot.slane %v3443, %v3447
        %v3454 = vunpack.c.l.b16 %v3438
        %v3455 = vunpack.c.l.b16 %v3439
        %v3456 = vunpack.c.l.b16 %v3440
        %v3457 = vunpack.c.l.b16 %v3441
        %v3458 = vpack.c.b16 %v3455, %v3454
        %v3459 = vpack.c.b16 %v3457, %v3456
        %v3463 = vsel %vm591, %v3436, 0
        %3465 = vmatprep.subr.bf16.mxu0 0
        %3466 = vmatpush1.bf16.msra.mxu0 %v3458
        %3467 = vmatprep.subr.bf16.mxu0 0
        %3468 = vmatpush1.bf16.msra.mxu0 %v3459
        %3469 = vmatprep.subr.bf16.mxu0 0
        %3470 = vmatpush1.bf16.msra.mxu0 0
        %3471 = vmatprep.subr.bf16.mxu0 0
        %3472 = vmatpush1.bf16.msra.mxu0 0
        %3473 = vmatprep.subr.bf16.mxu0 0
        %3474 = vmatpush1.bf16.msra.mxu0 0
        %3475 = vmatprep.subr.bf16.mxu0 0
        %3476 = vmatpush1.bf16.msra.mxu0 0
        %3477 = vmatprep.subr.bf16.mxu0 0
        %3478 = vmatpush1.bf16.msra.mxu0 0
        %3479 = vmatprep.subr.bf16.mxu0 0
        %3480 = vmatpush1.bf16.msra.mxu0 0
        %3481 = vmatprep.subr.bf16.mxu0 0
        %3482 = vmatpush1.bf16.msra.mxu0 0
        %3483 = vmatprep.subr.bf16.mxu0 0
        %3484 = vmatpush1.bf16.msra.mxu0 0
        %3485 = vmatprep.subr.bf16.mxu0 0
        %3486 = vmatpush1.bf16.msra.mxu0 0
        %3487 = vmatprep.subr.bf16.mxu0 0
        %3488 = vmatpush1.bf16.msra.mxu0 0
        %3489 = vmatprep.subr.bf16.mxu0 0
        %3490 = vmatpush1.bf16.msra.mxu0 0
        %3491 = vmatprep.subr.bf16.mxu0 0
        %3492 = vmatpush1.bf16.msra.mxu0 0
        %3493 = vmatprep.subr.bf16.mxu0 0
        %3494 = vmatpush1.bf16.msra.mxu0 0
        %3495 = vmatprep.subr.bf16.mxu0 0
        %3496 = vmatpush1.bf16.msra.mxu0 0
        %3497 = vmatprep.mubr.bf16.mxu0 0
        %3498 = vmatmul.mubr.bf16.gmra.mrb[0].mxu0 %v3463
        %v3499 = vpop.f32.mrb[0].mxu0
        %v3500 = vadd.f32 %v3448, %v3499
        %v3501 = vpop.f32.mrb[0].mxu0
        %v3502 = vpop.f32.mrb[0].mxu0
        %v3503 = vpop.f32.mrb[0].mxu0
        %3504 = vdwg.mxu0
        %v3505 = vmax.f32 %v3500, 0.0
        %v3506 = vpack.c.bf16 %v3505, %v3505
        %v3507 = vld [vmem:[#allocation15] sm:$0xf]
        %v3508 = vld [vmem:[#allocation15 + $0x4] sm:$0xf]
        %v3509 = vld [vmem:[#allocation15 + $0x8] sm:$0xf]
        %v3510 = vld [vmem:[#allocation15 + $0xc] sm:$0xf]
        %v3511 = vld [vmem:[#allocation17] sm:$0x1]
        %v3513 = vlaneseq
        %v3514 = vshrl.u32 %v3513, 7
        %v3515 = vsub.s32 0, %v3514
        %v3516 = vrot.slane %v3511, %v3515
        %v3522 = vunpack.c.l.b16 %v3507
        %v3523 = vunpack.c.l.b16 %v3508
        %v3524 = vunpack.c.l.b16 %v3509
        %v3525 = vunpack.c.l.b16 %v3510
        %v3526 = vpack.c.b16 %v3523, %v3522
        %v3527 = vpack.c.b16 %v3525, %v3524
        %v3531 = vsel %vm591, %v3506, 0
        %3533 = vmatprep.subr.bf16.mxu0 0
        %3534 = vmatpush1.bf16.msra.mxu0 %v3526
        %3535 = vmatprep.subr.bf16.mxu0 0
        %3536 = vmatpush1.bf16.msra.mxu0 %v3527
        %3537 = vmatprep.subr.bf16.mxu0 0
        %3538 = vmatpush1.bf16.msra.mxu0 0
        %3539 = vmatprep.subr.bf16.mxu0 0
        %3540 = vmatpush1.bf16.msra.mxu0 0
        %3541 = vmatprep.subr.bf16.mxu0 0
        %3542 = vmatpush1.bf16.msra.mxu0 0
        %3543 = vmatprep.subr.bf16.mxu0 0
        %3544 = vmatpush1.bf16.msra.mxu0 0
        %3545 = vmatprep.subr.bf16.mxu0 0
        %3546 = vmatpush1.bf16.msra.mxu0 0
        %3547 = vmatprep.subr.bf16.mxu0 0
        %3548 = vmatpush1.bf16.msra.mxu0 0
        %3549 = vmatprep.subr.bf16.mxu0 0
        %3550 = vmatpush1.bf16.msra.mxu0 0
        %3551 = vmatprep.subr.bf16.mxu0 0
        %3552 = vmatpush1.bf16.msra.mxu0 0
        %3553 = vmatprep.subr.bf16.mxu0 0
        %3554 = vmatpush1.bf16.msra.mxu0 0
        %3555 = vmatprep.subr.bf16.mxu0 0
        %3556 = vmatpush1.bf16.msra.mxu0 0
        %3557 = vmatprep.subr.bf16.mxu0 0
        %3558 = vmatpush1.bf16.msra.mxu0 0
        %3559 = vmatprep.subr.bf16.mxu0 0
        %3560 = vmatpush1.bf16.msra.mxu0 0
        %3561 = vmatprep.subr.bf16.mxu0 0
        %3562 = vmatpush1.bf16.msra.mxu0 0
        %3563 = vmatprep.subr.bf16.mxu0 0
        %3564 = vmatpush1.bf16.msra.mxu0 0
        %3565 = vmatprep.mubr.bf16.mxu0 0
        %3566 = vmatmul.mubr.bf16.gmra.mrb[0].mxu0 %v3531
        %v3567 = vpop.f32.mrb[0].mxu0
        %v3568 = vadd.f32 %v3516, %v3567
        %v3569 = vpop.f32.mrb[0].mxu0
        %v3570 = vpop.f32.mrb[0].mxu0
        %v3571 = vpop.f32.mrb[0].mxu0
        %3572 = vdwg.mxu0
        %v3573 = vxor.u32 %v3568, 2147483648
        %v3574 = vmul.f32 %v3573, 1.442695
        %v3575 = vpow.pop %v3574
        %v3576 = vadd.f32 %v3575, 1.0
        %v3577 = vrcp.pop %v3576
        %v3578 = vmul.f32 1.0, %v3577
        %v3579 = vsub.f32 1.0, %v3578
        %v3580 = vmul.f32 %v562, %v3579
        %v3581 = vmul.f32 %v3580, 2.0
        %v3582 = vadd.f32 %v3581, %v2036
        %v3583 = vsel %vm591, %v3582, 0.0
        %3584 = vadd.xlane.f32.xlu0 %v3583
        %v3585 = vpop.xlane.xlu0 %3584
        %v3586 = vrcp.pop 32.0
        %v3587 = vmul.f32 %v3585, %v3586
        %v3588 = vsub.f32 %v3582, %v3587
        %v3589 = vmul.f32 %v3588, %v3588
        %v3590 = vsel %vm591, %v3589, 0.0
        %3591 = vadd.xlane.f32.xlu0 %v3590
        %v3592 = vpop.xlane.xlu0 %3591
        %v3593 = vmul.f32 %v3592, %v3586
        %v3594 = vadd.f32 %v3593, 1e-05
        %v3595 = vrsqrt.pop %v3594
        %v3596 = vmul.f32 %v3588, %v3595
        %v3597 = vld [vmem:[#allocation18] sm:$0x1]
        %v3599 = vlaneseq
        %v3600 = vshrl.u32 %v3599, 7
        %v3601 = vsub.s32 0, %v3600
        %v3602 = vrot.slane %v3597, %v3601
        %v3604 = vmul.f32 %v3596, %v3602
        %v3605 = vld [vmem:[#allocation20] sm:$0x1]
        %v3607 = vlaneseq
        %v3608 = vshrl.u32 %v3607, 7
        %v3609 = vsub.s32 0, %v3608
        %v3610 = vrot.slane %v3605, %v3609
        %v3612 = vadd.f32 %v3604, %v3610
        %3613 = vst.msk [vmem:[%s560] sm:$0xff] %vm591, %v3612
        %s3614 = sand.u32 %s284, 1
        %s3615 = scalar_lea.sflag [#allocation5], %s3614
        %s3616 = sand.u32 %s284, 1
        %s3617 = smul.addr %s3616, 8
        %s3618 = scalar_lea.vmem [#allocation21], %s3617
        // Predicated region
        $region109: #{history_qim_forward.1} parent=63 // pred_check
          %p3619 = pneg %p294
        $region110: #{history_qim_forward.1} parent=63 // pred_check_branch
          %3621 = sbr.rel (%p3619) target = $region112
        $region111: #{history_qim_forward.1} parent=63 // pred_region
          %s3623 = ssub.s32 128, 128
          %3624 = vsyncadd %s3615, %s3623
          %s3625 = smul.addr %s35, 128
          %s3626 = scalar_lea.hbm %s11, %s3625
          %s3628 = sshll.u32 %s3618, 4
          %s3629 = int_to_ptr.vmem [resolvable:$true] %s3628
          %3631 = dma.vmem_to_hbm [thread:$0]  %s3629, 128, %s3626, %s3615
        $region112: #{history_qim_forward.1} parent=63 // pred_fallthru
          _
      $region64: #{history_qim_forward.1} parent=5 // pred_fallthru
        _
      %p3632 = scmp.le.s32.totalorder 2, %s30
      // Predicated region
      $region113: #{history_qim_forward.1} parent=5 // pred_check
        %p3633 = pneg %p3632
      $region114: #{history_qim_forward.1} parent=5 // pred_check_branch
        %3635 = sbr.rel (%p3633) target = $region116
      $region115: #{history_qim_forward.1} parent=5 // pred_region
        %s3636 = ssub.s32 %s30, 2
        // Predicated region
        $region117: #{history_qim_forward.1} parent=115 // pred_check
          %p3637 = pneg %p300
        $region118: #{history_qim_forward.1} parent=115 // pred_check_branch
          %3639 = sbr.rel (%p3637) target = $region120
        $region119: #{history_qim_forward.1} parent=115 // pred_region
          %s3640 = sand.u32 %s285, 1
          %s3641 = scalar_lea.sflag [#allocation5], %s3640
          %s3642 = sand.u32 %s285, 1
          %s3643 = smul.addr %s3642, 8
          %s3644 = scalar_lea.vmem [#allocation21], %s3643
          %3645 = dma.done %s3641, 128
        $region120: #{history_qim_forward.1} parent=115 // pred_fallthru
          _
      $region116: #{history_qim_forward.1} parent=5 // pred_fallthru
        _
    $region6: #{history_qim_forward.1} parent=1 // loop_footer
      %s34 = sadd.s32 1, %s30
    $region7: #{history_qim_forward.1} parent=1 // loop_footer_branch
      %29 = sbr.rel target = $region3
    $region8: #{history_qim_forward.1} parent=1 // loop_exit
      _
    %3646 = vsyncpa [#allocation4], 1
    %s3647 = scalar_lea.sflag [#allocation4], 1
    %3648 = vsyncpa %s3647, 1
    %3649 = vsyncpa [#allocation7], 1
    %s3650 = scalar_lea.sflag [#allocation7], 1
    %3651 = vsyncpa %s3650, 1
    %3652 = vsyncpa [#allocation10], 1
    %3653 = vsyncpa [#allocation13], 1
    %3654 = vsyncpa [#allocation16], 1
    %3655 = vsyncpa [#allocation19], 1
    %3656 = vsyncpa [#allocation5], 1
    %s3657 = scalar_lea.sflag [#allocation5], 1
    %3658 = vsyncpa %s3657, 1

</llo_original>
